<compile_context>
chip_gen: v7x
topology: tpu7x:2x2x1
jax: 0.10.0
libtpu: 0.0.40
codegen_flags: <defaults>
</compile_context>

<pallas_src>
import jax
import jax.numpy as jnp
from jax import lax
from jax.experimental import pallas as pl
from jax.experimental.pallas import tpu as pltpu

NB_HIDDEN = 32
NB_OUTPUT = 10


def _round_up(v, m):
    return (v + m - 1) // m * m


def _cdiv(a, b):
    return -(-a // b)


# ------------------------------- kernel -------------------------------------

def _net2_kernel(x_ref, w1_ref, b1_ref, w2_ref, b2_ref, w3_ref, b3_ref,
                 wf1_ref, bf1_ref, wf2_ref, bf2_ref, o_ref):
    f32 = jnp.float32
    bf16 = jnp.bfloat16

    xf = x_ref[0]                        # (B, 196) bf16: flattened 14x14 image
    B = xf.shape[0]

    w1 = w1_ref[0]                       # (42, 768) bf16 banded conv1 weights
    b1 = b1_ref[0]                       # (1, 256) f32, conv1 bias tiled x4

    # ---- conv1: ONE fused banded matmul (12B, 42) @ (42, 768) on the MXU ---
    # conv1 output row r (of 12) lives at result rows [r*B, (r+1)*B).
    # Result lane = (col % 3)*256 + (col // 3)*64 + channel, so the column
    # part of the 3x3/3 maxpool is a max over three aligned 256-lane slabs.
    lhs = jnp.concatenate([xf[:, 14 * r:14 * r + 42] for r in range(12)],
                          axis=0)                                   # (12B, 42)
    y = jnp.dot(lhs, w1, preferred_element_type=f32)                # (12B, 768)

    # ---- maxpool 3x3/3 (rows, then column slabs) + bias + relu -> bf16 -----
    poolrow = []                         # poolrow[i]: (B, 256) bf16,
    for i in range(4):                   # cell j at lanes [64j, 64j+64)
        m = jnp.maximum(jnp.maximum(y[(3 * i + 0) * B:(3 * i + 1) * B],
                                    y[(3 * i + 1) * B:(3 * i + 2) * B]),
                        y[(3 * i + 2) * B:(3 * i + 3) * B])          # (B, 768)
        cell = jnp.maximum(jnp.maximum(m[:, 0:256], m[:, 256:512]),
                           m[:, 512:768])                            # (B, 256)
        poolrow.append(jnp.maximum(cell + b1, 0.0).astype(bf16))

    # ---- conv2: one fused im2col matmul (4B, 576) @ (576, 128), relu -------
    # patches are assembled directly in bf16 from three 192-lane row slices.
    pos = []
    for oh in range(2):
        for ow in range(2):                      # output positions, row-major
            pos.append(jnp.concatenate(
                [poolrow[oh + kh][:, 64 * ow:64 * ow + 192] for kh in range(3)],
                axis=-1))                                            # (B, 576)
    x2 = jnp.concatenate(pos, axis=0)                                # (4B, 576)
    h2 = jnp.maximum(jnp.dot(x2, w2_ref[0], preferred_element_type=f32)
                     + b2_ref[0], 0.0)                               # (4B, 128)

    # ---- conv3: accumulate 4 K=128 matmuls (no (B, 512) concat) ------------
    w3 = w3_ref[0]                                                   # (512,256)
    acc = jnp.dot(h2[0:B].astype(bf16), w3[0:128],
                  preferred_element_type=f32)
    for p in range(1, 4):
        acc = acc + jnp.dot(h2[p * B:(p + 1) * B].astype(bf16),
                            w3[p * 128:(p + 1) * 128],
                            preferred_element_type=f32)
    h3 = jnp.maximum(acc + b3_ref[0], 0.0)                           # (B, 256)

    # ---- fc1 (+relu) and fc2, both zero-padded to 128-wide lanes -----------
    h4 = jnp.maximum(jnp.dot(h3.astype(bf16), wf1_ref[0],
                             preferred_element_type=f32) + bf1_ref[0], 0.0)
    out = jnp.dot(h4.astype(bf16), wf2_ref[0],
                  preferred_element_type=f32) + bf2_ref[0]           # (B, 128)
    o_ref[0, :, :] = out


# ------------------------------- wrapper ------------------------------------

def net2_forward(x, packed_params, nb_output=NB_OUTPUT, block=256):
    """x: (N, 2, 14, 14) float32 -> (N, 2, nb_output) float32."""
    (w1b, b1t, w2f, b2, w3f, b3, wf1p, bf1p, wf2p, bf2p) = packed_params
    n = x.shape[0]
    out_pad = wf2p.shape[-1]

    # Host-side layout plumbing: branch-major, flattened bf16 images.
    xb = jnp.transpose(x, (1, 0, 2, 3)).reshape(2, n, 196).astype(jnp.bfloat16)

    # Choose B to avoid pathological last-block padding: split round_up(n, 16)
    # into <= `block`-sized, 16-aligned chunks (bf16 sublane packing = 16).
    gran = 16
    block = max(gran, _round_up(block, gran))
    n16 = _round_up(max(n, 1), gran)
    n_blocks = _cdiv(n16, block)
    B = _round_up(_cdiv(n16, n_blocks), gran)
    n_pad = n_blocks * B
    if n_pad != n:
        xb = jnp.pad(xb, ((0, 0), (0, n_pad - n), (0, 0)))

    def wspec(arr):
        # Weights / biases depend only on the branch axis -> stay VMEM
        # resident across the whole sample-block axis.
        return pl.BlockSpec((1,) + arr.shape[1:], lambda br, i: (br, 0, 0))

    out = pl.pallas_call(
        _net2_kernel,
        out_shape=jax.ShapeDtypeStruct((2, n_pad, out_pad), jnp.float32),
        grid_spec=pltpu.PrefetchScalarGridSpec(
            num_scalar_prefetch=0,
            grid=(2, n_blocks),        # branch OUTER -> weights stay resident
            in_specs=[
                pl.BlockSpec((1, B, 196), lambda br, i: (br, i, 0)),
                wspec(w1b), wspec(b1t), wspec(w2f), wspec(b2),
                wspec(w3f), wspec(b3), wspec(wf1p), wspec(bf1p),
                wspec(wf2p), wspec(bf2p),
            ],
            out_specs=pl.BlockSpec((1, B, out_pad), lambda br, i: (br, i, 0)),
        ),
        compiler_params=pltpu.CompilerParams(
            dimension_semantics=("parallel", "parallel"),
            vmem_limit_bytes=40 * 1024 * 1024),
    )(xb, w1b, b1t, w2f, b2, w3f, b3, wf1p, bf1p, wf2p, bf2p)

    out = out[:, :n, :nb_output]              # drop sample / lane padding
    return jnp.transpose(out, (1, 0, 2))      # (N, 2, nb_output)


# ------------------------------ parameters ----------------------------------

def init_params(key, nb_hidden, nb_output):
    """Deterministic synthetic weights (two independent branches a / b)."""
    shapes = [
        ("w1", (3, 3, 1, 64), 9), ("b1", (64,), 9),
        ("w2", (3, 3, 64, 128), 9 * 64), ("b2", (128,), 9 * 64),
        ("w3", (2, 2, 128, 256), 4 * 128), ("b3", (256,), 4 * 128),
        ("wf1", (256, nb_hidden), 256), ("bf1", (nb_hidden,), 256),
        ("wf2", (nb_hidden, nb_output), nb_hidden),
        ("bf2", (nb_output,), nb_hidden),
    ]
    keys = jax.random.split(key, 2 * len(shapes))
    branches = []
    k = 0
    for _ in range(2):
        p = {}
        for name, shp, fan_in in shapes:
            p[name] = (jax.random.normal(keys[k], shp, dtype=jnp.float32)
                       / jnp.sqrt(jnp.float32(fan_in)))
            k += 1
        branches.append(p)
    return branches[0], branches[1]


def pack_params(pa, pb, nb_hidden=NB_HIDDEN, nb_output=NB_OUTPUT):
    """Kernel-friendly weight layouts (bf16 MXU operands, f32 biases)."""
    f32, bf16 = jnp.float32, jnp.bfloat16
    hid_pad = max(128, _round_up(nb_hidden, 128))
    out_pad = max(128, _round_up(nb_output, 128))

    def band_conv1(w1):
        # (3, 3, 1, 64) -> (42, 768) band matrix.  For output column c (0..11)
        # and channel ch the result lane is (c % 3)*256 + (c // 3)*64 + ch, so
        # the 3-column maxpool reduces three aligned 256-lane slabs and the
        # pooled row is already cell-packed (cell j at lanes 64j..64j+64).
        wb = jnp.zeros((42, 12 * 64), f32)
        for kh in range(3):
            for kw in range(3):
                for c in range(12):
                    lane0 = (c % 3) * 256 + (c // 3) * 64
                    wb = wb.at[kh * 14 + c + kw,
                               lane0:lane0 + 64].set(w1[kh, kw, 0])
        return wb

    def branch(p):
        w1b = band_conv1(p["w1"]).astype(bf16)
        b1t = jnp.tile(p["b1"].reshape(1, 64), (1, 4)).astype(f32)   # (1, 256)
        w2f = p["w2"].reshape(9 * 64, 128).astype(bf16)    # (kh, kw, cin) major
        b2 = p["b2"].reshape(1, 128).astype(f32)
        w3f = p["w3"].reshape(4 * 128, 256).astype(bf16)   # (kh, kw, cin) major
        b3 = p["b3"].reshape(1, 256).astype(f32)
        wf1p = jnp.zeros((256, hid_pad), f32).at[:, :nb_hidden].set(p["wf1"])
        bf1p = jnp.zeros((1, hid_pad), f32).at[0, :nb_hidden].set(p["bf1"])
        wf2p = jnp.zeros((hid_pad, out_pad), f32).at[:nb_hidden,
                                                     :nb_output].set(p["wf2"])
        bf2p = jnp.zeros((1, out_pad), f32).at[0, :nb_output].set(p["bf2"])
        return (w1b, b1t, w2f, b2, w3f, b3,
                wf1p.astype(bf16), bf1p, wf2p.astype(bf16), bf2p)

    ta, tb = branch(pa), branch(pb)
    return tuple(jnp.stack([a, b], axis=0) for a, b in zip(ta, tb))


# ---------------------------- pure-JAX reference -----------------------------

def _ref_branch(img, p):
    dn = ("NCHW", "HWIO", "NCHW")
    v = img[:, None, :, :]
    y = lax.conv_general_dilated(v, p["w1"], (1, 1), "VALID",
                                 dimension_numbers=dn)
    y = y + p["b1"][None, :, None, None]
    y = lax.reduce_window(y, -jnp.inf, lax.max, (1, 1, 3, 3), (1, 1, 3, 3),
                          "VALID")
    y = jax.nn.relu(y)
    y = jax.nn.relu(lax.conv_general_dilated(y, p["w2"], (1, 1), "VALID",
                                             dimension_numbers=dn)
                    + p["b2"][None, :, None, None])
    y = jax.nn.relu(lax.conv_general_dilated(y, p["w3"], (1, 1), "VALID",
                                             dimension_numbers=dn)
                    + p["b3"][None, :, None, None])
    y = y.reshape(y.shape[0], -1)
    y = jax.nn.relu(y @ p["wf1"] + p["bf1"])
    return y @ p["wf2"] + p["bf2"]


def ref_forward(x, pa, pb):
    ya = _ref_branch(x[:, 0], pa)
    yb = _ref_branch(x[:, 1], pb)
    return jnp.stack([ya, yb], axis=1)


if __name__ == "__main__":
    key = jax.random.PRNGKey(0)
    kx, kp = jax.random.split(key)

    N = 2
    x = jax.random.normal(kx, (N, 2, 14, 14), dtype=jnp.float32)
    pa, pb = init_params(kp, NB_HIDDEN, NB_OUTPUT)
    packed = pack_params(pa, pb, NB_HIDDEN, NB_OUTPUT)

    out = net2_forward(x, packed, NB_OUTPUT)
    out = jax.block_until_ready(out)
    assert out.shape == (N, 2, NB_OUTPUT)

    ref = ref_forward(x, pa, pb)
    max_err = float(jnp.max(jnp.abs(out - ref)))
    # bf16 MXU operands with f32 accumulation introduce a small numeric
    # deviation vs the pure-f32 reference (typically ~1e-2).
    if max_err > 1e-1:
        raise AssertionError(f"kernel/reference mismatch: max abs err={max_err}")

    print("KERNEL_OK")
</pallas_src>

<mosaic_0001>
module attributes {stable_mosaic.version = 11 : i64} {
  func.func @_net2_kernel(%arg0: i32, %arg1: i32, %arg2: memref<1x16x196xbf16, #tpu.memory_space<vmem>>, %arg3: memref<1x42x768xbf16, #tpu.memory_space<vmem>>, %arg4: memref<1x1x256xf32, #tpu.memory_space<vmem>>, %arg5: memref<1x576x128xbf16, #tpu.memory_space<vmem>>, %arg6: memref<1x1x128xf32, #tpu.memory_space<vmem>>, %arg7: memref<1x512x256xbf16, #tpu.memory_space<vmem>>, %arg8: memref<1x1x256xf32, #tpu.memory_space<vmem>>, %arg9: memref<1x256x128xbf16, #tpu.memory_space<vmem>>, %arg10: memref<1x1x128xf32, #tpu.memory_space<vmem>>, %arg11: memref<1x128x128xbf16, #tpu.memory_space<vmem>>, %arg12: memref<1x1x128xf32, #tpu.memory_space<vmem>>, %arg13: memref<1x16x128xf32, #tpu.memory_space<vmem>>) attributes {dimension_semantics = [#tpu.dimension_semantics<parallel>, #tpu.dimension_semantics<parallel>], iteration_bounds = array<i64: 2, 1>, scalar_prefetch = 0 : i64, scratch_operands = 0 : i64, tpu.core_type = #tpu.core_type<tc>, window_params = [{transform_indices = @transform_0, window_bounds = array<i64: 1, 16, 196>}, {transform_indices = @transform_1, window_bounds = array<i64: 1, 42, 768>}, {transform_indices = @transform_2, window_bounds = array<i64: 1, 1, 256>}, {transform_indices = @transform_3, window_bounds = array<i64: 1, 576, 128>}, {transform_indices = @transform_4, window_bounds = array<i64: 1, 1, 128>}, {transform_indices = @transform_5, window_bounds = array<i64: 1, 512, 256>}, {transform_indices = @transform_6, window_bounds = array<i64: 1, 1, 256>}, {transform_indices = @transform_7, window_bounds = array<i64: 1, 256, 128>}, {transform_indices = @transform_8, window_bounds = array<i64: 1, 1, 128>}, {transform_indices = @transform_9, window_bounds = array<i64: 1, 128, 128>}, {transform_indices = @transform_10, window_bounds = array<i64: 1, 1, 128>}, {transform_indices = @transform_11, window_bounds = array<i64: 1, 16, 128>}]} {
    %c0 = arith.constant 0 : index
    %c0_0 = arith.constant 0 : index
    %c0_1 = arith.constant 0 : index
    %0 = vector.load %arg2[%c0, %c0_0, %c0_1] : memref<1x16x196xbf16, #tpu.memory_space<vmem>>, vector<1x16x196xbf16>
    %1 = vector.shape_cast %0 : vector<1x16x196xbf16> to vector<16x196xbf16>
    %c0_2 = arith.constant 0 : index
    %c0_3 = arith.constant 0 : index
    %c0_4 = arith.constant 0 : index
    %2 = vector.load %arg3[%c0_2, %c0_3, %c0_4] : memref<1x42x768xbf16, #tpu.memory_space<vmem>>, vector<1x42x768xbf16>
    %3 = vector.shape_cast %2 : vector<1x42x768xbf16> to vector<42x768xbf16>
    %c0_5 = arith.constant 0 : index
    %c0_6 = arith.constant 0 : index
    %c0_7 = arith.constant 0 : index
    %4 = vector.load %arg4[%c0_5, %c0_6, %c0_7] : memref<1x1x256xf32, #tpu.memory_space<vmem>>, vector<1x1x256xf32>
    %5 = vector.shape_cast %4 : vector<1x1x256xf32> to vector<1x256xf32>
    %6 = vector.extract_strided_slice %1 {offsets = [0, 0], sizes = [16, 42], strides = [1, 1]} : vector<16x196xbf16> to vector<16x42xbf16>
    %7 = vector.extract_strided_slice %1 {offsets = [0, 14], sizes = [16, 42], strides = [1, 1]} : vector<16x196xbf16> to vector<16x42xbf16>
    %8 = vector.extract_strided_slice %1 {offsets = [0, 28], sizes = [16, 42], strides = [1, 1]} : vector<16x196xbf16> to vector<16x42xbf16>
    %9 = vector.extract_strided_slice %1 {offsets = [0, 42], sizes = [16, 42], strides = [1, 1]} : vector<16x196xbf16> to vector<16x42xbf16>
    %10 = vector.extract_strided_slice %1 {offsets = [0, 56], sizes = [16, 42], strides = [1, 1]} : vector<16x196xbf16> to vector<16x42xbf16>
    %11 = vector.extract_strided_slice %1 {offsets = [0, 70], sizes = [16, 42], strides = [1, 1]} : vector<16x196xbf16> to vector<16x42xbf16>
    %12 = vector.extract_strided_slice %1 {offsets = [0, 84], sizes = [16, 42], strides = [1, 1]} : vector<16x196xbf16> to vector<16x42xbf16>
    %13 = vector.extract_strided_slice %1 {offsets = [0, 98], sizes = [16, 42], strides = [1, 1]} : vector<16x196xbf16> to vector<16x42xbf16>
    %14 = vector.extract_strided_slice %1 {offsets = [0, 112], sizes = [16, 42], strides = [1, 1]} : vector<16x196xbf16> to vector<16x42xbf16>
    %15 = vector.extract_strided_slice %1 {offsets = [0, 126], sizes = [16, 42], strides = [1, 1]} : vector<16x196xbf16> to vector<16x42xbf16>
    %16 = vector.extract_strided_slice %1 {offsets = [0, 140], sizes = [16, 42], strides = [1, 1]} : vector<16x196xbf16> to vector<16x42xbf16>
    %17 = vector.extract_strided_slice %1 {offsets = [0, 154], sizes = [16, 42], strides = [1, 1]} : vector<16x196xbf16> to vector<16x42xbf16>
    %18 = tpu.concatenate %6, %7, %8, %9, %10, %11, %12, %13, %14, %15, %16, %17 in 0 : vector<16x42xbf16>, vector<16x42xbf16>, vector<16x42xbf16>, vector<16x42xbf16>, vector<16x42xbf16>, vector<16x42xbf16>, vector<16x42xbf16>, vector<16x42xbf16>, vector<16x42xbf16>, vector<16x42xbf16>, vector<16x42xbf16>, vector<16x42xbf16> -> vector<192x42xbf16>
    %cst = arith.constant dense<0.000000e+00> : vector<192x768xf32>
    %19 = tpu.matmul %18, %3, %cst {dimension_numbers = #tpu.dot_dimension_numbers<[1], [0], [0], [1], [0, 0, 1, 1], [], []>} : vector<192x42xbf16>, vector<42x768xbf16>, vector<192x768xf32> -> vector<192x768xf32>
    %20 = vector.extract_strided_slice %19 {offsets = [0, 0], sizes = [16, 768], strides = [1, 1]} : vector<192x768xf32> to vector<16x768xf32>
    %21 = vector.extract_strided_slice %19 {offsets = [16, 0], sizes = [16, 768], strides = [1, 1]} : vector<192x768xf32> to vector<16x768xf32>
    %22 = arith.maximumf %20, %21 : vector<16x768xf32>
    %23 = vector.extract_strided_slice %19 {offsets = [32, 0], sizes = [16, 768], strides = [1, 1]} : vector<192x768xf32> to vector<16x768xf32>
    %24 = arith.maximumf %22, %23 : vector<16x768xf32>
    %25 = vector.extract_strided_slice %24 {offsets = [0, 0], sizes = [16, 256], strides = [1, 1]} : vector<16x768xf32> to vector<16x256xf32>
    %26 = vector.extract_strided_slice %24 {offsets = [0, 256], sizes = [16, 256], strides = [1, 1]} : vector<16x768xf32> to vector<16x256xf32>
    %27 = arith.maximumf %25, %26 : vector<16x256xf32>
    %28 = vector.extract_strided_slice %24 {offsets = [0, 512], sizes = [16, 256], strides = [1, 1]} : vector<16x768xf32> to vector<16x256xf32>
    %29 = arith.maximumf %27, %28 : vector<16x256xf32>
    %30 = vector.broadcast %5 : vector<1x256xf32> to vector<16x256xf32>
    %31 = arith.addf %29, %30 : vector<16x256xf32>
    %cst_8 = arith.constant 0.000000e+00 : f32
    %32 = vector.broadcast %cst_8 : f32 to vector<16x256xf32>
    %33 = arith.maximumf %31, %32 : vector<16x256xf32>
    %34 = arith.truncf %33 : vector<16x256xf32> to vector<16x256xbf16>
    %35 = vector.extract_strided_slice %19 {offsets = [48, 0], sizes = [16, 768], strides = [1, 1]} : vector<192x768xf32> to vector<16x768xf32>
    %36 = vector.extract_strided_slice %19 {offsets = [64, 0], sizes = [16, 768], strides = [1, 1]} : vector<192x768xf32> to vector<16x768xf32>
    %37 = arith.maximumf %35, %36 : vector<16x768xf32>
    %38 = vector.extract_strided_slice %19 {offsets = [80, 0], sizes = [16, 768], strides = [1, 1]} : vector<192x768xf32> to vector<16x768xf32>
    %39 = arith.maximumf %37, %38 : vector<16x768xf32>
    %40 = vector.extract_strided_slice %39 {offsets = [0, 0], sizes = [16, 256], strides = [1, 1]} : vector<16x768xf32> to vector<16x256xf32>
    %41 = vector.extract_strided_slice %39 {offsets = [0, 256], sizes = [16, 256], strides = [1, 1]} : vector<16x768xf32> to vector<16x256xf32>
    %42 = arith.maximumf %40, %41 : vector<16x256xf32>
    %43 = vector.extract_strided_slice %39 {offsets = [0, 512], sizes = [16, 256], strides = [1, 1]} : vector<16x768xf32> to vector<16x256xf32>
    %44 = arith.maximumf %42, %43 : vector<16x256xf32>
    %45 = vector.broadcast %5 : vector<1x256xf32> to vector<16x256xf32>
    %46 = arith.addf %44, %45 : vector<16x256xf32>
    %cst_9 = arith.constant 0.000000e+00 : f32
    %47 = vector.broadcast %cst_9 : f32 to vector<16x256xf32>
    %48 = arith.maximumf %46, %47 : vector<16x256xf32>
    %49 = arith.truncf %48 : vector<16x256xf32> to vector<16x256xbf16>
    %50 = vector.extract_strided_slice %19 {offsets = [96, 0], sizes = [16, 768], strides = [1, 1]} : vector<192x768xf32> to vector<16x768xf32>
    %51 = vector.extract_strided_slice %19 {offsets = [112, 0], sizes = [16, 768], strides = [1, 1]} : vector<192x768xf32> to vector<16x768xf32>
    %52 = arith.maximumf %50, %51 : vector<16x768xf32>
    %53 = vector.extract_strided_slice %19 {offsets = [128, 0], sizes = [16, 768], strides = [1, 1]} : vector<192x768xf32> to vector<16x768xf32>
    %54 = arith.maximumf %52, %53 : vector<16x768xf32>
    %55 = vector.extract_strided_slice %54 {offsets = [0, 0], sizes = [16, 256], strides = [1, 1]} : vector<16x768xf32> to vector<16x256xf32>
    %56 = vector.extract_strided_slice %54 {offsets = [0, 256], sizes = [16, 256], strides = [1, 1]} : vector<16x768xf32> to vector<16x256xf32>
    %57 = arith.maximumf %55, %56 : vector<16x256xf32>
    %58 = vector.extract_strided_slice %54 {offsets = [0, 512], sizes = [16, 256], strides = [1, 1]} : vector<16x768xf32> to vector<16x256xf32>
    %59 = arith.maximumf %57, %58 : vector<16x256xf32>
    %60 = vector.broadcast %5 : vector<1x256xf32> to vector<16x256xf32>
    %61 = arith.addf %59, %60 : vector<16x256xf32>
    %cst_10 = arith.constant 0.000000e+00 : f32
    %62 = vector.broadcast %cst_10 : f32 to vector<16x256xf32>
    %63 = arith.maximumf %61, %62 : vector<16x256xf32>
    %64 = arith.truncf %63 : vector<16x256xf32> to vector<16x256xbf16>
    %65 = vector.extract_strided_slice %19 {offsets = [144, 0], sizes = [16, 768], strides = [1, 1]} : vector<192x768xf32> to vector<16x768xf32>
    %66 = vector.extract_strided_slice %19 {offsets = [160, 0], sizes = [16, 768], strides = [1, 1]} : vector<192x768xf32> to vector<16x768xf32>
    %67 = arith.maximumf %65, %66 : vector<16x768xf32>
    %68 = vector.extract_strided_slice %19 {offsets = [176, 0], sizes = [16, 768], strides = [1, 1]} : vector<192x768xf32> to vector<16x768xf32>
    %69 = arith.maximumf %67, %68 : vector<16x768xf32>
    %70 = vector.extract_strided_slice %69 {offsets = [0, 0], sizes = [16, 256], strides = [1, 1]} : vector<16x768xf32> to vector<16x256xf32>
    %71 = vector.extract_strided_slice %69 {offsets = [0, 256], sizes = [16, 256], strides = [1, 1]} : vector<16x768xf32> to vector<16x256xf32>
    %72 = arith.maximumf %70, %71 : vector<16x256xf32>
    %73 = vector.extract_strided_slice %69 {offsets = [0, 512], sizes = [16, 256], strides = [1, 1]} : vector<16x768xf32> to vector<16x256xf32>
    %74 = arith.maximumf %72, %73 : vector<16x256xf32>
    %75 = vector.broadcast %5 : vector<1x256xf32> to vector<16x256xf32>
    %76 = arith.addf %74, %75 : vector<16x256xf32>
    %cst_11 = arith.constant 0.000000e+00 : f32
    %77 = vector.broadcast %cst_11 : f32 to vector<16x256xf32>
    %78 = arith.maximumf %76, %77 : vector<16x256xf32>
    %79 = arith.truncf %78 : vector<16x256xf32> to vector<16x256xbf16>
    %80 = vector.extract_strided_slice %34 {offsets = [0, 0], sizes = [16, 192], strides = [1, 1]} : vector<16x256xbf16> to vector<16x192xbf16>
    %81 = vector.extract_strided_slice %49 {offsets = [0, 0], sizes = [16, 192], strides = [1, 1]} : vector<16x256xbf16> to vector<16x192xbf16>
    %82 = vector.extract_strided_slice %64 {offsets = [0, 0], sizes = [16, 192], strides = [1, 1]} : vector<16x256xbf16> to vector<16x192xbf16>
    %83 = tpu.concatenate %80, %81, %82 in 1 : vector<16x192xbf16>, vector<16x192xbf16>, vector<16x192xbf16> -> vector<16x576xbf16>
    %84 = vector.extract_strided_slice %34 {offsets = [0, 64], sizes = [16, 192], strides = [1, 1]} : vector<16x256xbf16> to vector<16x192xbf16>
    %85 = vector.extract_strided_slice %49 {offsets = [0, 64], sizes = [16, 192], strides = [1, 1]} : vector<16x256xbf16> to vector<16x192xbf16>
    %86 = vector.extract_strided_slice %64 {offsets = [0, 64], sizes = [16, 192], strides = [1, 1]} : vector<16x256xbf16> to vector<16x192xbf16>
    %87 = tpu.concatenate %84, %85, %86 in 1 : vector<16x192xbf16>, vector<16x192xbf16>, vector<16x192xbf16> -> vector<16x576xbf16>
    %88 = vector.extract_strided_slice %49 {offsets = [0, 0], sizes = [16, 192], strides = [1, 1]} : vector<16x256xbf16> to vector<16x192xbf16>
    %89 = vector.extract_strided_slice %64 {offsets = [0, 0], sizes = [16, 192], strides = [1, 1]} : vector<16x256xbf16> to vector<16x192xbf16>
    %90 = vector.extract_strided_slice %79 {offsets = [0, 0], sizes = [16, 192], strides = [1, 1]} : vector<16x256xbf16> to vector<16x192xbf16>
    %91 = tpu.concatenate %88, %89, %90 in 1 : vector<16x192xbf16>, vector<16x192xbf16>, vector<16x192xbf16> -> vector<16x576xbf16>
    %92 = vector.extract_strided_slice %49 {offsets = [0, 64], sizes = [16, 192], strides = [1, 1]} : vector<16x256xbf16> to vector<16x192xbf16>
    %93 = vector.extract_strided_slice %64 {offsets = [0, 64], sizes = [16, 192], strides = [1, 1]} : vector<16x256xbf16> to vector<16x192xbf16>
    %94 = vector.extract_strided_slice %79 {offsets = [0, 64], sizes = [16, 192], strides = [1, 1]} : vector<16x256xbf16> to vector<16x192xbf16>
    %95 = tpu.concatenate %92, %93, %94 in 1 : vector<16x192xbf16>, vector<16x192xbf16>, vector<16x192xbf16> -> vector<16x576xbf16>
    %96 = tpu.concatenate %83, %87, %91, %95 in 0 : vector<16x576xbf16>, vector<16x576xbf16>, vector<16x576xbf16>, vector<16x576xbf16> -> vector<64x576xbf16>
    %c0_12 = arith.constant 0 : index
    %c0_13 = arith.constant 0 : index
    %c0_14 = arith.constant 0 : index
    %97 = vector.load %arg5[%c0_12, %c0_13, %c0_14] : memref<1x576x128xbf16, #tpu.memory_space<vmem>>, vector<1x576x128xbf16>
    %98 = vector.shape_cast %97 : vector<1x576x128xbf16> to vector<576x128xbf16>
    %cst_15 = arith.constant dense<0.000000e+00> : vector<64x128xf32>
    %99 = tpu.matmul %96, %98, %cst_15 {dimension_numbers = #tpu.dot_dimension_numbers<[1], [0], [0], [1], [0, 0, 1, 1], [], []>} : vector<64x576xbf16>, vector<576x128xbf16>, vector<64x128xf32> -> vector<64x128xf32>
    %c0_16 = arith.constant 0 : index
    %c0_17 = arith.constant 0 : index
    %c0_18 = arith.constant 0 : index
    %100 = vector.load %arg6[%c0_16, %c0_17, %c0_18] : memref<1x1x128xf32, #tpu.memory_space<vmem>>, vector<1x1x128xf32>
    %101 = vector.shape_cast %100 : vector<1x1x128xf32> to vector<1x128xf32>
    %102 = vector.broadcast %101 : vector<1x128xf32> to vector<64x128xf32>
    %103 = arith.addf %99, %102 : vector<64x128xf32>
    %cst_19 = arith.constant 0.000000e+00 : f32
    %104 = vector.broadcast %cst_19 : f32 to vector<64x128xf32>
    %105 = arith.maximumf %103, %104 : vector<64x128xf32>
    %c0_20 = arith.constant 0 : index
    %c0_21 = arith.constant 0 : index
    %c0_22 = arith.constant 0 : index
    %106 = vector.load %arg7[%c0_20, %c0_21, %c0_22] : memref<1x512x256xbf16, #tpu.memory_space<vmem>>, vector<1x512x256xbf16>
    %107 = vector.shape_cast %106 : vector<1x512x256xbf16> to vector<512x256xbf16>
    %108 = vector.extract_strided_slice %105 {offsets = [0, 0], sizes = [16, 128], strides = [1, 1]} : vector<64x128xf32> to vector<16x128xf32>
    %109 = arith.truncf %108 : vector<16x128xf32> to vector<16x128xbf16>
    %110 = vector.extract_strided_slice %107 {offsets = [0, 0], sizes = [128, 256], strides = [1, 1]} : vector<512x256xbf16> to vector<128x256xbf16>
    %cst_23 = arith.constant dense<0.000000e+00> : vector<16x256xf32>
    %111 = tpu.matmul %109, %110, %cst_23 {dimension_numbers = #tpu.dot_dimension_numbers<[1], [0], [0], [1], [0, 0, 1, 1], [], []>} : vector<16x128xbf16>, vector<128x256xbf16>, vector<16x256xf32> -> vector<16x256xf32>
    %112 = vector.extract_strided_slice %105 {offsets = [16, 0], sizes = [16, 128], strides = [1, 1]} : vector<64x128xf32> to vector<16x128xf32>
    %113 = arith.truncf %112 : vector<16x128xf32> to vector<16x128xbf16>
    %114 = vector.extract_strided_slice %107 {offsets = [128, 0], sizes = [128, 256], strides = [1, 1]} : vector<512x256xbf16> to vector<128x256xbf16>
    %cst_24 = arith.constant dense<0.000000e+00> : vector<16x256xf32>
    %115 = tpu.matmul %113, %114, %cst_24 {dimension_numbers = #tpu.dot_dimension_numbers<[1], [0], [0], [1], [0, 0, 1, 1], [], []>} : vector<16x128xbf16>, vector<128x256xbf16>, vector<16x256xf32> -> vector<16x256xf32>
    %116 = arith.addf %111, %115 : vector<16x256xf32>
    %117 = vector.extract_strided_slice %105 {offsets = [32, 0], sizes = [16, 128], strides = [1, 1]} : vector<64x128xf32> to vector<16x128xf32>
    %118 = arith.truncf %117 : vector<16x128xf32> to vector<16x128xbf16>
    %119 = vector.extract_strided_slice %107 {offsets = [256, 0], sizes = [128, 256], strides = [1, 1]} : vector<512x256xbf16> to vector<128x256xbf16>
    %cst_25 = arith.constant dense<0.000000e+00> : vector<16x256xf32>
    %120 = tpu.matmul %118, %119, %cst_25 {dimension_numbers = #tpu.dot_dimension_numbers<[1], [0], [0], [1], [0, 0, 1, 1], [], []>} : vector<16x128xbf16>, vector<128x256xbf16>, vector<16x256xf32> -> vector<16x256xf32>
    %121 = arith.addf %116, %120 : vector<16x256xf32>
    %122 = vector.extract_strided_slice %105 {offsets = [48, 0], sizes = [16, 128], strides = [1, 1]} : vector<64x128xf32> to vector<16x128xf32>
    %123 = arith.truncf %122 : vector<16x128xf32> to vector<16x128xbf16>
    %124 = vector.extract_strided_slice %107 {offsets = [384, 0], sizes = [128, 256], strides = [1, 1]} : vector<512x256xbf16> to vector<128x256xbf16>
    %cst_26 = arith.constant dense<0.000000e+00> : vector<16x256xf32>
    %125 = tpu.matmul %123, %124, %cst_26 {dimension_numbers = #tpu.dot_dimension_numbers<[1], [0], [0], [1], [0, 0, 1, 1], [], []>} : vector<16x128xbf16>, vector<128x256xbf16>, vector<16x256xf32> -> vector<16x256xf32>
    %126 = arith.addf %121, %125 : vector<16x256xf32>
    %c0_27 = arith.constant 0 : index
    %c0_28 = arith.constant 0 : index
    %c0_29 = arith.constant 0 : index
    %127 = vector.load %arg8[%c0_27, %c0_28, %c0_29] : memref<1x1x256xf32, #tpu.memory_space<vmem>>, vector<1x1x256xf32>
    %128 = vector.shape_cast %127 : vector<1x1x256xf32> to vector<1x256xf32>
    %129 = vector.broadcast %128 : vector<1x256xf32> to vector<16x256xf32>
    %130 = arith.addf %126, %129 : vector<16x256xf32>
    %cst_30 = arith.constant 0.000000e+00 : f32
    %131 = vector.broadcast %cst_30 : f32 to vector<16x256xf32>
    %132 = arith.maximumf %130, %131 : vector<16x256xf32>
    %133 = arith.truncf %132 : vector<16x256xf32> to vector<16x256xbf16>
    %c0_31 = arith.constant 0 : index
    %c0_32 = arith.constant 0 : index
    %c0_33 = arith.constant 0 : index
    %134 = vector.load %arg9[%c0_31, %c0_32, %c0_33] : memref<1x256x128xbf16, #tpu.memory_space<vmem>>, vector<1x256x128xbf16>
    %135 = vector.shape_cast %134 : vector<1x256x128xbf16> to vector<256x128xbf16>
    %cst_34 = arith.constant dense<0.000000e+00> : vector<16x128xf32>
    %136 = tpu.matmul %133, %135, %cst_34 {dimension_numbers = #tpu.dot_dimension_numbers<[1], [0], [0], [1], [0, 0, 1, 1], [], []>} : vector<16x256xbf16>, vector<256x128xbf16>, vector<16x128xf32> -> vector<16x128xf32>
    %c0_35 = arith.constant 0 : index
    %c0_36 = arith.constant 0 : index
    %c0_37 = arith.constant 0 : index
    %137 = vector.load %arg10[%c0_35, %c0_36, %c0_37] : memref<1x1x128xf32, #tpu.memory_space<vmem>>, vector<1x1x128xf32>
    %138 = vector.shape_cast %137 : vector<1x1x128xf32> to vector<1x128xf32>
    %139 = vector.broadcast %138 : vector<1x128xf32> to vector<16x128xf32>
    %140 = arith.addf %136, %139 : vector<16x128xf32>
    %cst_38 = arith.constant 0.000000e+00 : f32
    %141 = vector.broadcast %cst_38 : f32 to vector<16x128xf32>
    %142 = arith.maximumf %140, %141 : vector<16x128xf32>
    %143 = arith.truncf %142 : vector<16x128xf32> to vector<16x128xbf16>
    %c0_39 = arith.constant 0 : index
    %c0_40 = arith.constant 0 : index
    %c0_41 = arith.constant 0 : index
    %144 = vector.load %arg11[%c0_39, %c0_40, %c0_41] : memref<1x128x128xbf16, #tpu.memory_space<vmem>>, vector<1x128x128xbf16>
    %145 = vector.shape_cast %144 : vector<1x128x128xbf16> to vector<128x128xbf16>
    %cst_42 = arith.constant dense<0.000000e+00> : vector<16x128xf32>
    %146 = tpu.matmul %143, %145, %cst_42 {dimension_numbers = #tpu.dot_dimension_numbers<[1], [0], [0], [1], [0, 0, 1, 1], [], []>} : vector<16x128xbf16>, vector<128x128xbf16>, vector<16x128xf32> -> vector<16x128xf32>
    %c0_43 = arith.constant 0 : index
    %c0_44 = arith.constant 0 : index
    %c0_45 = arith.constant 0 : index
    %147 = vector.load %arg12[%c0_43, %c0_44, %c0_45] : memref<1x1x128xf32, #tpu.memory_space<vmem>>, vector<1x1x128xf32>
    %148 = vector.shape_cast %147 : vector<1x1x128xf32> to vector<1x128xf32>
    %149 = vector.broadcast %148 : vector<1x128xf32> to vector<16x128xf32>
    %150 = arith.addf %146, %149 : vector<16x128xf32>
    %c0_46 = arith.constant 0 : index
    %c0_47 = arith.constant 0 : index
    %c0_48 = arith.constant 0 : index
    %151 = vector.load %arg13[%c0_46, %c0_47, %c0_48] : memref<1x16x128xf32, #tpu.memory_space<vmem>>, vector<1x16x128xf32>
    %152 = vector.shape_cast %151 : vector<1x16x128xf32> to vector<16x128xf32>
    %153 = vector.shape_cast %150 : vector<16x128xf32> to vector<1x16x128xf32>
    tpu.vector_store %arg13[%c0_46, %c0_47, %c0_48], %153 {strides = array<i32>} : memref<1x16x128xf32, #tpu.memory_space<vmem>>, vector<1x16x128xf32>,
    return
  }
  func.func @transform_0(%arg0: i32, %arg1: i32) -> (i32, i32, i32) {
    %c0_i32 = arith.constant 0 : i32
    %c0_i32_0 = arith.constant 0 : i32
    return %arg0, %arg1, %c0_i32 : i32, i32, i32
  }
  func.func @transform_1(%arg0: i32, %arg1: i32) -> (i32, i32, i32) {
    %c0_i32 = arith.constant 0 : i32
    %c0_i32_0 = arith.constant 0 : i32
    %c0_i32_1 = arith.constant 0 : i32
    return %arg0, %c0_i32, %c0_i32_0 : i32, i32, i32
  }
  func.func @transform_2(%arg0: i32, %arg1: i32) -> (i32, i32, i32) {
    %c0_i32 = arith.constant 0 : i32
    %c0_i32_0 = arith.constant 0 : i32
    %c0_i32_1 = arith.constant 0 : i32
    return %arg0, %c0_i32, %c0_i32_0 : i32, i32, i32
  }
  func.func @transform_3(%arg0: i32, %arg1: i32) -> (i32, i32, i32) {
    %c0_i32 = arith.constant 0 : i32
    %c0_i32_0 = arith.constant 0 : i32
    %c0_i32_1 = arith.constant 0 : i32
    return %arg0, %c0_i32, %c0_i32_0 : i32, i32, i32
  }
  func.func @transform_4(%arg0: i32, %arg1: i32) -> (i32, i32, i32) {
    %c0_i32 = arith.constant 0 : i32
    %c0_i32_0 = arith.constant 0 : i32
    %c0_i32_1 = arith.constant 0 : i32
    return %arg0, %c0_i32, %c0_i32_0 : i32, i32, i32
  }
  func.func @transform_5(%arg0: i32, %arg1: i32) -> (i32, i32, i32) {
    %c0_i32 = arith.constant 0 : i32
    %c0_i32_0 = arith.constant 0 : i32
    %c0_i32_1 = arith.constant 0 : i32
    return %arg0, %c0_i32, %c0_i32_0 : i32, i32, i32
  }
  func.func @transform_6(%arg0: i32, %arg1: i32) -> (i32, i32, i32) {
    %c0_i32 = arith.constant 0 : i32
    %c0_i32_0 = arith.constant 0 : i32
    %c0_i32_1 = arith.constant 0 : i32
    return %arg0, %c0_i32, %c0_i32_0 : i32, i32, i32
  }
  func.func @transform_7(%arg0: i32, %arg1: i32) -> (i32, i32, i32) {
    %c0_i32 = arith.constant 0 : i32
    %c0_i32_0 = arith.constant 0 : i32
    %c0_i32_1 = arith.constant 0 : i32
    return %arg0, %c0_i32, %c0_i32_0 : i32, i32, i32
  }
  func.func @transform_8(%arg0: i32, %arg1: i32) -> (i32, i32, i32) {
    %c0_i32 = arith.constant 0 : i32
    %c0_i32_0 = arith.constant 0 : i32
    %c0_i32_1 = arith.constant 0 : i32
    return %arg0, %c0_i32, %c0_i32_0 : i32, i32, i32
  }
  func.func @transform_9(%arg0: i32, %arg1: i32) -> (i32, i32, i32) {
    %c0_i32 = arith.constant 0 : i32
    %c0_i32_0 = arith.constant 0 : i32
    %c0_i32_1 = arith.constant 0 : i32
    return %arg0, %c0_i32, %c0_i32_0 : i32, i32, i32
  }
  func.func @transform_10(%arg0: i32, %arg1: i32) -> (i32, i32, i32) {
    %c0_i32 = arith.constant 0 : i32
    %c0_i32_0 = arith.constant 0 : i32
    %c0_i32_1 = arith.constant 0 : i32
    return %arg0, %c0_i32, %c0_i32_0 : i32, i32, i32
  }
  func.func @transform_11(%arg0: i32, %arg1: i32) -> (i32, i32, i32) {
    %c0_i32 = arith.constant 0 : i32
    %c0_i32_0 = arith.constant 0 : i32
    return %arg0, %arg1, %c0_i32 : i32, i32, i32
  }
}

</mosaic_0001>

<llo_original>
// kernel: tpu_custom_call.1
$region0: #{tpu_custom_call.1}
  #allocation0 [shape = 'u32[]', space=smem, size = 0x4, offset = 0x4, fixed_abs, tag = 'smem constant byte address 0x4 - core index']
  #allocation1 [shape = 'u32[144,128]{1,0:T(1,128)}', space=vmem, size = 0x12000, scoped, tag = 'internal scratch']
  %s0 = inlined_call_operand.vmem [shape: bf16[2,16,196], index: 0, kind: input, shape index: {}]
  %s1 = inlined_call_operand.vmem [shape: bf16[2,42,768], index: 1, kind: input, shape index: {}]
  %s2 = inlined_call_operand.vmem [shape: f32[2,1,256], index: 2, kind: input, shape index: {}]
  %s3 = inlined_call_operand.hbm [shape: bf16[2,576,128], index: 3, kind: input, shape index: {}]
  %s4 = inlined_call_operand.vmem [shape: f32[2,1,128], index: 4, kind: input, shape index: {}]
  %s5 = inlined_call_operand.hbm [shape: bf16[2,512,256], index: 5, kind: input, shape index: {}]
  %s6 = inlined_call_operand.vmem [shape: f32[2,1,256], index: 6, kind: input, shape index: {}]
  %s7 = inlined_call_operand.vmem [shape: bf16[2,256,128], index: 7, kind: input, shape index: {}]
  %s8 = inlined_call_operand.vmem [shape: f32[2,1,128], index: 8, kind: input, shape index: {}]
  %s9 = inlined_call_operand.vmem [shape: bf16[2,128,128], index: 9, kind: input, shape index: {}]
  %s10 = inlined_call_operand.vmem [shape: f32[2,1,128], index: 10, kind: input, shape index: {}]
  %s11 = inlined_call_operand.hbm [shape: f32[2,16,128], index: 11, kind: output, shape index: {}]
  %s12 = sld [smem:[#allocation0]]
  $region85: #{tpu_custom_call.1} parent=0
    _
  %s14 = ssub.s32 1, %s12
  %s15 = scalar_select 0, %s14, %s12
  $region1: #{tpu_custom_call.1} parent=0
    #allocation2 [shape = 'u8[294912]{0}', space=vmem, size = 0x48000, scoped, tag = 'input window, operand 3']
    #allocation3 [shape = 's32[2]{0}', space=sflag, size = 0x8, scoped, tag = 'scoped memory for tpu_custom_call.1']
    #allocation4 [shape = 's32[2]{0}', space=sflag, size = 0x8, scoped, tag = 'scoped memory for tpu_custom_call.1']
    #allocation5 [shape = 'u8[524288]{0}', space=vmem, size = 0x80000, scoped, tag = 'input window, operand 5']
    #allocation6 [shape = 's32[2]{0}', space=sflag, size = 0x8, scoped, tag = 'scoped memory for tpu_custom_call.1']
    #allocation7 [shape = 'u8[16384]{0}', space=vmem, size = 0x4000, scoped, tag = 'output window, operand 0']
    %16 = vsyncpa [#allocation3], 0
    %s17 = scalar_lea.sflag [#allocation3], 1
    %18 = vsyncpa %s17, 0
    %19 = vsyncpa [#allocation6], 0
    %s20 = scalar_lea.sflag [#allocation6], 1
    %21 = vsyncpa %s20, 0
    %22 = vsyncpa [#allocation4], 0
    %s23 = scalar_lea.sflag [#allocation4], 1
    %24 = vsyncpa %s23, 0
    loop: start=0, step=1, limit=4
    $region2: #{tpu_custom_call.1} parent=1 // loop_pre_header
      _
    $region3: #{tpu_custom_call.1} parent=1 // loop_header
      %s26 = sphi 0, %s30
      %p27 = scmp.ge.s32.totalorder %s26, 4
      %s33 = sphi 0, %s45
      %s34 = sphi 0, %s41
      %s35 = sphi 0, %s33
      %s36 = sphi 0, %s34
      %s37 = sphi 0, %s35
      %s38 = sphi 0, %s36
      %s50 = sphi 0, %s52
      %s53 = sphi 0, %s50
      %s54 = sphi 0, %s53
      %s70 = sphi 0, %s54
      %s76 = sphi 0, %s78
      %s79 = sphi 0, %s76
      %s80 = sphi 0, %s79
      %s96 = sphi 0, %s80
      %s102 = sphi 0, %s104
      %s105 = sphi 0, %s102
      %s106 = sphi 0, %s105
      %s122 = sphi 0, %s106
      %s128 = sphi 0, %s130
      %s131 = sphi 0, %s128
      %s132 = sphi 0, %s131
      %s148 = sphi 0, %s132
      %s154 = sphi 0, %s156
      %s157 = sphi 0, %s154
      %s158 = sphi 0, %s157
      %s174 = sphi 0, %s158
      %s180 = sphi 0, %s182
      %s183 = sphi 0, %s180
      %s184 = sphi 0, %s183
      %s200 = sphi 0, %s184
      %s206 = sphi 0, %s208
      %s209 = sphi 0, %s206
      %s210 = sphi 0, %s209
      %s226 = sphi 0, %s210
      %s232 = sphi 0, %s234
      %s235 = sphi 0, %s232
      %s236 = sphi 0, %s235
      %s252 = sphi 0, %s236
      %s258 = sphi 0, %s260
      %s261 = sphi 0, %s258
      %s262 = sphi 0, %s261
      %s278 = sphi 0, %s262
      %s284 = sphi 0, %s286
      %s287 = sphi 0, %s284
      %s288 = sphi 0, %s287
      %s304 = sphi 0, %s288
      %s310 = sphi 0, %s312
      %s313 = sphi 0, %s310
      %s314 = sphi 0, %s313
      %s330 = sphi 0, %s314
      %s338 = sphi 0, %s340
      %s341 = sphi 0, %s338
      %s342 = sphi 0, %s341
      %s358 = sphi 0, %s342
    $region4: #{tpu_custom_call.1} parent=1 // loop_header_branch
      %29 = sbr.rel (%p27) target = $region8
    $region5: #{tpu_custom_call.1} parent=1 // loop_body
      %s31 = ssub.s32 %s26, 1
      %s32 = ssub.s32 %s26, 2
      %s39 = sadd.s32 1, %s34
      %p40 = scmp.ge.s32.totalorder %s39, 1
      %s41 = scalar_select %p40, 0, %s39
      %s42 = sadd.s32 1, %s33
      %s43 = scalar_select %p40, %s42, %s33
      %p44 = scmp.ge.s32.totalorder %s43, 2
      %s45 = scalar_select %p44, 0, %s43
      %s46 = ssub.s32 %s33, %s45
      %s47 = ssub.s32 %s34, %s41
      %s48 = sor.u32 %s46, %s47
      %p49 = scmp.eq.s32.totalorder %s48, 0
      %s51 = sadd.s32 %s50, 1
      %s52 = scalar_select %p49, %s50, %s51
      %p55 = pneg %p49
      %p56 = scmp.eq.s32.totalorder %s26, 1
      %p57 = por %p55, %p56
      %p58 = scmp.ne.s32.totalorder %s50, %s53
      %p59 = scmp.eq.s32.totalorder %s26, 0
      %p60 = por %p58, %p59
      %p61 = scmp.ne.s32.totalorder %s50, %s53
      %p62 = scmp.eq.s32.totalorder %s31, 1
      %p63 = por %p61, %p62
      %p64 = scmp.ne.s32.totalorder %s53, %s54
      %p65 = scmp.eq.s32.totalorder %s31, 0
      %p66 = por %p64, %p65
      %p67 = scmp.ne.s32.totalorder %s53, %s54
      %p68 = scmp.eq.s32.totalorder %s32, 1
      %p69 = por %p67, %p68
      %p71 = scmp.ne.s32.totalorder %s54, %s70
      %p72 = scmp.eq.s32.totalorder %s32, 0
      %p73 = por %p71, %p72
      %s74 = ssub.s32 %s33, %s45
      %p75 = scmp.eq.s32.totalorder %s74, 0
      %s77 = sadd.s32 %s76, 1
      %s78 = scalar_select %p75, %s76, %s77
      %p81 = pneg %p75
      %p82 = scmp.eq.s32.totalorder %s26, 1
      %p83 = por %p81, %p82
      %p84 = scmp.ne.s32.totalorder %s76, %s79
      %p85 = scmp.eq.s32.totalorder %s26, 0
      %p86 = por %p84, %p85
      %p87 = scmp.ne.s32.totalorder %s76, %s79
      %p88 = scmp.eq.s32.totalorder %s31, 1
      %p89 = por %p87, %p88
      %p90 = scmp.ne.s32.totalorder %s79, %s80
      %p91 = scmp.eq.s32.totalorder %s31, 0
      %p92 = por %p90, %p91
      %p93 = scmp.ne.s32.totalorder %s79, %s80
      %p94 = scmp.eq.s32.totalorder %s32, 1
      %p95 = por %p93, %p94
      %p97 = scmp.ne.s32.totalorder %s80, %s96
      %p98 = scmp.eq.s32.totalorder %s32, 0
      %p99 = por %p97, %p98
      %s100 = ssub.s32 %s33, %s45
      %p101 = scmp.eq.s32.totalorder %s100, 0
      %s103 = sadd.s32 %s102, 1
      %s104 = scalar_select %p101, %s102, %s103
      %p107 = pneg %p101
      %p108 = scmp.eq.s32.totalorder %s26, 1
      %p109 = por %p107, %p108
      %p110 = scmp.ne.s32.totalorder %s102, %s105
      %p111 = scmp.eq.s32.totalorder %s26, 0
      %p112 = por %p110, %p111
      %p113 = scmp.ne.s32.totalorder %s102, %s105
      %p114 = scmp.eq.s32.totalorder %s31, 1
      %p115 = por %p113, %p114
      %p116 = scmp.ne.s32.totalorder %s105, %s106
      %p117 = scmp.eq.s32.totalorder %s31, 0
      %p118 = por %p116, %p117
      %p119 = scmp.ne.s32.totalorder %s105, %s106
      %p120 = scmp.eq.s32.totalorder %s32, 1
      %p121 = por %p119, %p120
      %p123 = scmp.ne.s32.totalorder %s106, %s122
      %p124 = scmp.eq.s32.totalorder %s32, 0
      %p125 = por %p123, %p124
      %s126 = ssub.s32 %s33, %s45
      %p127 = scmp.eq.s32.totalorder %s126, 0
      %s129 = sadd.s32 %s128, 1
      %s130 = scalar_select %p127, %s128, %s129
      %p133 = pneg %p127
      %p134 = scmp.eq.s32.totalorder %s26, 1
      %p135 = por %p133, %p134
      %p136 = scmp.ne.s32.totalorder %s128, %s131
      %p137 = scmp.eq.s32.totalorder %s26, 0
      %p138 = por %p136, %p137
      %p139 = scmp.ne.s32.totalorder %s128, %s131
      %p140 = scmp.eq.s32.totalorder %s31, 1
      %p141 = por %p139, %p140
      %p142 = scmp.ne.s32.totalorder %s131, %s132
      %p143 = scmp.eq.s32.totalorder %s31, 0
      %p144 = por %p142, %p143
      %p145 = scmp.ne.s32.totalorder %s131, %s132
      %p146 = scmp.eq.s32.totalorder %s32, 1
      %p147 = por %p145, %p146
      %p149 = scmp.ne.s32.totalorder %s132, %s148
      %p150 = scmp.eq.s32.totalorder %s32, 0
      %p151 = por %p149, %p150
      %s152 = ssub.s32 %s33, %s45
      %p153 = scmp.eq.s32.totalorder %s152, 0
      %s155 = sadd.s32 %s154, 1
      %s156 = scalar_select %p153, %s154, %s155
      %p159 = pneg %p153
      %p160 = scmp.eq.s32.totalorder %s26, 1
      %p161 = por %p159, %p160
      %p162 = scmp.ne.s32.totalorder %s154, %s157
      %p163 = scmp.eq.s32.totalorder %s26, 0
      %p164 = por %p162, %p163
      %p165 = scmp.ne.s32.totalorder %s154, %s157
      %p166 = scmp.eq.s32.totalorder %s31, 1
      %p167 = por %p165, %p166
      %p168 = scmp.ne.s32.totalorder %s157, %s158
      %p169 = scmp.eq.s32.totalorder %s31, 0
      %p170 = por %p168, %p169
      %p171 = scmp.ne.s32.totalorder %s157, %s158
      %p172 = scmp.eq.s32.totalorder %s32, 1
      %p173 = por %p171, %p172
      %p175 = scmp.ne.s32.totalorder %s158, %s174
      %p176 = scmp.eq.s32.totalorder %s32, 0
      %p177 = por %p175, %p176
      %s178 = ssub.s32 %s33, %s45
      %p179 = scmp.eq.s32.totalorder %s178, 0
      %s181 = sadd.s32 %s180, 1
      %s182 = scalar_select %p179, %s180, %s181
      %p185 = pneg %p179
      %p186 = scmp.eq.s32.totalorder %s26, 1
      %p187 = por %p185, %p186
      %p188 = scmp.ne.s32.totalorder %s180, %s183
      %p189 = scmp.eq.s32.totalorder %s26, 0
      %p190 = por %p188, %p189
      %p191 = scmp.ne.s32.totalorder %s180, %s183
      %p192 = scmp.eq.s32.totalorder %s31, 1
      %p193 = por %p191, %p192
      %p194 = scmp.ne.s32.totalorder %s183, %s184
      %p195 = scmp.eq.s32.totalorder %s31, 0
      %p196 = por %p194, %p195
      %p197 = scmp.ne.s32.totalorder %s183, %s184
      %p198 = scmp.eq.s32.totalorder %s32, 1
      %p199 = por %p197, %p198
      %p201 = scmp.ne.s32.totalorder %s184, %s200
      %p202 = scmp.eq.s32.totalorder %s32, 0
      %p203 = por %p201, %p202
      %s204 = ssub.s32 %s33, %s45
      %p205 = scmp.eq.s32.totalorder %s204, 0
      %s207 = sadd.s32 %s206, 1
      %s208 = scalar_select %p205, %s206, %s207
      %p211 = pneg %p205
      %p212 = scmp.eq.s32.totalorder %s26, 1
      %p213 = por %p211, %p212
      %p214 = scmp.ne.s32.totalorder %s206, %s209
      %p215 = scmp.eq.s32.totalorder %s26, 0
      %p216 = por %p214, %p215
      %p217 = scmp.ne.s32.totalorder %s206, %s209
      %p218 = scmp.eq.s32.totalorder %s31, 1
      %p219 = por %p217, %p218
      %p220 = scmp.ne.s32.totalorder %s209, %s210
      %p221 = scmp.eq.s32.totalorder %s31, 0
      %p222 = por %p220, %p221
      %p223 = scmp.ne.s32.totalorder %s209, %s210
      %p224 = scmp.eq.s32.totalorder %s32, 1
      %p225 = por %p223, %p224
      %p227 = scmp.ne.s32.totalorder %s210, %s226
      %p228 = scmp.eq.s32.totalorder %s32, 0
      %p229 = por %p227, %p228
      %s230 = ssub.s32 %s33, %s45
      %p231 = scmp.eq.s32.totalorder %s230, 0
      %s233 = sadd.s32 %s232, 1
      %s234 = scalar_select %p231, %s232, %s233
      %p237 = pneg %p231
      %p238 = scmp.eq.s32.totalorder %s26, 1
      %p239 = por %p237, %p238
      %p240 = scmp.ne.s32.totalorder %s232, %s235
      %p241 = scmp.eq.s32.totalorder %s26, 0
      %p242 = por %p240, %p241
      %p243 = scmp.ne.s32.totalorder %s232, %s235
      %p244 = scmp.eq.s32.totalorder %s31, 1
      %p245 = por %p243, %p244
      %p246 = scmp.ne.s32.totalorder %s235, %s236
      %p247 = scmp.eq.s32.totalorder %s31, 0
      %p248 = por %p246, %p247
      %p249 = scmp.ne.s32.totalorder %s235, %s236
      %p250 = scmp.eq.s32.totalorder %s32, 1
      %p251 = por %p249, %p250
      %p253 = scmp.ne.s32.totalorder %s236, %s252
      %p254 = scmp.eq.s32.totalorder %s32, 0
      %p255 = por %p253, %p254
      %s256 = ssub.s32 %s33, %s45
      %p257 = scmp.eq.s32.totalorder %s256, 0
      %s259 = sadd.s32 %s258, 1
      %s260 = scalar_select %p257, %s258, %s259
      %p263 = pneg %p257
      %p264 = scmp.eq.s32.totalorder %s26, 1
      %p265 = por %p263, %p264
      %p266 = scmp.ne.s32.totalorder %s258, %s261
      %p267 = scmp.eq.s32.totalorder %s26, 0
      %p268 = por %p266, %p267
      %p269 = scmp.ne.s32.totalorder %s258, %s261
      %p270 = scmp.eq.s32.totalorder %s31, 1
      %p271 = por %p269, %p270
      %p272 = scmp.ne.s32.totalorder %s261, %s262
      %p273 = scmp.eq.s32.totalorder %s31, 0
      %p274 = por %p272, %p273
      %p275 = scmp.ne.s32.totalorder %s261, %s262
      %p276 = scmp.eq.s32.totalorder %s32, 1
      %p277 = por %p275, %p276
      %p279 = scmp.ne.s32.totalorder %s262, %s278
      %p280 = scmp.eq.s32.totalorder %s32, 0
      %p281 = por %p279, %p280
      %s282 = ssub.s32 %s33, %s45
      %p283 = scmp.eq.s32.totalorder %s282, 0
      %s285 = sadd.s32 %s284, 1
      %s286 = scalar_select %p283, %s284, %s285
      %p289 = pneg %p283
      %p290 = scmp.eq.s32.totalorder %s26, 1
      %p291 = por %p289, %p290
      %p292 = scmp.ne.s32.totalorder %s284, %s287
      %p293 = scmp.eq.s32.totalorder %s26, 0
      %p294 = por %p292, %p293
      %p295 = scmp.ne.s32.totalorder %s284, %s287
      %p296 = scmp.eq.s32.totalorder %s31, 1
      %p297 = por %p295, %p296
      %p298 = scmp.ne.s32.totalorder %s287, %s288
      %p299 = scmp.eq.s32.totalorder %s31, 0
      %p300 = por %p298, %p299
      %p301 = scmp.ne.s32.totalorder %s287, %s288
      %p302 = scmp.eq.s32.totalorder %s32, 1
      %p303 = por %p301, %p302
      %p305 = scmp.ne.s32.totalorder %s288, %s304
      %p306 = scmp.eq.s32.totalorder %s32, 0
      %p307 = por %p305, %p306
      %s308 = ssub.s32 %s33, %s45
      %p309 = scmp.eq.s32.totalorder %s308, 0
      %s311 = sadd.s32 %s310, 1
      %s312 = scalar_select %p309, %s310, %s311
      %p315 = pneg %p309
      %p316 = scmp.eq.s32.totalorder %s26, 1
      %p317 = por %p315, %p316
      %p318 = scmp.ne.s32.totalorder %s310, %s313
      %p319 = scmp.eq.s32.totalorder %s26, 0
      %p320 = por %p318, %p319
      %p321 = scmp.ne.s32.totalorder %s310, %s313
      %p322 = scmp.eq.s32.totalorder %s31, 1
      %p323 = por %p321, %p322
      %p324 = scmp.ne.s32.totalorder %s313, %s314
      %p325 = scmp.eq.s32.totalorder %s31, 0
      %p326 = por %p324, %p325
      %p327 = scmp.ne.s32.totalorder %s313, %s314
      %p328 = scmp.eq.s32.totalorder %s32, 1
      %p329 = por %p327, %p328
      %p331 = scmp.ne.s32.totalorder %s314, %s330
      %p332 = scmp.eq.s32.totalorder %s32, 0
      %p333 = por %p331, %p332
      %s334 = ssub.s32 %s33, %s45
      %s335 = ssub.s32 %s34, %s41
      %s336 = sor.u32 %s334, %s335
      %p337 = scmp.eq.s32.totalorder %s336, 0
      %s339 = sadd.s32 %s338, 1
      %s340 = scalar_select %p337, %s338, %s339
      %p343 = pneg %p337
      %p344 = scmp.eq.s32.totalorder %s26, 1
      %p345 = por %p343, %p344
      %p346 = scmp.ne.s32.totalorder %s338, %s341
      %p347 = scmp.eq.s32.totalorder %s26, 0
      %p348 = por %p346, %p347
      %p349 = scmp.ne.s32.totalorder %s338, %s341
      %p350 = scmp.eq.s32.totalorder %s31, 1
      %p351 = por %p349, %p350
      %p352 = scmp.ne.s32.totalorder %s341, %s342
      %p353 = scmp.eq.s32.totalorder %s31, 0
      %p354 = por %p352, %p353
      %p355 = scmp.ne.s32.totalorder %s341, %s342
      %p356 = scmp.eq.s32.totalorder %s32, 1
      %p357 = por %p355, %p356
      %p359 = scmp.ne.s32.totalorder %s342, %s358
      %p360 = scmp.eq.s32.totalorder %s32, 0
      %p361 = por %p359, %p360
      %p362 = scmp.le.s32.totalorder 1, %s26
      %p363 = scmp.lt.s32.totalorder %s26, 3
      %p364 = pnand %p362, %p363
      %p365 = pneg %p364
      // Predicated region
      $region9: #{tpu_custom_call.1} parent=5 // pred_check
        _
      $region10: #{tpu_custom_call.1} parent=5 // pred_check_branch
        %367 = sbr.rel (%p364) target = $region12
      $region11: #{tpu_custom_call.1} parent=5 // pred_region
        %s368 = ssub.s32 %s26, 1
      $region12: #{tpu_custom_call.1} parent=5 // pred_fallthru
        _
      %p369 = scmp.lt.s32.totalorder %s26, 2
      // Predicated region
      $region13: #{tpu_custom_call.1} parent=5 // pred_check
        %p370 = pneg %p369
      $region14: #{tpu_custom_call.1} parent=5 // pred_check_branch
        %372 = sbr.rel (%p370) target = $region16
      $region15: #{tpu_custom_call.1} parent=5 // pred_region
        // Predicated region
        $region17: #{tpu_custom_call.1} parent=15 // pred_check
          %p373 = pneg %p60
        $region18: #{tpu_custom_call.1} parent=15 // pred_check_branch
          %375 = sbr.rel (%p373) target = $region20
        $region19: #{tpu_custom_call.1} parent=15 // pred_region
          %s376 = smul.u32 2, %s34
          %p377 = scmp.lt.s32.totalorder %s33, 1
          %s378 = scalar_select %p377, %s33, 1
          %p379 = scmp.lt.s32.totalorder %s376, 1
          %s380 = scalar_select %p379, %s376, 1
          %s381 = smul.addr %s380, 2
          %s382 = smul.addr %s378, 4
          %s383 = sadd.s32 %s381, %s382
          %s384 = smul.addr %s383, 4
          %s385 = scalar_lea.vmem %s0, %s384
          %s386 = smul.u32 2, %s34
        $region20: #{tpu_custom_call.1} parent=15 // pred_fallthru
          _
        // Predicated region
        $region21: #{tpu_custom_call.1} parent=15 // pred_check
          %p387 = pneg %p86
        $region22: #{tpu_custom_call.1} parent=15 // pred_check_branch
          %389 = sbr.rel (%p387) target = $region24
        $region23: #{tpu_custom_call.1} parent=15 // pred_region
          %p390 = scmp.lt.s32.totalorder %s33, 1
          %s391 = scalar_select %p390, %s33, 1
          %s392 = smul.addr %s391, 36
          %s393 = smul.addr %s392, 4
          %s394 = scalar_lea.vmem %s1, %s393
        $region24: #{tpu_custom_call.1} parent=15 // pred_fallthru
          _
        // Predicated region
        $region25: #{tpu_custom_call.1} parent=15 // pred_check
          %p395 = pneg %p112
        $region26: #{tpu_custom_call.1} parent=15 // pred_check_branch
          %397 = sbr.rel (%p395) target = $region28
        $region27: #{tpu_custom_call.1} parent=15 // pred_region
          %p398 = scmp.lt.s32.totalorder %s33, 1
          %s399 = scalar_select %p398, %s33, 1
          %s400 = smul.addr %s399, 2
          %s401 = scalar_lea.vmem %s2, %s400
        $region28: #{tpu_custom_call.1} parent=15 // pred_fallthru
          _
        // Predicated region
        $region29: #{tpu_custom_call.1} parent=15 // pred_check
          %p402 = pneg %p138
        $region30: #{tpu_custom_call.1} parent=15 // pred_check_branch
          %404 = sbr.rel (%p402) target = $region32
        $region31: #{tpu_custom_call.1} parent=15 // pred_region
          %s405 = sand.u32 %s128, 1
          %s406 = scalar_lea.sflag [#allocation3], %s405
          %s407 = sand.u32 %s128, 1
          %s408 = smul.addr %s407, 288
          %s409 = scalar_lea.vmem [#allocation2], %s408
          %s411 = ssub.s32 4608, 4608
          %412 = vsyncadd %s406, %s411
          %s413 = smul.addr %s33, 72
          %s414 = smul.addr %s413, 64
          %s415 = scalar_lea.hbm %s3, %s414
          %s416 = sshll.u32 %s409, 4
          %s417 = int_to_ptr.vmem [resolvable:$true] %s416
          %422 = dma.hbm_to_vmem [thread:$0]  %s415, 4608, %s417, %s406, 64, 64, 4
        $region32: #{tpu_custom_call.1} parent=15 // pred_fallthru
          _
        // Predicated region
        $region33: #{tpu_custom_call.1} parent=15 // pred_check
          %p423 = pneg %p164
        $region34: #{tpu_custom_call.1} parent=15 // pred_check_branch
          %425 = sbr.rel (%p423) target = $region36
        $region35: #{tpu_custom_call.1} parent=15 // pred_region
          %p426 = scmp.lt.s32.totalorder %s33, 1
          %s427 = scalar_select %p426, %s33, 1
          %s428 = scalar_lea.vmem %s4, %s427
        $region36: #{tpu_custom_call.1} parent=15 // pred_fallthru
          _
        // Predicated region
        $region37: #{tpu_custom_call.1} parent=15 // pred_check
          %p429 = pneg %p190
        $region38: #{tpu_custom_call.1} parent=15 // pred_check_branch
          %431 = sbr.rel (%p429) target = $region40
        $region39: #{tpu_custom_call.1} parent=15 // pred_region
          %s432 = sand.u32 %s180, 1
          %s433 = scalar_lea.sflag [#allocation6], %s432
          %s434 = sand.u32 %s180, 1
          %s435 = smul.addr %s434, 512
          %s436 = scalar_lea.vmem [#allocation5], %s435
          %s438 = ssub.s32 8192, 8192
          %439 = vsyncadd %s433, %s438
          %s440 = smul.addr %s33, 128
          %s441 = smul.addr %s440, 64
          %s442 = scalar_lea.hbm %s5, %s441
          %s443 = sshll.u32 %s436, 4
          %s444 = int_to_ptr.vmem [resolvable:$true] %s443
          %449 = dma.hbm_to_vmem [thread:$0]  %s442, 8192, %s444, %s433, 128, 128, 8
        $region40: #{tpu_custom_call.1} parent=15 // pred_fallthru
          _
        // Predicated region
        $region41: #{tpu_custom_call.1} parent=15 // pred_check
          %p450 = pneg %p216
        $region42: #{tpu_custom_call.1} parent=15 // pred_check_branch
          %452 = sbr.rel (%p450) target = $region44
        $region43: #{tpu_custom_call.1} parent=15 // pred_region
          %p453 = scmp.lt.s32.totalorder %s33, 1
          %s454 = scalar_select %p453, %s33, 1
          %s455 = smul.addr %s454, 2
          %s456 = scalar_lea.vmem %s6, %s455
        $region44: #{tpu_custom_call.1} parent=15 // pred_fallthru
          _
        // Predicated region
        $region45: #{tpu_custom_call.1} parent=15 // pred_check
          %p457 = pneg %p242
        $region46: #{tpu_custom_call.1} parent=15 // pred_check_branch
          %459 = sbr.rel (%p457) target = $region48
        $region47: #{tpu_custom_call.1} parent=15 // pred_region
          %p460 = scmp.lt.s32.totalorder %s33, 1
          %s461 = scalar_select %p460, %s33, 1
          %s462 = smul.addr %s461, 32
          %s463 = smul.addr %s462, 4
          %s464 = scalar_lea.vmem %s7, %s463
        $region48: #{tpu_custom_call.1} parent=15 // pred_fallthru
          _
        // Predicated region
        $region49: #{tpu_custom_call.1} parent=15 // pred_check
          %p465 = pneg %p268
        $region50: #{tpu_custom_call.1} parent=15 // pred_check_branch
          %467 = sbr.rel (%p465) target = $region52
        $region51: #{tpu_custom_call.1} parent=15 // pred_region
          %p468 = scmp.lt.s32.totalorder %s33, 1
          %s469 = scalar_select %p468, %s33, 1
          %s470 = scalar_lea.vmem %s8, %s469
        $region52: #{tpu_custom_call.1} parent=15 // pred_fallthru
          _
        // Predicated region
        $region53: #{tpu_custom_call.1} parent=15 // pred_check
          %p471 = pneg %p294
        $region54: #{tpu_custom_call.1} parent=15 // pred_check_branch
          %473 = sbr.rel (%p471) target = $region56
        $region55: #{tpu_custom_call.1} parent=15 // pred_region
          %p474 = scmp.lt.s32.totalorder %s33, 1
          %s475 = scalar_select %p474, %s33, 1
          %s476 = smul.addr %s475, 16
          %s477 = smul.addr %s476, 4
          %s478 = scalar_lea.vmem %s9, %s477
        $region56: #{tpu_custom_call.1} parent=15 // pred_fallthru
          _
        // Predicated region
        $region57: #{tpu_custom_call.1} parent=15 // pred_check
          %p479 = pneg %p320
        $region58: #{tpu_custom_call.1} parent=15 // pred_check_branch
          %481 = sbr.rel (%p479) target = $region60
        $region59: #{tpu_custom_call.1} parent=15 // pred_region
          %p482 = scmp.lt.s32.totalorder %s33, 1
          %s483 = scalar_select %p482, %s33, 1
          %s484 = scalar_lea.vmem %s10, %s483
        $region60: #{tpu_custom_call.1} parent=15 // pred_fallthru
          _
      $region16: #{tpu_custom_call.1} parent=5 // pred_fallthru
        _
      %p485 = scmp.le.s32.totalorder 1, %s26
      %p486 = scmp.lt.s32.totalorder %s26, 3
      %p487 = pnand %p485, %p486
      %p488 = pneg %p487
      // Predicated region
      $region61: #{tpu_custom_call.1} parent=5 // pred_check
        _
      $region62: #{tpu_custom_call.1} parent=5 // pred_check_branch
        %490 = sbr.rel (%p487) target = $region64
      $region63: #{tpu_custom_call.1} parent=5 // pred_region
        %s491 = ssub.s32 %s26, 1
        %s492 = sand.u32 %s131, 1
        %s493 = scalar_lea.sflag [#allocation3], %s492
        %s494 = sand.u32 %s131, 1
        %s495 = smul.addr %s494, 288
        %s496 = scalar_lea.vmem [#allocation2], %s495
        // Predicated region
        $region65: #{tpu_custom_call.1} parent=63 // pred_check
          %p497 = pneg %p144
        $region66: #{tpu_custom_call.1} parent=63 // pred_check_branch
          %499 = sbr.rel (%p497) target = $region68
        $region67: #{tpu_custom_call.1} parent=63 // pred_region
          %500 = dma.done %s493, 4608
        $region68: #{tpu_custom_call.1} parent=63 // pred_fallthru
          _
        %s501 = sand.u32 %s183, 1
        %s502 = scalar_lea.sflag [#allocation6], %s501
        %s503 = sand.u32 %s183, 1
        %s504 = smul.addr %s503, 512
        %s505 = scalar_lea.vmem [#allocation5], %s504
        // Predicated region
        $region69: #{tpu_custom_call.1} parent=63 // pred_check
          %p506 = pneg %p196
        $region70: #{tpu_custom_call.1} parent=63 // pred_check_branch
          %508 = sbr.rel (%p506) target = $region72
        $region71: #{tpu_custom_call.1} parent=63 // pred_region
          %509 = dma.done %s502, 8192
        $region72: #{tpu_custom_call.1} parent=63 // pred_fallthru
          _
        %s510 = smul.u32 2, %s36
        %p511 = scmp.lt.s32.totalorder %s35, 1
        %s512 = scalar_select %p511, %s35, 1
        %p513 = scmp.lt.s32.totalorder %s510, 1
        %s514 = scalar_select %p513, %s510, 1
        %s515 = smul.addr %s514, 2
        %s516 = smul.addr %s512, 4
        %s517 = sadd.s32 %s515, %s516
        %s518 = smul.addr %s517, 4
        %s519 = scalar_lea.vmem %s0, %s518
        %p520 = pneg %p66
        %p521 = pneg %p63
        %p522 = scmp.lt.s32.totalorder %s35, 1
        %s523 = scalar_select %p522, %s35, 1
        %s524 = smul.addr %s523, 36
        %s525 = smul.addr %s524, 4
        %s526 = scalar_lea.vmem %s1, %s525
        %p527 = pneg %p92
        %p528 = pneg %p89
        %p529 = scmp.lt.s32.totalorder %s35, 1
        %s530 = scalar_select %p529, %s35, 1
        %s531 = smul.addr %s530, 2
        %s532 = scalar_lea.vmem %s2, %s531
        %p533 = pneg %p118
        %p534 = pneg %p115
        %s535 = sand.u32 %s131, 1
        %s536 = scalar_lea.sflag [#allocation3], %s535
        %s537 = sand.u32 %s131, 1
        %s538 = smul.addr %s537, 288
        %s539 = scalar_lea.vmem [#allocation2], %s538
        %p540 = pneg %p144
        %p541 = pneg %p141
        %p542 = scmp.lt.s32.totalorder %s35, 1
        %s543 = scalar_select %p542, %s35, 1
        %s544 = scalar_lea.vmem %s4, %s543
        %p545 = pneg %p170
        %p546 = pneg %p167
        %s547 = sand.u32 %s183, 1
        %s548 = scalar_lea.sflag [#allocation6], %s547
        %s549 = sand.u32 %s183, 1
        %s550 = smul.addr %s549, 512
        %s551 = scalar_lea.vmem [#allocation5], %s550
        %p552 = pneg %p196
        %p553 = pneg %p193
        %p554 = scmp.lt.s32.totalorder %s35, 1
        %s555 = scalar_select %p554, %s35, 1
        %s556 = smul.addr %s555, 2
        %s557 = scalar_lea.vmem %s6, %s556
        %p558 = pneg %p222
        %p559 = pneg %p219
        %p560 = scmp.lt.s32.totalorder %s35, 1
        %s561 = scalar_select %p560, %s35, 1
        %s562 = smul.addr %s561, 32
        %s563 = smul.addr %s562, 4
        %s564 = scalar_lea.vmem %s7, %s563
        %p565 = pneg %p248
        %p566 = pneg %p245
        %p567 = scmp.lt.s32.totalorder %s35, 1
        %s568 = scalar_select %p567, %s35, 1
        %s569 = scalar_lea.vmem %s8, %s568
        %p570 = pneg %p274
        %p571 = pneg %p271
        %p572 = scmp.lt.s32.totalorder %s35, 1
        %s573 = scalar_select %p572, %s35, 1
        %s574 = smul.addr %s573, 16
        %s575 = smul.addr %s574, 4
        %s576 = scalar_lea.vmem %s9, %s575
        %p577 = pneg %p300
        %p578 = pneg %p297
        %p579 = scmp.lt.s32.totalorder %s35, 1
        %s580 = scalar_select %p579, %s35, 1
        %s581 = scalar_lea.vmem %s10, %s580
        %p582 = pneg %p326
        %p583 = pneg %p323
        %p584 = pneg %p354
        %p585 = pneg %p351
        %s586 = sand.u32 %s341, 1
        %s587 = scalar_lea.sflag [#allocation4], %s586
        %s588 = sand.u32 %s341, 1
        %s589 = smul.addr %s588, 16
        %s590 = scalar_lea.vmem [#allocation7], %s589
        %s591 = smul.u32 2, %s36
        %p592 = scmp.lt.s32.totalorder %s35, 1
        %s593 = scalar_select %p592, %s35, 1
        %p594 = scmp.lt.s32.totalorder %s591, 1
        %s595 = scalar_select %p594, %s591, 1
        %s596 = smul.addr %s595, 2
        %s597 = smul.addr %s593, 4
        %s598 = sadd.s32 %s596, %s597
        %s599 = smul.addr %s598, 4
        %s600 = scalar_lea.vmem %s0, %s599
        %s601 = smul.u32 2, %s36
        %p602 = scmp.lt.s32.totalorder %s35, 1
        %s603 = scalar_select %p602, %s35, 1
        %s604 = smul.addr %s603, 36
        %s605 = smul.addr %s604, 4
        %s606 = scalar_lea.vmem %s1, %s605
        %p607 = scmp.lt.s32.totalorder %s35, 1
        %s608 = scalar_select %p607, %s35, 1
        %s609 = smul.addr %s608, 2
        %s610 = scalar_lea.vmem %s2, %s609
        %p611 = scmp.lt.s32.totalorder %s35, 1
        %s612 = scalar_select %p611, %s35, 1
        %s613 = scalar_lea.vmem %s4, %s612
        %p614 = scmp.lt.s32.totalorder %s35, 1
        %s615 = scalar_select %p614, %s35, 1
        %s616 = smul.addr %s615, 2
        %s617 = scalar_lea.vmem %s6, %s616
        %p618 = scmp.lt.s32.totalorder %s35, 1
        %s619 = scalar_select %p618, %s35, 1
        %s620 = smul.addr %s619, 32
        %s621 = smul.addr %s620, 4
        %s622 = scalar_lea.vmem %s7, %s621
        %p623 = scmp.lt.s32.totalorder %s35, 1
        %s624 = scalar_select %p623, %s35, 1
        %s625 = scalar_lea.vmem %s8, %s624
        %p626 = scmp.lt.s32.totalorder %s35, 1
        %s627 = scalar_select %p626, %s35, 1
        %s628 = smul.addr %s627, 16
        %s629 = smul.addr %s628, 4
        %s630 = scalar_lea.vmem %s9, %s629
        %p631 = scmp.lt.s32.totalorder %s35, 1
        %s632 = scalar_select %p631, %s35, 1
        %s633 = scalar_lea.vmem %s10, %s632
        %s634 = smul.u32 2, %s36
        %v636 = vld [vmem:[%s600] sm:$0xff]
        %v637 = vld [vmem:[%s600 + $0x8] sm:$0xff]
        %v638 = vld [vmem:[%s606] sm:$0xff]
        %v639 = vld [vmem:[%s606 + $0x8] sm:$0xff]
        %v640 = vld [vmem:[%s606 + $0x10] sm:$0xff]
        %v641 = vld [vmem:[%s606 + $0x18] sm:$0xff]
        %v642 = vld [vmem:[%s606 + $0x20] sm:$0xff]
        %v643 = vld [vmem:[%s606 + $0x28] sm:$0xff]
        %v644 = vld [vmem:[%s606 + $0x30] sm:$0xff]
        %v645 = vld [vmem:[%s606 + $0x38] sm:$0xff]
        %v646 = vld [vmem:[%s606 + $0x40] sm:$0xff]
        %v647 = vld [vmem:[%s606 + $0x48] sm:$0xff]
        %v648 = vld [vmem:[%s606 + $0x50] sm:$0xff]
        %v649 = vld [vmem:[%s606 + $0x58] sm:$0xff]
        %v650 = vld [vmem:[%s606 + $0x60] sm:$0xff]
        %v651 = vld [vmem:[%s606 + $0x68] sm:$0xff]
        %v652 = vld [vmem:[%s606 + $0x70] sm:$0xff]
        %v653 = vld [vmem:[%s606 + $0x78] sm:$0x11]
        %v654 = vld [vmem:[%s606 + $0x80] sm:$0x11]
        %v655 = vld [vmem:[%s606 + $0x88] sm:$0x11]
        %v656 = vld [vmem:[%s610] sm:$0x3]
        %v659 = vunpack.c.l.b16 %v636
        %v660 = vunpack.c.l.b16 %v637
        %v661 = vpack.c.b16 %v660, %v659
        %662 = vrot.lane.b32.xlu0 %v661, 114
        %v663 = vpop.permute.xlu0 %662
        %664 = vrot.lane.b32.xlu0 %v661, 100
        %v665 = vpop.permute.xlu0 %664
        %666 = vrot.lane.b32.xlu0 %v661, 86
        %v667 = vpop.permute.xlu0 %666
        %668 = vrot.lane.b32.xlu0 %v661, 72
        %v669 = vpop.permute.xlu0 %668
        %670 = vrot.lane.b32.xlu0 %v661, 58
        %v671 = vpop.permute.xlu0 %670
        %672 = vrot.lane.b32.xlu0 %v661, 44
        %v673 = vpop.permute.xlu0 %672
        %v674 = vunpack.c.h.b16 %v636
        %v675 = vunpack.c.h.b16 %v637
        %v676 = vpack.c.b16 %v675, %v674
        %677 = vrot.lane.b32.xlu0 %v661, 30
        %v678 = vpop.permute.xlu0 %677
        %679 = vrot.lane.b32.xlu0 %v676, 30
        %v680 = vpop.permute.xlu0 %679
        %vm681 = vcmask 244736
        %v682 = vsel %vm681, %v678, %v680
        %683 = vrot.lane.b32.xlu0 %v661, 16
        %v684 = vpop.permute.xlu0 %683
        %685 = vrot.lane.b32.xlu0 %v676, 16
        %v686 = vpop.permute.xlu0 %685
        %vm687 = vcmask 130048
        %v688 = vsel %vm687, %v684, %v686
        %689 = vrot.lane.b32.xlu0 %v661, 2
        %v690 = vpop.permute.xlu0 %689
        %691 = vrot.lane.b32.xlu0 %v676, 2
        %v692 = vpop.permute.xlu0 %691
        %vm693 = vcmask 15360
        %v694 = vsel %vm693, %v690, %v692
        %695 = vrot.lane.b32.xlu0 %v676, 116
        %v696 = vpop.permute.xlu0 %695
        %697 = vrot.lane.b32.xlu0 %v676, 102
        %v698 = vpop.permute.xlu0 %697
        %v717 = vunpack.c.l.b16 %v638
        %v718 = vunpack.c.h.b16 %v638
        %v719 = vunpack.c.l.b16 %v639
        %v720 = vunpack.c.h.b16 %v639
        %v721 = vunpack.c.l.b16 %v640
        %v722 = vunpack.c.h.b16 %v640
        %v723 = vunpack.c.l.b16 %v641
        %v724 = vunpack.c.h.b16 %v641
        %v725 = vunpack.c.l.b16 %v642
        %v726 = vunpack.c.h.b16 %v642
        %v727 = vunpack.c.l.b16 %v643
        %v728 = vunpack.c.h.b16 %v643
        %v729 = vunpack.c.l.b16 %v644
        %v730 = vunpack.c.h.b16 %v644
        %v731 = vunpack.c.l.b16 %v645
        %v732 = vunpack.c.h.b16 %v645
        %v733 = vunpack.c.l.b16 %v646
        %v734 = vunpack.c.h.b16 %v646
        %v735 = vunpack.c.l.b16 %v647
        %v736 = vunpack.c.h.b16 %v647
        %v737 = vunpack.c.l.b16 %v648
        %v738 = vunpack.c.h.b16 %v648
        %v739 = vunpack.c.l.b16 %v649
        %v740 = vunpack.c.h.b16 %v649
        %v741 = vunpack.c.l.b16 %v650
        %v742 = vunpack.c.h.b16 %v650
        %v743 = vunpack.c.l.b16 %v651
        %v744 = vunpack.c.h.b16 %v651
        %v745 = vunpack.c.l.b16 %v652
        %v746 = vunpack.c.h.b16 %v652
        %v747 = vunpack.c.l.b16 %v653
        %v748 = vunpack.c.h.b16 %v653
        %v749 = vunpack.c.l.b16 %v654
        %v750 = vunpack.c.h.b16 %v654
        %v751 = vunpack.c.l.b16 %v655
        %v752 = vunpack.c.h.b16 %v655
        %v753 = vpack.c.b16 %v723, %v717
        %v754 = vpack.c.b16 %v724, %v718
        %v755 = vpack.c.b16 %v725, %v719
        %v756 = vpack.c.b16 %v726, %v720
        %v757 = vpack.c.b16 %v727, %v721
        %v758 = vpack.c.b16 %v728, %v722
        %v759 = vpack.c.b16 %v735, %v729
        %v760 = vpack.c.b16 %v736, %v730
        %v761 = vpack.c.b16 %v737, %v731
        %v762 = vpack.c.b16 %v738, %v732
        %v763 = vpack.c.b16 %v739, %v733
        %v764 = vpack.c.b16 %v740, %v734
        %v765 = vpack.c.b16 %v747, %v741
        %v766 = vpack.c.b16 %v748, %v742
        %v767 = vpack.c.b16 %v749, %v743
        %v768 = vpack.c.b16 %v750, %v744
        %v769 = vpack.c.b16 %v751, %v745
        %v770 = vpack.c.b16 %v752, %v746
        %vm783 = vcmask 343040
        %v785 = vsel %vm783, %v661, 0
        %v788 = vsel %vm783, %v663, 0
        %v791 = vsel %vm783, %v665, 0
        %v794 = vsel %vm783, %v667, 0
        %v797 = vsel %vm783, %v669, 0
        %v800 = vsel %vm783, %v671, 0
        %v803 = vsel %vm783, %v673, 0
        %v806 = vsel %vm783, %v682, 0
        %v809 = vsel %vm783, %v688, 0
        %v812 = vsel %vm783, %v694, 0
        %v815 = vsel %vm783, %v696, 0
        %v818 = vsel %vm783, %v698, 0
        %vm820 = vcmask 1044480
        %v822 = vsel %vm820, %v765, 0
        %v825 = vsel %vm820, %v766, 0
        %v828 = vsel %vm820, %v767, 0
        %v831 = vsel %vm820, %v768, 0
        %v834 = vsel %vm820, %v769, 0
        %v837 = vsel %vm820, %v770, 0
        %839 = vmatprep.subr.bf16.mxu0 %v754
        %840 = vmatpush1.bf16.msra.mxu0 %v753
        %841 = vmatprep.subr.bf16.mxu0 %v760
        %842 = vmatpush1.bf16.msra.mxu0 %v759
        %843 = vmatprep.subr.bf16.mxu0 %v825
        %844 = vmatpush1.bf16.msra.mxu0 %v822
        %845 = vmatprep.subr.bf16.mxu0 0
        %846 = vmatpush1.bf16.msra.mxu0 0
        %847 = vmatprep.subr.bf16.mxu0 0
        %848 = vmatpush1.bf16.msra.mxu0 0
        %849 = vmatprep.subr.bf16.mxu0 0
        %850 = vmatpush1.bf16.msra.mxu0 0
        %851 = vmatprep.subr.bf16.mxu0 0
        %852 = vmatpush1.bf16.msra.mxu0 0
        %853 = vmatprep.subr.bf16.mxu0 0
        %854 = vmatpush1.bf16.msra.mxu0 0
        %855 = vmatprep.subr.bf16.mxu0 0
        %856 = vmatpush1.bf16.msra.mxu0 0
        %857 = vmatprep.subr.bf16.mxu0 0
        %858 = vmatpush1.bf16.msra.mxu0 0
        %859 = vmatprep.subr.bf16.mxu0 0
        %860 = vmatpush1.bf16.msra.mxu0 0
        %861 = vmatprep.subr.bf16.mxu0 0
        %862 = vmatpush1.bf16.msra.mxu0 0
        %863 = vmatprep.subr.bf16.mxu0 0
        %864 = vmatpush1.bf16.msra.mxu0 0
        %865 = vmatprep.subr.bf16.mxu0 0
        %866 = vmatpush1.bf16.msra.mxu0 0
        %867 = vmatprep.subr.bf16.mxu0 0
        %868 = vmatpush1.bf16.msra.mxu0 0
        %869 = vmatprep.subr.bf16.mxu0 0
        %870 = vmatpush1.bf16.msra.mxu0 0
        %871 = vmatprep.mubr.bf16.mxu0 0
        %872 = vmatmul.mubr.bf16.gmra.mrb[0].mxu0 %v785
        %v873 = vpop.f32.mrb[0].mxu0
        %v874 = vadd.f32 0.0, %v873
        %v875 = vpop.f32.mrb[0].mxu0
        %v876 = vadd.f32 0.0, %v875
        %v877 = vpop.f32.mrb[0].mxu0
        %v878 = vadd.f32 0.0, %v877
        %v879 = vpop.f32.mrb[0].mxu0
        %v880 = vadd.f32 0.0, %v879
        %881 = vmatprep.mubr.bf16.mxu0 0
        %882 = vmatmul.mubr.bf16.gmra.mrb[0].mxu0 %v788
        %v883 = vpop.f32.mrb[0].mxu0
        %v884 = vadd.f32 0.0, %v883
        %v885 = vpop.f32.mrb[0].mxu0
        %v886 = vadd.f32 0.0, %v885
        %v887 = vpop.f32.mrb[0].mxu0
        %v888 = vadd.f32 0.0, %v887
        %v889 = vpop.f32.mrb[0].mxu0
        %v890 = vadd.f32 0.0, %v889
        %891 = vmatprep.mubr.bf16.mxu0 0
        %892 = vmatmul.mubr.bf16.gmra.mrb[0].mxu0 %v791
        %v893 = vpop.f32.mrb[0].mxu0
        %v894 = vadd.f32 0.0, %v893
        %v895 = vpop.f32.mrb[0].mxu0
        %v896 = vadd.f32 0.0, %v895
        %v897 = vpop.f32.mrb[0].mxu0
        %v898 = vadd.f32 0.0, %v897
        %v899 = vpop.f32.mrb[0].mxu0
        %v900 = vadd.f32 0.0, %v899
        %901 = vmatprep.mubr.bf16.mxu0 0
        %902 = vmatmul.mubr.bf16.gmra.mrb[0].mxu0 %v794
        %v903 = vpop.f32.mrb[0].mxu0
        %v904 = vadd.f32 0.0, %v903
        %v905 = vpop.f32.mrb[0].mxu0
        %v906 = vadd.f32 0.0, %v905
        %v907 = vpop.f32.mrb[0].mxu0
        %v908 = vadd.f32 0.0, %v907
        %v909 = vpop.f32.mrb[0].mxu0
        %v910 = vadd.f32 0.0, %v909
        %911 = vmatprep.mubr.bf16.mxu0 0
        %912 = vmatmul.mubr.bf16.gmra.mrb[0].mxu0 %v797
        %v913 = vpop.f32.mrb[0].mxu0
        %v914 = vadd.f32 0.0, %v913
        %v915 = vpop.f32.mrb[0].mxu0
        %v916 = vadd.f32 0.0, %v915
        %v917 = vpop.f32.mrb[0].mxu0
        %v918 = vadd.f32 0.0, %v917
        %v919 = vpop.f32.mrb[0].mxu0
        %v920 = vadd.f32 0.0, %v919
        %921 = vmatprep.mubr.bf16.mxu0 0
        %922 = vmatmul.mubr.bf16.gmra.mrb[0].mxu0 %v800
        %v923 = vpop.f32.mrb[0].mxu0
        %v924 = vadd.f32 0.0, %v923
        %v925 = vpop.f32.mrb[0].mxu0
        %v926 = vadd.f32 0.0, %v925
        %v927 = vpop.f32.mrb[0].mxu0
        %v928 = vadd.f32 0.0, %v927
        %v929 = vpop.f32.mrb[0].mxu0
        %v930 = vadd.f32 0.0, %v929
        %931 = vmatprep.mubr.bf16.mxu0 0
        %932 = vmatmul.mubr.bf16.gmra.mrb[0].mxu0 %v803
        %v933 = vpop.f32.mrb[0].mxu0
        %v934 = vadd.f32 0.0, %v933
        %v935 = vpop.f32.mrb[0].mxu0
        %v936 = vadd.f32 0.0, %v935
        %v937 = vpop.f32.mrb[0].mxu0
        %v938 = vadd.f32 0.0, %v937
        %v939 = vpop.f32.mrb[0].mxu0
        %v940 = vadd.f32 0.0, %v939
        %941 = vmatprep.mubr.bf16.mxu0 0
        %942 = vmatmul.mubr.bf16.gmra.mrb[0].mxu0 %v806
        %v943 = vpop.f32.mrb[0].mxu0
        %v944 = vadd.f32 0.0, %v943
        %v945 = vpop.f32.mrb[0].mxu0
        %v946 = vadd.f32 0.0, %v945
        %v947 = vpop.f32.mrb[0].mxu0
        %v948 = vadd.f32 0.0, %v947
        %v949 = vpop.f32.mrb[0].mxu0
        %v950 = vadd.f32 0.0, %v949
        %951 = vmatprep.mubr.bf16.mxu0 0
        %952 = vmatmul.mubr.bf16.gmra.mrb[0].mxu0 %v809
        %v953 = vpop.f32.mrb[0].mxu0
        %v954 = vadd.f32 0.0, %v953
        %v955 = vpop.f32.mrb[0].mxu0
        %v956 = vadd.f32 0.0, %v955
        %v957 = vpop.f32.mrb[0].mxu0
        %v958 = vadd.f32 0.0, %v957
        %v959 = vpop.f32.mrb[0].mxu0
        %v960 = vadd.f32 0.0, %v959
        %961 = vmatprep.mubr.bf16.mxu0 0
        %962 = vmatmul.mubr.bf16.gmra.mrb[0].mxu0 %v812
        %v963 = vpop.f32.mrb[0].mxu0
        %v964 = vadd.f32 0.0, %v963
        %v965 = vpop.f32.mrb[0].mxu0
        %v966 = vadd.f32 0.0, %v965
        %v967 = vpop.f32.mrb[0].mxu0
        %v968 = vadd.f32 0.0, %v967
        %v969 = vpop.f32.mrb[0].mxu0
        %v970 = vadd.f32 0.0, %v969
        %971 = vmatprep.mubr.bf16.mxu0 0
        %972 = vmatmul.mubr.bf16.gmra.mrb[0].mxu0 %v815
        %v973 = vpop.f32.mrb[0].mxu0
        %v974 = vadd.f32 0.0, %v973
        %v975 = vpop.f32.mrb[0].mxu0
        %v976 = vadd.f32 0.0, %v975
        %v977 = vpop.f32.mrb[0].mxu0
        %v978 = vadd.f32 0.0, %v977
        %v979 = vpop.f32.mrb[0].mxu0
        %v980 = vadd.f32 0.0, %v979
        %981 = vmatprep.mubr.bf16.mxu0 0
        %982 = vmatmul.mubr.bf16.gmra.mrb[0].mxu0 %v818
        %v983 = vpop.f32.mrb[0].mxu0
        %v984 = vadd.f32 0.0, %v983
        %v985 = vpop.f32.mrb[0].mxu0
        %v986 = vadd.f32 0.0, %v985
        %v987 = vpop.f32.mrb[0].mxu0
        %v988 = vadd.f32 0.0, %v987
        %v989 = vpop.f32.mrb[0].mxu0
        %v990 = vadd.f32 0.0, %v989
        %991 = vdwg.mxu0
        %992 = vmatprep.subr.bf16.mxu0 %v756
        %993 = vmatpush1.bf16.msra.mxu0 %v755
        %994 = vmatprep.subr.bf16.mxu0 %v762
        %995 = vmatpush1.bf16.msra.mxu0 %v761
        %996 = vmatprep.subr.bf16.mxu0 %v831
        %997 = vmatpush1.bf16.msra.mxu0 %v828
        %998 = vmatprep.subr.bf16.mxu0 0
        %999 = vmatpush1.bf16.msra.mxu0 0
        %1000 = vmatprep.subr.bf16.mxu0 0
        %1001 = vmatpush1.bf16.msra.mxu0 0
        %1002 = vmatprep.subr.bf16.mxu0 0
        %1003 = vmatpush1.bf16.msra.mxu0 0
        %1004 = vmatprep.subr.bf16.mxu0 0
        %1005 = vmatpush1.bf16.msra.mxu0 0
        %1006 = vmatprep.subr.bf16.mxu0 0
        %1007 = vmatpush1.bf16.msra.mxu0 0
        %1008 = vmatprep.subr.bf16.mxu0 0
        %1009 = vmatpush1.bf16.msra.mxu0 0
        %1010 = vmatprep.subr.bf16.mxu0 0
        %1011 = vmatpush1.bf16.msra.mxu0 0
        %1012 = vmatprep.subr.bf16.mxu0 0
        %1013 = vmatpush1.bf16.msra.mxu0 0
        %1014 = vmatprep.subr.bf16.mxu0 0
        %1015 = vmatpush1.bf16.msra.mxu0 0
        %1016 = vmatprep.subr.bf16.mxu0 0
        %1017 = vmatpush1.bf16.msra.mxu0 0
        %1018 = vmatprep.subr.bf16.mxu0 0
        %1019 = vmatpush1.bf16.msra.mxu0 0
        %1020 = vmatprep.subr.bf16.mxu0 0
        %1021 = vmatpush1.bf16.msra.mxu0 0
        %1022 = vmatprep.subr.bf16.mxu0 0
        %1023 = vmatpush1.bf16.msra.mxu0 0
        %1024 = vmatprep.mubr.bf16.mxu0 0
        %1025 = vmatmul.mubr.bf16.gmra.mrb[0].mxu0 %v785
        %v1026 = vpop.f32.mrb[0].mxu0
        %v1027 = vadd.f32 0.0, %v1026
        %v1028 = vpop.f32.mrb[0].mxu0
        %v1029 = vadd.f32 0.0, %v1028
        %v1030 = vpop.f32.mrb[0].mxu0
        %v1031 = vadd.f32 0.0, %v1030
        %v1032 = vpop.f32.mrb[0].mxu0
        %v1033 = vadd.f32 0.0, %v1032
        %1034 = vmatprep.mubr.bf16.mxu0 0
        %1035 = vmatmul.mubr.bf16.gmra.mrb[0].mxu0 %v788
        %v1036 = vpop.f32.mrb[0].mxu0
        %v1037 = vadd.f32 0.0, %v1036
        %v1038 = vpop.f32.mrb[0].mxu0
        %v1039 = vadd.f32 0.0, %v1038
        %v1040 = vpop.f32.mrb[0].mxu0
        %v1041 = vadd.f32 0.0, %v1040
        %v1042 = vpop.f32.mrb[0].mxu0
        %v1043 = vadd.f32 0.0, %v1042
        %1044 = vmatprep.mubr.bf16.mxu0 0
        %1045 = vmatmul.mubr.bf16.gmra.mrb[0].mxu0 %v791
        %v1046 = vpop.f32.mrb[0].mxu0
        %v1047 = vadd.f32 0.0, %v1046
        %v1048 = vpop.f32.mrb[0].mxu0
        %v1049 = vadd.f32 0.0, %v1048
        %v1050 = vpop.f32.mrb[0].mxu0
        %v1051 = vadd.f32 0.0, %v1050
        %v1052 = vpop.f32.mrb[0].mxu0
        %v1053 = vadd.f32 0.0, %v1052
        %1054 = vmatprep.mubr.bf16.mxu0 0
        %1055 = vmatmul.mubr.bf16.gmra.mrb[0].mxu0 %v794
        %v1056 = vpop.f32.mrb[0].mxu0
        %v1057 = vadd.f32 0.0, %v1056
        %v1058 = vpop.f32.mrb[0].mxu0
        %v1059 = vadd.f32 0.0, %v1058
        %v1060 = vpop.f32.mrb[0].mxu0
        %v1061 = vadd.f32 0.0, %v1060
        %v1062 = vpop.f32.mrb[0].mxu0
        %v1063 = vadd.f32 0.0, %v1062
        %1064 = vmatprep.mubr.bf16.mxu0 0
        %1065 = vmatmul.mubr.bf16.gmra.mrb[0].mxu0 %v797
        %v1066 = vpop.f32.mrb[0].mxu0
        %v1067 = vadd.f32 0.0, %v1066
        %v1068 = vpop.f32.mrb[0].mxu0
        %v1069 = vadd.f32 0.0, %v1068
        %v1070 = vpop.f32.mrb[0].mxu0
        %v1071 = vadd.f32 0.0, %v1070
        %v1072 = vpop.f32.mrb[0].mxu0
        %v1073 = vadd.f32 0.0, %v1072
        %1074 = vmatprep.mubr.bf16.mxu0 0
        %1075 = vmatmul.mubr.bf16.gmra.mrb[0].mxu0 %v800
        %v1076 = vpop.f32.mrb[0].mxu0
        %v1077 = vadd.f32 0.0, %v1076
        %v1078 = vpop.f32.mrb[0].mxu0
        %v1079 = vadd.f32 0.0, %v1078
        %v1080 = vpop.f32.mrb[0].mxu0
        %v1081 = vadd.f32 0.0, %v1080
        %v1082 = vpop.f32.mrb[0].mxu0
        %v1083 = vadd.f32 0.0, %v1082
        %1084 = vmatprep.mubr.bf16.mxu0 0
        %1085 = vmatmul.mubr.bf16.gmra.mrb[0].mxu0 %v803
        %v1086 = vpop.f32.mrb[0].mxu0
        %v1087 = vadd.f32 0.0, %v1086
        %v1088 = vpop.f32.mrb[0].mxu0
        %v1089 = vadd.f32 0.0, %v1088
        %v1090 = vpop.f32.mrb[0].mxu0
        %v1091 = vadd.f32 0.0, %v1090
        %v1092 = vpop.f32.mrb[0].mxu0
        %v1093 = vadd.f32 0.0, %v1092
        %1094 = vmatprep.mubr.bf16.mxu0 0
        %1095 = vmatmul.mubr.bf16.gmra.mrb[0].mxu0 %v806
        %v1096 = vpop.f32.mrb[0].mxu0
        %v1097 = vadd.f32 0.0, %v1096
        %v1098 = vpop.f32.mrb[0].mxu0
        %v1099 = vadd.f32 0.0, %v1098
        %v1100 = vpop.f32.mrb[0].mxu0
        %v1101 = vadd.f32 0.0, %v1100
        %v1102 = vpop.f32.mrb[0].mxu0
        %v1103 = vadd.f32 0.0, %v1102
        %1104 = vmatprep.mubr.bf16.mxu0 0
        %1105 = vmatmul.mubr.bf16.gmra.mrb[0].mxu0 %v809
        %v1106 = vpop.f32.mrb[0].mxu0
        %v1107 = vadd.f32 0.0, %v1106
        %v1108 = vpop.f32.mrb[0].mxu0
        %v1109 = vadd.f32 0.0, %v1108
        %v1110 = vpop.f32.mrb[0].mxu0
        %v1111 = vadd.f32 0.0, %v1110
        %v1112 = vpop.f32.mrb[0].mxu0
        %v1113 = vadd.f32 0.0, %v1112
        %1114 = vmatprep.mubr.bf16.mxu0 0
        %1115 = vmatmul.mubr.bf16.gmra.mrb[0].mxu0 %v812
        %v1116 = vpop.f32.mrb[0].mxu0
        %v1117 = vadd.f32 0.0, %v1116
        %v1118 = vpop.f32.mrb[0].mxu0
        %v1119 = vadd.f32 0.0, %v1118
        %v1120 = vpop.f32.mrb[0].mxu0
        %v1121 = vadd.f32 0.0, %v1120
        %v1122 = vpop.f32.mrb[0].mxu0
        %v1123 = vadd.f32 0.0, %v1122
        %1124 = vmatprep.mubr.bf16.mxu0 0
        %1125 = vmatmul.mubr.bf16.gmra.mrb[0].mxu0 %v815
        %v1126 = vpop.f32.mrb[0].mxu0
        %v1127 = vadd.f32 0.0, %v1126
        %v1128 = vpop.f32.mrb[0].mxu0
        %v1129 = vadd.f32 0.0, %v1128
        %v1130 = vpop.f32.mrb[0].mxu0
        %v1131 = vadd.f32 0.0, %v1130
        %v1132 = vpop.f32.mrb[0].mxu0
        %v1133 = vadd.f32 0.0, %v1132
        %1134 = vmatprep.mubr.bf16.mxu0 0
        %1135 = vmatmul.mubr.bf16.gmra.mrb[0].mxu0 %v818
        %v1136 = vpop.f32.mrb[0].mxu0
        %v1137 = vadd.f32 0.0, %v1136
        %v1138 = vpop.f32.mrb[0].mxu0
        %v1139 = vadd.f32 0.0, %v1138
        %v1140 = vpop.f32.mrb[0].mxu0
        %v1141 = vadd.f32 0.0, %v1140
        %v1142 = vpop.f32.mrb[0].mxu0
        %v1143 = vadd.f32 0.0, %v1142
        %1144 = vdwg.mxu0
        %1145 = vmatprep.subr.bf16.mxu0 %v758
        %1146 = vmatpush1.bf16.msra.mxu0 %v757
        %1147 = vmatprep.subr.bf16.mxu0 %v764
        %1148 = vmatpush1.bf16.msra.mxu0 %v763
        %1149 = vmatprep.subr.bf16.mxu0 %v837
        %1150 = vmatpush1.bf16.msra.mxu0 %v834
        %1151 = vmatprep.subr.bf16.mxu0 0
        %1152 = vmatpush1.bf16.msra.mxu0 0
        %1153 = vmatprep.subr.bf16.mxu0 0
        %1154 = vmatpush1.bf16.msra.mxu0 0
        %1155 = vmatprep.subr.bf16.mxu0 0
        %1156 = vmatpush1.bf16.msra.mxu0 0
        %1157 = vmatprep.subr.bf16.mxu0 0
        %1158 = vmatpush1.bf16.msra.mxu0 0
        %1159 = vmatprep.subr.bf16.mxu0 0
        %1160 = vmatpush1.bf16.msra.mxu0 0
        %1161 = vmatprep.subr.bf16.mxu0 0
        %1162 = vmatpush1.bf16.msra.mxu0 0
        %1163 = vmatprep.subr.bf16.mxu0 0
        %1164 = vmatpush1.bf16.msra.mxu0 0
        %1165 = vmatprep.subr.bf16.mxu0 0
        %1166 = vmatpush1.bf16.msra.mxu0 0
        %1167 = vmatprep.subr.bf16.mxu0 0
        %1168 = vmatpush1.bf16.msra.mxu0 0
        %1169 = vmatprep.subr.bf16.mxu0 0
        %1170 = vmatpush1.bf16.msra.mxu0 0
        %1171 = vmatprep.subr.bf16.mxu0 0
        %1172 = vmatpush1.bf16.msra.mxu0 0
        %1173 = vmatprep.subr.bf16.mxu0 0
        %1174 = vmatpush1.bf16.msra.mxu0 0
        %1175 = vmatprep.subr.bf16.mxu0 0
        %1176 = vmatpush1.bf16.msra.mxu0 0
        %1177 = vmatprep.mubr.bf16.mxu0 0
        %1178 = vmatmul.mubr.bf16.gmra.mrb[0].mxu0 %v785
        %v1179 = vpop.f32.mrb[0].mxu0
        %v1180 = vadd.f32 0.0, %v1179
        %v1181 = vpop.f32.mrb[0].mxu0
        %v1182 = vadd.f32 0.0, %v1181
        %v1183 = vpop.f32.mrb[0].mxu0
        %v1184 = vadd.f32 0.0, %v1183
        %v1185 = vpop.f32.mrb[0].mxu0
        %v1186 = vadd.f32 0.0, %v1185
        %1187 = vmatprep.mubr.bf16.mxu0 0
        %1188 = vmatmul.mubr.bf16.gmra.mrb[0].mxu0 %v788
        %v1189 = vpop.f32.mrb[0].mxu0
        %v1190 = vadd.f32 0.0, %v1189
        %v1191 = vpop.f32.mrb[0].mxu0
        %v1192 = vadd.f32 0.0, %v1191
        %v1193 = vpop.f32.mrb[0].mxu0
        %v1194 = vadd.f32 0.0, %v1193
        %v1195 = vpop.f32.mrb[0].mxu0
        %v1196 = vadd.f32 0.0, %v1195
        %1197 = vmatprep.mubr.bf16.mxu0 0
        %1198 = vmatmul.mubr.bf16.gmra.mrb[0].mxu0 %v791
        %v1199 = vpop.f32.mrb[0].mxu0
        %v1200 = vadd.f32 0.0, %v1199
        %v1201 = vpop.f32.mrb[0].mxu0
        %v1202 = vadd.f32 0.0, %v1201
        %v1203 = vpop.f32.mrb[0].mxu0
        %v1204 = vadd.f32 0.0, %v1203
        %v1205 = vpop.f32.mrb[0].mxu0
        %v1206 = vadd.f32 0.0, %v1205
        %1207 = vmatprep.mubr.bf16.mxu0 0
        %1208 = vmatmul.mubr.bf16.gmra.mrb[0].mxu0 %v794
        %v1209 = vpop.f32.mrb[0].mxu0
        %v1210 = vadd.f32 0.0, %v1209
        %v1211 = vpop.f32.mrb[0].mxu0
        %v1212 = vadd.f32 0.0, %v1211
        %v1213 = vpop.f32.mrb[0].mxu0
        %v1214 = vadd.f32 0.0, %v1213
        %v1215 = vpop.f32.mrb[0].mxu0
        %v1216 = vadd.f32 0.0, %v1215
        %1217 = vmatprep.mubr.bf16.mxu0 0
        %1218 = vmatmul.mubr.bf16.gmra.mrb[0].mxu0 %v797
        %v1219 = vpop.f32.mrb[0].mxu0
        %v1220 = vadd.f32 0.0, %v1219
        %v1221 = vpop.f32.mrb[0].mxu0
        %v1222 = vadd.f32 0.0, %v1221
        %v1223 = vpop.f32.mrb[0].mxu0
        %v1224 = vadd.f32 0.0, %v1223
        %v1225 = vpop.f32.mrb[0].mxu0
        %v1226 = vadd.f32 0.0, %v1225
        %1227 = vmatprep.mubr.bf16.mxu0 0
        %1228 = vmatmul.mubr.bf16.gmra.mrb[0].mxu0 %v800
        %v1229 = vpop.f32.mrb[0].mxu0
        %v1230 = vadd.f32 0.0, %v1229
        %v1231 = vpop.f32.mrb[0].mxu0
        %v1232 = vadd.f32 0.0, %v1231
        %v1233 = vpop.f32.mrb[0].mxu0
        %v1234 = vadd.f32 0.0, %v1233
        %v1235 = vpop.f32.mrb[0].mxu0
        %v1236 = vadd.f32 0.0, %v1235
        %1237 = vmatprep.mubr.bf16.mxu0 0
        %1238 = vmatmul.mubr.bf16.gmra.mrb[0].mxu0 %v803
        %v1239 = vpop.f32.mrb[0].mxu0
        %v1240 = vadd.f32 0.0, %v1239
        %v1241 = vpop.f32.mrb[0].mxu0
        %v1242 = vadd.f32 0.0, %v1241
        %v1243 = vpop.f32.mrb[0].mxu0
        %v1244 = vadd.f32 0.0, %v1243
        %v1245 = vpop.f32.mrb[0].mxu0
        %v1246 = vadd.f32 0.0, %v1245
        %1247 = vmatprep.mubr.bf16.mxu0 0
        %1248 = vmatmul.mubr.bf16.gmra.mrb[0].mxu0 %v806
        %v1249 = vpop.f32.mrb[0].mxu0
        %v1250 = vadd.f32 0.0, %v1249
        %v1251 = vpop.f32.mrb[0].mxu0
        %v1252 = vadd.f32 0.0, %v1251
        %v1253 = vpop.f32.mrb[0].mxu0
        %v1254 = vadd.f32 0.0, %v1253
        %v1255 = vpop.f32.mrb[0].mxu0
        %v1256 = vadd.f32 0.0, %v1255
        %1257 = vmatprep.mubr.bf16.mxu0 0
        %1258 = vmatmul.mubr.bf16.gmra.mrb[0].mxu0 %v809
        %v1259 = vpop.f32.mrb[0].mxu0
        %v1260 = vadd.f32 0.0, %v1259
        %v1261 = vpop.f32.mrb[0].mxu0
        %v1262 = vadd.f32 0.0, %v1261
        %v1263 = vpop.f32.mrb[0].mxu0
        %v1264 = vadd.f32 0.0, %v1263
        %v1265 = vpop.f32.mrb[0].mxu0
        %v1266 = vadd.f32 0.0, %v1265
        %1267 = vmatprep.mubr.bf16.mxu0 0
        %1268 = vmatmul.mubr.bf16.gmra.mrb[0].mxu0 %v812
        %v1269 = vpop.f32.mrb[0].mxu0
        %v1270 = vadd.f32 0.0, %v1269
        %v1271 = vpop.f32.mrb[0].mxu0
        %v1272 = vadd.f32 0.0, %v1271
        %v1273 = vpop.f32.mrb[0].mxu0
        %v1274 = vadd.f32 0.0, %v1273
        %v1275 = vpop.f32.mrb[0].mxu0
        %v1276 = vadd.f32 0.0, %v1275
        %1277 = vmatprep.mubr.bf16.mxu0 0
        %1278 = vmatmul.mubr.bf16.gmra.mrb[0].mxu0 %v815
        %v1279 = vpop.f32.mrb[0].mxu0
        %v1280 = vadd.f32 0.0, %v1279
        %v1281 = vpop.f32.mrb[0].mxu0
        %v1282 = vadd.f32 0.0, %v1281
        %v1283 = vpop.f32.mrb[0].mxu0
        %v1284 = vadd.f32 0.0, %v1283
        %v1285 = vpop.f32.mrb[0].mxu0
        %v1286 = vadd.f32 0.0, %v1285
        %1287 = vmatprep.mubr.bf16.mxu0 0
        %1288 = vmatmul.mubr.bf16.gmra.mrb[0].mxu0 %v818
        %v1289 = vpop.f32.mrb[0].mxu0
        %v1290 = vadd.f32 0.0, %v1289
        %v1291 = vpop.f32.mrb[0].mxu0
        %v1292 = vadd.f32 0.0, %v1291
        %v1293 = vpop.f32.mrb[0].mxu0
        %v1294 = vadd.f32 0.0, %v1293
        %v1295 = vpop.f32.mrb[0].mxu0
        %v1296 = vadd.f32 0.0, %v1295
        %1297 = vdwg.mxu0
        %v1298 = vmax.f32 %v874, %v884
        %v1299 = vmax.f32 %v876, %v886
        %v1300 = vmax.f32 %v1027, %v1037
        %v1301 = vmax.f32 %v1029, %v1039
        %v1302 = vmax.f32 %v1180, %v1190
        %v1303 = vmax.f32 %v1182, %v1192
        %v1304 = vmax.f32 %v878, %v888
        %v1305 = vmax.f32 %v880, %v890
        %v1306 = vmax.f32 %v1031, %v1041
        %v1307 = vmax.f32 %v1033, %v1043
        %v1308 = vmax.f32 %v1184, %v1194
        %v1309 = vmax.f32 %v1186, %v1196
        %v1310 = vmax.f32 %v1298, %v894
        %v1311 = vmax.f32 %v1299, %v896
        %v1312 = vmax.f32 %v1300, %v1047
        %v1313 = vmax.f32 %v1301, %v1049
        %v1314 = vmax.f32 %v1302, %v1200
        %v1315 = vmax.f32 %v1303, %v1202
        %v1316 = vmax.f32 %v1304, %v898
        %v1317 = vmax.f32 %v1305, %v900
        %v1318 = vmax.f32 %v1306, %v1051
        %v1319 = vmax.f32 %v1307, %v1053
        %v1320 = vmax.f32 %v1308, %v1204
        %v1321 = vmax.f32 %v1309, %v1206
        %v1322 = vmax.f32 %v1310, %v1312
        %v1323 = vmax.f32 %v1311, %v1313
        %v1324 = vmax.f32 %v1316, %v1318
        %v1325 = vmax.f32 %v1317, %v1319
        %v1326 = vmax.f32 %v1322, %v1314
        %v1327 = vmax.f32 %v1323, %v1315
        %v1328 = vmax.f32 %v1324, %v1320
        %v1329 = vmax.f32 %v1325, %v1321
        %v1331 = vlaneseq
        %v1332 = vshrl.u32 %v1331, 7
        %v1333 = vsub.s32 0, %v1332
        %v1334 = vrot.slane %v656, %v1333
        %v1335 = vlaneseq
        %v1336 = vshrl.u32 %v1335, 7
        %v1337 = vsub.s32 1, %v1336
        %v1338 = vrot.slane %v656, %v1337
        %v1341 = vadd.f32 %v1326, %v1334
        %v1342 = vadd.f32 %v1327, %v1338
        %v1343 = vadd.f32 %v1328, %v1334
        %v1344 = vadd.f32 %v1329, %v1338
        %v1345 = vmax.f32 %v1341, 0.0
        %v1346 = vmax.f32 %v1342, 0.0
        %v1347 = vmax.f32 %v1343, 0.0
        %v1348 = vmax.f32 %v1344, 0.0
        %v1349 = vpack.c.bf16 %v1347, %v1345
        %v1350 = vpack.c.bf16 %v1348, %v1346
        %v1351 = vmax.f32 %v904, %v914
        %v1352 = vmax.f32 %v906, %v916
        %v1353 = vmax.f32 %v1057, %v1067
        %v1354 = vmax.f32 %v1059, %v1069
        %v1355 = vmax.f32 %v1210, %v1220
        %v1356 = vmax.f32 %v1212, %v1222
        %v1357 = vmax.f32 %v908, %v918
        %v1358 = vmax.f32 %v910, %v920
        %v1359 = vmax.f32 %v1061, %v1071
        %v1360 = vmax.f32 %v1063, %v1073
        %v1361 = vmax.f32 %v1214, %v1224
        %v1362 = vmax.f32 %v1216, %v1226
        %v1363 = vmax.f32 %v1351, %v924
        %v1364 = vmax.f32 %v1352, %v926
        %v1365 = vmax.f32 %v1353, %v1077
        %v1366 = vmax.f32 %v1354, %v1079
        %v1367 = vmax.f32 %v1355, %v1230
        %v1368 = vmax.f32 %v1356, %v1232
        %v1369 = vmax.f32 %v1357, %v928
        %v1370 = vmax.f32 %v1358, %v930
        %v1371 = vmax.f32 %v1359, %v1081
        %v1372 = vmax.f32 %v1360, %v1083
        %v1373 = vmax.f32 %v1361, %v1234
        %v1374 = vmax.f32 %v1362, %v1236
        %v1375 = vmax.f32 %v1363, %v1365
        %v1376 = vmax.f32 %v1364, %v1366
        %v1377 = vmax.f32 %v1369, %v1371
        %v1378 = vmax.f32 %v1370, %v1372
        %v1379 = vmax.f32 %v1375, %v1367
        %v1380 = vmax.f32 %v1376, %v1368
        %v1381 = vmax.f32 %v1377, %v1373
        %v1382 = vmax.f32 %v1378, %v1374
        %v1383 = vadd.f32 %v1379, %v1334
        %v1384 = vadd.f32 %v1380, %v1338
        %v1385 = vadd.f32 %v1381, %v1334
        %v1386 = vadd.f32 %v1382, %v1338
        %v1387 = vmax.f32 %v1383, 0.0
        %v1388 = vmax.f32 %v1384, 0.0
        %v1389 = vmax.f32 %v1385, 0.0
        %v1390 = vmax.f32 %v1386, 0.0
        %v1391 = vpack.c.bf16 %v1389, %v1387
        %v1392 = vpack.c.bf16 %v1390, %v1388
        %v1393 = vmax.f32 %v934, %v944
        %v1394 = vmax.f32 %v936, %v946
        %v1395 = vmax.f32 %v1087, %v1097
        %v1396 = vmax.f32 %v1089, %v1099
        %v1397 = vmax.f32 %v1240, %v1250
        %v1398 = vmax.f32 %v1242, %v1252
        %v1399 = vmax.f32 %v938, %v948
        %v1400 = vmax.f32 %v940, %v950
        %v1401 = vmax.f32 %v1091, %v1101
        %v1402 = vmax.f32 %v1093, %v1103
        %v1403 = vmax.f32 %v1244, %v1254
        %v1404 = vmax.f32 %v1246, %v1256
        %v1405 = vmax.f32 %v1393, %v954
        %v1406 = vmax.f32 %v1394, %v956
        %v1407 = vmax.f32 %v1395, %v1107
        %v1408 = vmax.f32 %v1396, %v1109
        %v1409 = vmax.f32 %v1397, %v1260
        %v1410 = vmax.f32 %v1398, %v1262
        %v1411 = vmax.f32 %v1399, %v958
        %v1412 = vmax.f32 %v1400, %v960
        %v1413 = vmax.f32 %v1401, %v1111
        %v1414 = vmax.f32 %v1402, %v1113
        %v1415 = vmax.f32 %v1403, %v1264
        %v1416 = vmax.f32 %v1404, %v1266
        %v1417 = vmax.f32 %v1405, %v1407
        %v1418 = vmax.f32 %v1406, %v1408
        %v1419 = vmax.f32 %v1411, %v1413
        %v1420 = vmax.f32 %v1412, %v1414
        %v1421 = vmax.f32 %v1417, %v1409
        %v1422 = vmax.f32 %v1418, %v1410
        %v1423 = vmax.f32 %v1419, %v1415
        %v1424 = vmax.f32 %v1420, %v1416
        %v1425 = vadd.f32 %v1421, %v1334
        %v1426 = vadd.f32 %v1422, %v1338
        %v1427 = vadd.f32 %v1423, %v1334
        %v1428 = vadd.f32 %v1424, %v1338
        %v1429 = vmax.f32 %v1425, 0.0
        %v1430 = vmax.f32 %v1426, 0.0
        %v1431 = vmax.f32 %v1427, 0.0
        %v1432 = vmax.f32 %v1428, 0.0
        %v1433 = vpack.c.bf16 %v1431, %v1429
        %v1434 = vpack.c.bf16 %v1432, %v1430
        %v1435 = vmax.f32 %v964, %v974
        %v1436 = vmax.f32 %v966, %v976
        %v1437 = vmax.f32 %v1117, %v1127
        %v1438 = vmax.f32 %v1119, %v1129
        %v1439 = vmax.f32 %v1270, %v1280
        %v1440 = vmax.f32 %v1272, %v1282
        %v1441 = vmax.f32 %v968, %v978
        %v1442 = vmax.f32 %v970, %v980
        %v1443 = vmax.f32 %v1121, %v1131
        %v1444 = vmax.f32 %v1123, %v1133
        %v1445 = vmax.f32 %v1274, %v1284
        %v1446 = vmax.f32 %v1276, %v1286
        %v1447 = vmax.f32 %v1435, %v984
        %v1448 = vmax.f32 %v1436, %v986
        %v1449 = vmax.f32 %v1437, %v1137
        %v1450 = vmax.f32 %v1438, %v1139
        %v1451 = vmax.f32 %v1439, %v1290
        %v1452 = vmax.f32 %v1440, %v1292
        %v1453 = vmax.f32 %v1441, %v988
        %v1454 = vmax.f32 %v1442, %v990
        %v1455 = vmax.f32 %v1443, %v1141
        %v1456 = vmax.f32 %v1444, %v1143
        %v1457 = vmax.f32 %v1445, %v1294
        %v1458 = vmax.f32 %v1446, %v1296
        %v1459 = vmax.f32 %v1447, %v1449
        %v1460 = vmax.f32 %v1448, %v1450
        %v1461 = vmax.f32 %v1453, %v1455
        %v1462 = vmax.f32 %v1454, %v1456
        %v1463 = vmax.f32 %v1459, %v1451
        %v1464 = vmax.f32 %v1460, %v1452
        %v1465 = vmax.f32 %v1461, %v1457
        %v1466 = vmax.f32 %v1462, %v1458
        %v1467 = vadd.f32 %v1463, %v1334
        %v1468 = vadd.f32 %v1464, %v1338
        %v1469 = vadd.f32 %v1465, %v1334
        %v1470 = vadd.f32 %v1466, %v1338
        %v1471 = vmax.f32 %v1467, 0.0
        %v1472 = vmax.f32 %v1468, 0.0
        %v1473 = vmax.f32 %v1469, 0.0
        %v1474 = vmax.f32 %v1470, 0.0
        %v1475 = vpack.c.bf16 %v1473, %v1471
        %v1476 = vpack.c.bf16 %v1474, %v1472
        %1479 = vrot.lane.b32.xlu0 %v1391, 64
        %v1480 = vpop.permute.xlu0 %1479
        %1481 = vrot.lane.b32.xlu0 %v1392, 64
        %v1482 = vpop.permute.xlu0 %1481
        %vm1483 = vcmask 523264
        %v1484 = vsel %vm1483, %v1480, %v1482
        %vm1486 = vcmask 523264
        %v1489 = vsel %vm1486, %v1350, %v1480
        %1493 = vrot.lane.b32.xlu0 %v1349, 64
        %v1494 = vpop.permute.xlu0 %1493
        %1495 = vrot.lane.b32.xlu0 %v1350, 64
        %v1496 = vpop.permute.xlu0 %1495
        %v1497 = vsel %vm1483, %v1494, %v1496
        %1501 = vrot.lane.b32.xlu0 %v1433, 64
        %v1502 = vpop.permute.xlu0 %1501
        %1503 = vrot.lane.b32.xlu0 %v1434, 64
        %v1504 = vpop.permute.xlu0 %1503
        %v1505 = vsel %vm1483, %v1502, %v1504
        %v1509 = vsel %vm1486, %v1496, %v1391
        %v1513 = vsel %vm1486, %v1392, %v1502
        %1517 = vrot.lane.b32.xlu0 %v1475, 64
        %v1518 = vpop.permute.xlu0 %1517
        %1519 = vrot.lane.b32.xlu0 %v1476, 64
        %v1520 = vpop.permute.xlu0 %1519
        %v1521 = vsel %vm1483, %v1518, %v1520
        %v1525 = vsel %vm1486, %v1482, %v1433
        %v1527 = vld [vmem:[%s496] sm:$0xf]
        %v1528 = vld [vmem:[%s496 + $0x4] sm:$0xf]
        %v1529 = vld [vmem:[%s496 + $0x8] sm:$0xf]
        %v1530 = vld [vmem:[%s496 + $0xc] sm:$0xf]
        %v1531 = vld [vmem:[%s496 + $0x10] sm:$0xf]
        %v1532 = vld [vmem:[%s496 + $0x14] sm:$0xf]
        %v1533 = vld [vmem:[%s496 + $0x18] sm:$0xf]
        %v1534 = vld [vmem:[%s496 + $0x1c] sm:$0xf]
        %v1535 = vld [vmem:[%s496 + $0x20] sm:$0xf]
        %v1536 = vld [vmem:[%s496 + $0x24] sm:$0xf]
        %v1537 = vld [vmem:[%s496 + $0x28] sm:$0xf]
        %v1538 = vld [vmem:[%s496 + $0x2c] sm:$0xf]
        %v1539 = vld [vmem:[%s496 + $0x30] sm:$0xf]
        %v1540 = vld [vmem:[%s496 + $0x34] sm:$0xf]
        %v1541 = vld [vmem:[%s496 + $0x38] sm:$0xf]
        %v1542 = vld [vmem:[%s496 + $0x3c] sm:$0xf]
        %v1543 = vld [vmem:[%s496 + $0x40] sm:$0xf]
        %v1544 = vld [vmem:[%s496 + $0x44] sm:$0xf]
        %v1545 = vld [vmem:[%s496 + $0x48] sm:$0xf]
        %v1546 = vld [vmem:[%s496 + $0x4c] sm:$0xf]
        %v1547 = vld [vmem:[%s496 + $0x50] sm:$0xf]
        %v1548 = vld [vmem:[%s496 + $0x54] sm:$0xf]
        %v1549 = vld [vmem:[%s496 + $0x58] sm:$0xf]
        %v1550 = vld [vmem:[%s496 + $0x5c] sm:$0xf]
        %v1551 = vld [vmem:[%s496 + $0x60] sm:$0xf]
        %v1552 = vld [vmem:[%s496 + $0x64] sm:$0xf]
        %v1553 = vld [vmem:[%s496 + $0x68] sm:$0xf]
        %v1554 = vld [vmem:[%s496 + $0x6c] sm:$0xf]
        %v1555 = vld [vmem:[%s496 + $0x70] sm:$0xf]
        %v1556 = vld [vmem:[%s496 + $0x74] sm:$0xf]
        %v1557 = vld [vmem:[%s496 + $0x78] sm:$0xf]
        %v1558 = vld [vmem:[%s496 + $0x7c] sm:$0xf]
        %v1559 = vld [vmem:[%s496 + $0x80] sm:$0xf]
        %v1560 = vld [vmem:[%s496 + $0x84] sm:$0xf]
        %v1561 = vld [vmem:[%s496 + $0x88] sm:$0xf]
        %v1562 = vld [vmem:[%s496 + $0x8c] sm:$0xf]
        %v1563 = vld [vmem:[%s496 + $0x90] sm:$0xf]
        %v1564 = vld [vmem:[%s496 + $0x94] sm:$0xf]
        %v1565 = vld [vmem:[%s496 + $0x98] sm:$0xf]
        %v1566 = vld [vmem:[%s496 + $0x9c] sm:$0xf]
        %v1567 = vld [vmem:[%s496 + $0xa0] sm:$0xf]
        %v1568 = vld [vmem:[%s496 + $0xa4] sm:$0xf]
        %v1569 = vld [vmem:[%s496 + $0xa8] sm:$0xf]
        %v1570 = vld [vmem:[%s496 + $0xac] sm:$0xf]
        %v1571 = vld [vmem:[%s496 + $0xb0] sm:$0xf]
        %v1572 = vld [vmem:[%s496 + $0xb4] sm:$0xf]
        %v1573 = vld [vmem:[%s496 + $0xb8] sm:$0xf]
        %v1574 = vld [vmem:[%s496 + $0xbc] sm:$0xf]
        %v1575 = vld [vmem:[%s496 + $0xc0] sm:$0xf]
        %v1576 = vld [vmem:[%s496 + $0xc4] sm:$0xf]
        %v1577 = vld [vmem:[%s496 + $0xc8] sm:$0xf]
        %v1578 = vld [vmem:[%s496 + $0xcc] sm:$0xf]
        %v1579 = vld [vmem:[%s496 + $0xd0] sm:$0xf]
        %v1580 = vld [vmem:[%s496 + $0xd4] sm:$0xf]
        %v1581 = vld [vmem:[%s496 + $0xd8] sm:$0xf]
        %v1582 = vld [vmem:[%s496 + $0xdc] sm:$0xf]
        %v1583 = vld [vmem:[%s496 + $0xe0] sm:$0xf]
        %v1584 = vld [vmem:[%s496 + $0xe4] sm:$0xf]
        %v1585 = vld [vmem:[%s496 + $0xe8] sm:$0xf]
        %v1586 = vld [vmem:[%s496 + $0xec] sm:$0xf]
        %v1587 = vld [vmem:[%s496 + $0xf0] sm:$0xf]
        %v1588 = vld [vmem:[%s496 + $0xf4] sm:$0xf]
        %v1589 = vld [vmem:[%s496 + $0xf8] sm:$0xf]
        %v1590 = vld [vmem:[%s496 + $0xfc] sm:$0xf]
        %v1591 = vld [vmem:[%s496 + $0x100] sm:$0xf]
        %v1592 = vld [vmem:[%s496 + $0x104] sm:$0xf]
        %v1593 = vld [vmem:[%s496 + $0x108] sm:$0xf]
        %v1594 = vld [vmem:[%s496 + $0x10c] sm:$0xf]
        %v1595 = vld [vmem:[%s496 + $0x110] sm:$0xf]
        %v1596 = vld [vmem:[%s496 + $0x114] sm:$0xf]
        %v1597 = vld [vmem:[%s496 + $0x118] sm:$0xf]
        %v1598 = vld [vmem:[%s496 + $0x11c] sm:$0xf]
        %v1599 = vld [vmem:[%s613] sm:$0x1]
        %v1601 = vlaneseq
        %v1602 = vshrl.u32 %v1601, 7
        %v1603 = vsub.s32 0, %v1602
        %v1604 = vrot.slane %v1599, %v1603
        %v1678 = vunpack.c.l.b16 %v1527
        %v1679 = vunpack.c.l.b16 %v1528
        %v1680 = vunpack.c.l.b16 %v1529
        %v1681 = vunpack.c.l.b16 %v1530
        %v1682 = vunpack.c.l.b16 %v1531
        %v1683 = vunpack.c.l.b16 %v1532
        %v1684 = vunpack.c.l.b16 %v1533
        %v1685 = vunpack.c.l.b16 %v1534
        %v1686 = vunpack.c.l.b16 %v1535
        %v1687 = vunpack.c.l.b16 %v1536
        %v1688 = vunpack.c.l.b16 %v1537
        %v1689 = vunpack.c.l.b16 %v1538
        %v1690 = vunpack.c.l.b16 %v1539
        %v1691 = vunpack.c.l.b16 %v1540
        %v1692 = vunpack.c.l.b16 %v1541
        %v1693 = vunpack.c.l.b16 %v1542
        %v1694 = vunpack.c.l.b16 %v1543
        %v1695 = vunpack.c.l.b16 %v1544
        %v1696 = vunpack.c.l.b16 %v1545
        %v1697 = vunpack.c.l.b16 %v1546
        %v1698 = vunpack.c.l.b16 %v1547
        %v1699 = vunpack.c.l.b16 %v1548
        %v1700 = vunpack.c.l.b16 %v1549
        %v1701 = vunpack.c.l.b16 %v1550
        %v1702 = vunpack.c.l.b16 %v1551
        %v1703 = vunpack.c.l.b16 %v1552
        %v1704 = vunpack.c.l.b16 %v1553
        %v1705 = vunpack.c.l.b16 %v1554
        %v1706 = vunpack.c.l.b16 %v1555
        %v1707 = vunpack.c.l.b16 %v1556
        %v1708 = vunpack.c.l.b16 %v1557
        %v1709 = vunpack.c.l.b16 %v1558
        %v1710 = vunpack.c.l.b16 %v1559
        %v1711 = vunpack.c.l.b16 %v1560
        %v1712 = vunpack.c.l.b16 %v1561
        %v1713 = vunpack.c.l.b16 %v1562
        %v1714 = vunpack.c.l.b16 %v1563
        %v1715 = vunpack.c.l.b16 %v1564
        %v1716 = vunpack.c.l.b16 %v1565
        %v1717 = vunpack.c.l.b16 %v1566
        %v1718 = vunpack.c.l.b16 %v1567
        %v1719 = vunpack.c.l.b16 %v1568
        %v1720 = vunpack.c.l.b16 %v1569
        %v1721 = vunpack.c.l.b16 %v1570
        %v1722 = vunpack.c.l.b16 %v1571
        %v1723 = vunpack.c.l.b16 %v1572
        %v1724 = vunpack.c.l.b16 %v1573
        %v1725 = vunpack.c.l.b16 %v1574
        %v1726 = vunpack.c.l.b16 %v1575
        %v1727 = vunpack.c.l.b16 %v1576
        %v1728 = vunpack.c.l.b16 %v1577
        %v1729 = vunpack.c.l.b16 %v1578
        %v1730 = vunpack.c.l.b16 %v1579
        %v1731 = vunpack.c.l.b16 %v1580
        %v1732 = vunpack.c.l.b16 %v1581
        %v1733 = vunpack.c.l.b16 %v1582
        %v1734 = vunpack.c.l.b16 %v1583
        %v1735 = vunpack.c.l.b16 %v1584
        %v1736 = vunpack.c.l.b16 %v1585
        %v1737 = vunpack.c.l.b16 %v1586
        %v1738 = vunpack.c.l.b16 %v1587
        %v1739 = vunpack.c.l.b16 %v1588
        %v1740 = vunpack.c.l.b16 %v1589
        %v1741 = vunpack.c.l.b16 %v1590
        %v1742 = vunpack.c.l.b16 %v1591
        %v1743 = vunpack.c.l.b16 %v1592
        %v1744 = vunpack.c.l.b16 %v1593
        %v1745 = vunpack.c.l.b16 %v1594
        %v1746 = vunpack.c.l.b16 %v1595
        %v1747 = vunpack.c.l.b16 %v1596
        %v1748 = vunpack.c.l.b16 %v1597
        %v1749 = vunpack.c.l.b16 %v1598
        %v1750 = vpack.c.b16 %v1679, %v1678
        %v1751 = vpack.c.b16 %v1681, %v1680
        %v1752 = vpack.c.b16 %v1683, %v1682
        %v1753 = vpack.c.b16 %v1685, %v1684
        %v1754 = vpack.c.b16 %v1687, %v1686
        %v1755 = vpack.c.b16 %v1689, %v1688
        %v1756 = vpack.c.b16 %v1691, %v1690
        %v1757 = vpack.c.b16 %v1693, %v1692
        %v1758 = vpack.c.b16 %v1695, %v1694
        %v1759 = vpack.c.b16 %v1697, %v1696
        %v1760 = vpack.c.b16 %v1699, %v1698
        %v1761 = vpack.c.b16 %v1701, %v1700
        %v1762 = vpack.c.b16 %v1703, %v1702
        %v1763 = vpack.c.b16 %v1705, %v1704
        %v1764 = vpack.c.b16 %v1707, %v1706
        %v1765 = vpack.c.b16 %v1709, %v1708
        %v1766 = vpack.c.b16 %v1711, %v1710
        %v1767 = vpack.c.b16 %v1713, %v1712
        %v1768 = vpack.c.b16 %v1715, %v1714
        %v1769 = vpack.c.b16 %v1717, %v1716
        %v1770 = vpack.c.b16 %v1719, %v1718
        %v1771 = vpack.c.b16 %v1721, %v1720
        %v1772 = vpack.c.b16 %v1723, %v1722
        %v1773 = vpack.c.b16 %v1725, %v1724
        %v1774 = vpack.c.b16 %v1727, %v1726
        %v1775 = vpack.c.b16 %v1729, %v1728
        %v1776 = vpack.c.b16 %v1731, %v1730
        %v1777 = vpack.c.b16 %v1733, %v1732
        %v1778 = vpack.c.b16 %v1735, %v1734
        %v1779 = vpack.c.b16 %v1737, %v1736
        %v1780 = vpack.c.b16 %v1739, %v1738
        %v1781 = vpack.c.b16 %v1741, %v1740
        %v1782 = vpack.c.b16 %v1743, %v1742
        %v1783 = vpack.c.b16 %v1745, %v1744
        %v1784 = vpack.c.b16 %v1747, %v1746
        %v1785 = vpack.c.b16 %v1749, %v1748
        %v1823 = vsel %vm1486, %v1434, 0
        %v1826 = vsel %vm1486, %v1504, 0
        %v1829 = vsel %vm1486, %v1476, 0
        %v1832 = vsel %vm1486, %v1520, 0
        %1834 = vmatprep.subr.bf16.mxu0 0
        %1835 = vmatpush1.bf16.msra.mxu0 %v1750
        %1836 = vmatprep.subr.bf16.mxu0 0
        %1837 = vmatpush1.bf16.msra.mxu0 %v1751
        %1838 = vmatprep.subr.bf16.mxu0 0
        %1839 = vmatpush1.bf16.msra.mxu0 %v1752
        %1840 = vmatprep.subr.bf16.mxu0 0
        %1841 = vmatpush1.bf16.msra.mxu0 %v1753
        %1842 = vmatprep.subr.bf16.mxu0 0
        %1843 = vmatpush1.bf16.msra.mxu0 %v1754
        %1844 = vmatprep.subr.bf16.mxu0 0
        %1845 = vmatpush1.bf16.msra.mxu0 %v1755
        %1846 = vmatprep.subr.bf16.mxu0 0
        %1847 = vmatpush1.bf16.msra.mxu0 %v1756
        %1848 = vmatprep.subr.bf16.mxu0 0
        %1849 = vmatpush1.bf16.msra.mxu0 %v1757
        %1850 = vmatprep.subr.bf16.mxu0 0
        %1851 = vmatpush1.bf16.msra.mxu0 %v1758
        %1852 = vmatprep.subr.bf16.mxu0 0
        %1853 = vmatpush1.bf16.msra.mxu0 %v1759
        %1854 = vmatprep.subr.bf16.mxu0 0
        %1855 = vmatpush1.bf16.msra.mxu0 %v1760
        %1856 = vmatprep.subr.bf16.mxu0 0
        %1857 = vmatpush1.bf16.msra.mxu0 %v1761
        %1858 = vmatprep.subr.bf16.mxu0 0
        %1859 = vmatpush1.bf16.msra.mxu0 %v1762
        %1860 = vmatprep.subr.bf16.mxu0 0
        %1861 = vmatpush1.bf16.msra.mxu0 %v1763
        %1862 = vmatprep.subr.bf16.mxu0 0
        %1863 = vmatpush1.bf16.msra.mxu0 %v1764
        %1864 = vmatprep.subr.bf16.mxu0 0
        %1865 = vmatpush1.bf16.msra.mxu0 %v1765
        %1866 = vmatprep.mubr.bf16.mxu0 %v1489
        %1867 = vmatmul.mubr.bf16.gmra.mrb[0].mxu0 %v1349
        %v1868 = vpop.f32.mrb[0].mxu0
        %v1869 = vadd.f32 %v1604, %v1868
        %v1870 = vpop.f32.mrb[0].mxu0
        %v1871 = vpop.f32.mrb[0].mxu0
        %v1872 = vadd.f32 %v1604, %v1871
        %v1873 = vpop.f32.mrb[0].mxu0
        %1874 = vmatprep.mubr.bf16.mxu0 %v1509
        %1875 = vmatmul.mubr.bf16.gmra.mrb[0].mxu0 %v1497
        %v1876 = vpop.f32.mrb[0].mxu0
        %v1877 = vadd.f32 %v1604, %v1876
        %v1878 = vpop.f32.mrb[0].mxu0
        %v1879 = vpop.f32.mrb[0].mxu0
        %v1880 = vadd.f32 %v1604, %v1879
        %v1881 = vpop.f32.mrb[0].mxu0
        %1882 = vmatprep.mubr.bf16.mxu0 %v1513
        %1883 = vmatmul.mubr.bf16.gmra.mrb[0].mxu0 %v1391
        %v1884 = vpop.f32.mrb[0].mxu0
        %v1885 = vadd.f32 %v1604, %v1884
        %v1886 = vpop.f32.mrb[0].mxu0
        %v1887 = vpop.f32.mrb[0].mxu0
        %v1888 = vadd.f32 %v1604, %v1887
        %v1889 = vpop.f32.mrb[0].mxu0
        %1890 = vmatprep.mubr.bf16.mxu0 %v1525
        %1891 = vmatmul.mubr.bf16.gmra.mrb[0].mxu0 %v1484
        %v1892 = vpop.f32.mrb[0].mxu0
        %v1893 = vadd.f32 %v1604, %v1892
        %v1894 = vpop.f32.mrb[0].mxu0
        %v1895 = vpop.f32.mrb[0].mxu0
        %v1896 = vadd.f32 %v1604, %v1895
        %v1897 = vpop.f32.mrb[0].mxu0
        %1898 = vdwg.mxu0
        %1899 = vmatprep.subr.bf16.mxu0 0
        %1900 = vmatpush1.bf16.msra.mxu0 %v1766
        %1901 = vmatprep.subr.bf16.mxu0 0
        %1902 = vmatpush1.bf16.msra.mxu0 %v1767
        %1903 = vmatprep.subr.bf16.mxu0 0
        %1904 = vmatpush1.bf16.msra.mxu0 %v1768
        %1905 = vmatprep.subr.bf16.mxu0 0
        %1906 = vmatpush1.bf16.msra.mxu0 %v1769
        %1907 = vmatprep.subr.bf16.mxu0 0
        %1908 = vmatpush1.bf16.msra.mxu0 %v1770
        %1909 = vmatprep.subr.bf16.mxu0 0
        %1910 = vmatpush1.bf16.msra.mxu0 %v1771
        %1911 = vmatprep.subr.bf16.mxu0 0
        %1912 = vmatpush1.bf16.msra.mxu0 %v1772
        %1913 = vmatprep.subr.bf16.mxu0 0
        %1914 = vmatpush1.bf16.msra.mxu0 %v1773
        %1915 = vmatprep.subr.bf16.mxu0 0
        %1916 = vmatpush1.bf16.msra.mxu0 %v1774
        %1917 = vmatprep.subr.bf16.mxu0 0
        %1918 = vmatpush1.bf16.msra.mxu0 %v1775
        %1919 = vmatprep.subr.bf16.mxu0 0
        %1920 = vmatpush1.bf16.msra.mxu0 %v1776
        %1921 = vmatprep.subr.bf16.mxu0 0
        %1922 = vmatpush1.bf16.msra.mxu0 %v1777
        %1923 = vmatprep.subr.bf16.mxu0 0
        %1924 = vmatpush1.bf16.msra.mxu0 %v1778
        %1925 = vmatprep.subr.bf16.mxu0 0
        %1926 = vmatpush1.bf16.msra.mxu0 %v1779
        %1927 = vmatprep.subr.bf16.mxu0 0
        %1928 = vmatpush1.bf16.msra.mxu0 %v1780
        %1929 = vmatprep.subr.bf16.mxu0 0
        %1930 = vmatpush1.bf16.msra.mxu0 %v1781
        %1931 = vmatprep.mubr.bf16.mxu0 %v1433
        %1932 = vmatmul.mubr.bf16.gmra.mrb[0].mxu0 %v1484
        %v1933 = vpop.f32.mrb[0].mxu0
        %v1934 = vadd.f32 %v1869, %v1933
        %v1935 = vpop.f32.mrb[0].mxu0
        %v1936 = vpop.f32.mrb[0].mxu0
        %v1937 = vadd.f32 %v1872, %v1936
        %v1938 = vpop.f32.mrb[0].mxu0
        %1939 = vmatprep.mubr.bf16.mxu0 %v1505
        %1940 = vmatmul.mubr.bf16.gmra.mrb[0].mxu0 %v1392
        %v1941 = vpop.f32.mrb[0].mxu0
        %v1942 = vadd.f32 %v1877, %v1941
        %v1943 = vpop.f32.mrb[0].mxu0
        %v1944 = vpop.f32.mrb[0].mxu0
        %v1945 = vadd.f32 %v1880, %v1944
        %v1946 = vpop.f32.mrb[0].mxu0
        %1947 = vmatprep.mubr.bf16.mxu0 %v1475
        %1948 = vmatmul.mubr.bf16.gmra.mrb[0].mxu0 %v1505
        %v1949 = vpop.f32.mrb[0].mxu0
        %v1950 = vadd.f32 %v1885, %v1949
        %v1951 = vpop.f32.mrb[0].mxu0
        %v1952 = vpop.f32.mrb[0].mxu0
        %v1953 = vadd.f32 %v1888, %v1952
        %v1954 = vpop.f32.mrb[0].mxu0
        %1955 = vmatprep.mubr.bf16.mxu0 %v1521
        %1956 = vmatmul.mubr.bf16.gmra.mrb[0].mxu0 %v1434
        %v1957 = vpop.f32.mrb[0].mxu0
        %v1958 = vadd.f32 %v1893, %v1957
        %v1959 = vpop.f32.mrb[0].mxu0
        %v1960 = vpop.f32.mrb[0].mxu0
        %v1961 = vadd.f32 %v1896, %v1960
        %v1962 = vpop.f32.mrb[0].mxu0
        %1963 = vdwg.mxu0
        %1964 = vmatprep.subr.bf16.mxu0 0
        %1965 = vmatpush1.bf16.msra.mxu0 %v1782
        %1966 = vmatprep.subr.bf16.mxu0 0
        %1967 = vmatpush1.bf16.msra.mxu0 %v1783
        %1968 = vmatprep.subr.bf16.mxu0 0
        %1969 = vmatpush1.bf16.msra.mxu0 %v1784
        %1970 = vmatprep.subr.bf16.mxu0 0
        %1971 = vmatpush1.bf16.msra.mxu0 %v1785
        %1972 = vmatprep.subr.bf16.mxu0 0
        %1973 = vmatpush1.bf16.msra.mxu0 0
        %1974 = vmatprep.subr.bf16.mxu0 0
        %1975 = vmatpush1.bf16.msra.mxu0 0
        %1976 = vmatprep.subr.bf16.mxu0 0
        %1977 = vmatpush1.bf16.msra.mxu0 0
        %1978 = vmatprep.subr.bf16.mxu0 0
        %1979 = vmatpush1.bf16.msra.mxu0 0
        %1980 = vmatprep.subr.bf16.mxu0 0
        %1981 = vmatpush1.bf16.msra.mxu0 0
        %1982 = vmatprep.subr.bf16.mxu0 0
        %1983 = vmatpush1.bf16.msra.mxu0 0
        %1984 = vmatprep.subr.bf16.mxu0 0
        %1985 = vmatpush1.bf16.msra.mxu0 0
        %1986 = vmatprep.subr.bf16.mxu0 0
        %1987 = vmatpush1.bf16.msra.mxu0 0
        %1988 = vmatprep.subr.bf16.mxu0 0
        %1989 = vmatpush1.bf16.msra.mxu0 0
        %1990 = vmatprep.subr.bf16.mxu0 0
        %1991 = vmatpush1.bf16.msra.mxu0 0
        %1992 = vmatprep.subr.bf16.mxu0 0
        %1993 = vmatpush1.bf16.msra.mxu0 0
        %1994 = vmatprep.subr.bf16.mxu0 0
        %1995 = vmatpush1.bf16.msra.mxu0 0
        %1996 = vmatprep.mubr.bf16.mxu0 0
        %1997 = vmatmul.mubr.bf16.gmra.mrb[0].mxu0 %v1823
        %v1998 = vpop.f32.mrb[0].mxu0
        %v1999 = vadd.f32 %v1934, %v1998
        %v2000 = vpop.f32.mrb[0].mxu0
        %v2001 = vpop.f32.mrb[0].mxu0
        %v2002 = vadd.f32 %v1937, %v2001
        %v2003 = vpop.f32.mrb[0].mxu0
        %2004 = vmatprep.mubr.bf16.mxu0 0
        %2005 = vmatmul.mubr.bf16.gmra.mrb[0].mxu0 %v1826
        %v2006 = vpop.f32.mrb[0].mxu0
        %v2007 = vadd.f32 %v1942, %v2006
        %v2008 = vpop.f32.mrb[0].mxu0
        %v2009 = vpop.f32.mrb[0].mxu0
        %v2010 = vadd.f32 %v1945, %v2009
        %v2011 = vpop.f32.mrb[0].mxu0
        %2012 = vmatprep.mubr.bf16.mxu0 0
        %2013 = vmatmul.mubr.bf16.gmra.mrb[0].mxu0 %v1829
        %v2014 = vpop.f32.mrb[0].mxu0
        %v2015 = vadd.f32 %v1950, %v2014
        %v2016 = vpop.f32.mrb[0].mxu0
        %v2017 = vpop.f32.mrb[0].mxu0
        %v2018 = vadd.f32 %v1953, %v2017
        %v2019 = vpop.f32.mrb[0].mxu0
        %2020 = vmatprep.mubr.bf16.mxu0 0
        %2021 = vmatmul.mubr.bf16.gmra.mrb[0].mxu0 %v1832
        %v2022 = vpop.f32.mrb[0].mxu0
        %v2023 = vadd.f32 %v1958, %v2022
        %v2024 = vpop.f32.mrb[0].mxu0
        %v2025 = vpop.f32.mrb[0].mxu0
        %v2026 = vadd.f32 %v1961, %v2025
        %v2027 = vpop.f32.mrb[0].mxu0
        %2028 = vdwg.mxu0
        %v2029 = vmax.f32 %v1999, 0.0
        %v2030 = vmax.f32 %v2002, 0.0
        %v2031 = vmax.f32 %v2007, 0.0
        %v2032 = vmax.f32 %v2010, 0.0
        %v2033 = vmax.f32 %v2015, 0.0
        %v2034 = vmax.f32 %v2018, 0.0
        %v2035 = vmax.f32 %v2023, 0.0
        %v2036 = vmax.f32 %v2026, 0.0
        %v2037 = vld [vmem:[%s505] sm:$0xff]
        %v2038 = vld [vmem:[%s505 + $0x8] sm:$0xff]
        %v2039 = vld [vmem:[%s505 + $0x10] sm:$0xff]
        %v2040 = vld [vmem:[%s505 + $0x18] sm:$0xff]
        %v2041 = vld [vmem:[%s505 + $0x20] sm:$0xff]
        %v2042 = vld [vmem:[%s505 + $0x28] sm:$0xff]
        %v2043 = vld [vmem:[%s505 + $0x30] sm:$0xff]
        %v2044 = vld [vmem:[%s505 + $0x38] sm:$0xff]
        %v2045 = vld [vmem:[%s505 + $0x40] sm:$0xff]
        %v2046 = vld [vmem:[%s505 + $0x48] sm:$0xff]
        %v2047 = vld [vmem:[%s505 + $0x50] sm:$0xff]
        %v2048 = vld [vmem:[%s505 + $0x58] sm:$0xff]
        %v2049 = vld [vmem:[%s505 + $0x60] sm:$0xff]
        %v2050 = vld [vmem:[%s505 + $0x68] sm:$0xff]
        %v2051 = vld [vmem:[%s505 + $0x70] sm:$0xff]
        %v2052 = vld [vmem:[%s505 + $0x78] sm:$0xff]
        %v2053 = vld [vmem:[%s505 + $0x80] sm:$0xff]
        %v2054 = vld [vmem:[%s505 + $0x88] sm:$0xff]
        %v2055 = vld [vmem:[%s505 + $0x90] sm:$0xff]
        %v2056 = vld [vmem:[%s505 + $0x98] sm:$0xff]
        %v2057 = vld [vmem:[%s505 + $0xa0] sm:$0xff]
        %v2058 = vld [vmem:[%s505 + $0xa8] sm:$0xff]
        %v2059 = vld [vmem:[%s505 + $0xb0] sm:$0xff]
        %v2060 = vld [vmem:[%s505 + $0xb8] sm:$0xff]
        %v2061 = vld [vmem:[%s505 + $0xc0] sm:$0xff]
        %v2062 = vld [vmem:[%s505 + $0xc8] sm:$0xff]
        %v2063 = vld [vmem:[%s505 + $0xd0] sm:$0xff]
        %v2064 = vld [vmem:[%s505 + $0xd8] sm:$0xff]
        %v2065 = vld [vmem:[%s505 + $0xe0] sm:$0xff]
        %v2066 = vld [vmem:[%s505 + $0xe8] sm:$0xff]
        %v2067 = vld [vmem:[%s505 + $0xf0] sm:$0xff]
        %v2068 = vld [vmem:[%s505 + $0xf8] sm:$0xff]
        %v2069 = vld [vmem:[%s505 + $0x100] sm:$0xff]
        %v2070 = vld [vmem:[%s505 + $0x108] sm:$0xff]
        %v2071 = vld [vmem:[%s505 + $0x110] sm:$0xff]
        %v2072 = vld [vmem:[%s505 + $0x118] sm:$0xff]
        %v2073 = vld [vmem:[%s505 + $0x120] sm:$0xff]
        %v2074 = vld [vmem:[%s505 + $0x128] sm:$0xff]
        %v2075 = vld [vmem:[%s505 + $0x130] sm:$0xff]
        %v2076 = vld [vmem:[%s505 + $0x138] sm:$0xff]
        %v2077 = vld [vmem:[%s505 + $0x140] sm:$0xff]
        %v2078 = vld [vmem:[%s505 + $0x148] sm:$0xff]
        %v2079 = vld [vmem:[%s505 + $0x150] sm:$0xff]
        %v2080 = vld [vmem:[%s505 + $0x158] sm:$0xff]
        %v2081 = vld [vmem:[%s505 + $0x160] sm:$0xff]
        %v2082 = vld [vmem:[%s505 + $0x168] sm:$0xff]
        %v2083 = vld [vmem:[%s505 + $0x170] sm:$0xff]
        %v2084 = vld [vmem:[%s505 + $0x178] sm:$0xff]
        %v2085 = vld [vmem:[%s505 + $0x180] sm:$0xff]
        %v2086 = vld [vmem:[%s505 + $0x188] sm:$0xff]
        %v2087 = vld [vmem:[%s505 + $0x190] sm:$0xff]
        %v2088 = vld [vmem:[%s505 + $0x198] sm:$0xff]
        %v2089 = vld [vmem:[%s505 + $0x1a0] sm:$0xff]
        %v2090 = vld [vmem:[%s505 + $0x1a8] sm:$0xff]
        %v2091 = vld [vmem:[%s505 + $0x1b0] sm:$0xff]
        %v2092 = vld [vmem:[%s505 + $0x1b8] sm:$0xff]
        %v2093 = vld [vmem:[%s505 + $0x1c0] sm:$0xff]
        %v2094 = vld [vmem:[%s505 + $0x1c8] sm:$0xff]
        %v2095 = vld [vmem:[%s505 + $0x1d0] sm:$0xff]
        %v2096 = vld [vmem:[%s505 + $0x1d8] sm:$0xff]
        %v2097 = vld [vmem:[%s505 + $0x1e0] sm:$0xff]
        %v2098 = vld [vmem:[%s505 + $0x1e8] sm:$0xff]
        %v2099 = vld [vmem:[%s505 + $0x1f0] sm:$0xff]
        %v2100 = vld [vmem:[%s505 + $0x1f8] sm:$0xff]
        %v2101 = vpack.c.bf16 %v2030, %v2029
        %v2102 = vpack.c.bf16 %v2032, %v2031
        %v2119 = vunpack.c.l.b16 %v2053
        %v2120 = vunpack.c.h.b16 %v2053
        %v2121 = vunpack.c.l.b16 %v2054
        %v2122 = vunpack.c.h.b16 %v2054
        %v2123 = vunpack.c.l.b16 %v2055
        %v2124 = vunpack.c.h.b16 %v2055
        %v2125 = vunpack.c.l.b16 %v2056
        %v2126 = vunpack.c.h.b16 %v2056
        %v2127 = vunpack.c.l.b16 %v2057
        %v2128 = vunpack.c.h.b16 %v2057
        %v2129 = vunpack.c.l.b16 %v2058
        %v2130 = vunpack.c.h.b16 %v2058
        %v2131 = vunpack.c.l.b16 %v2059
        %v2132 = vunpack.c.h.b16 %v2059
        %v2133 = vunpack.c.l.b16 %v2060
        %v2134 = vunpack.c.h.b16 %v2060
        %v2135 = vunpack.c.l.b16 %v2061
        %v2136 = vunpack.c.h.b16 %v2061
        %v2137 = vunpack.c.l.b16 %v2062
        %v2138 = vunpack.c.h.b16 %v2062
        %v2139 = vunpack.c.l.b16 %v2063
        %v2140 = vunpack.c.h.b16 %v2063
        %v2141 = vunpack.c.l.b16 %v2064
        %v2142 = vunpack.c.h.b16 %v2064
        %v2143 = vunpack.c.l.b16 %v2065
        %v2144 = vunpack.c.h.b16 %v2065
        %v2145 = vunpack.c.l.b16 %v2066
        %v2146 = vunpack.c.h.b16 %v2066
        %v2147 = vunpack.c.l.b16 %v2067
        %v2148 = vunpack.c.h.b16 %v2067
        %v2149 = vunpack.c.l.b16 %v2068
        %v2150 = vunpack.c.h.b16 %v2068
        %v2151 = vpack.c.b16 %v2121, %v2119
        %v2152 = vpack.c.b16 %v2122, %v2120
        %v2153 = vpack.c.b16 %v2125, %v2123
        %v2154 = vpack.c.b16 %v2126, %v2124
        %v2155 = vpack.c.b16 %v2129, %v2127
        %v2156 = vpack.c.b16 %v2130, %v2128
        %v2157 = vpack.c.b16 %v2133, %v2131
        %v2158 = vpack.c.b16 %v2134, %v2132
        %v2159 = vpack.c.b16 %v2137, %v2135
        %v2160 = vpack.c.b16 %v2138, %v2136
        %v2161 = vpack.c.b16 %v2141, %v2139
        %v2162 = vpack.c.b16 %v2142, %v2140
        %v2163 = vpack.c.b16 %v2145, %v2143
        %v2164 = vpack.c.b16 %v2146, %v2144
        %v2165 = vpack.c.b16 %v2149, %v2147
        %v2166 = vpack.c.b16 %v2150, %v2148
        %2183 = vmatprep.subr.bf16.mxu0 %v2152
        %2184 = vmatpush1.bf16.msra.mxu0 %v2151
        %2185 = vmatprep.subr.bf16.mxu0 %v2154
        %2186 = vmatpush1.bf16.msra.mxu0 %v2153
        %2187 = vmatprep.subr.bf16.mxu0 %v2156
        %2188 = vmatpush1.bf16.msra.mxu0 %v2155
        %2189 = vmatprep.subr.bf16.mxu0 %v2158
        %2190 = vmatpush1.bf16.msra.mxu0 %v2157
        %2191 = vmatprep.subr.bf16.mxu0 %v2160
        %2192 = vmatpush1.bf16.msra.mxu0 %v2159
        %2193 = vmatprep.subr.bf16.mxu0 %v2162
        %2194 = vmatpush1.bf16.msra.mxu0 %v2161
        %2195 = vmatprep.subr.bf16.mxu0 %v2164
        %2196 = vmatpush1.bf16.msra.mxu0 %v2163
        %2197 = vmatprep.subr.bf16.mxu0 %v2166
        %2198 = vmatpush1.bf16.msra.mxu0 %v2165
        %2199 = vmatprep.subr.bf16.mxu0 0
        %2200 = vmatpush1.bf16.msra.mxu0 0
        %2201 = vmatprep.subr.bf16.mxu0 0
        %2202 = vmatpush1.bf16.msra.mxu0 0
        %2203 = vmatprep.subr.bf16.mxu0 0
        %2204 = vmatpush1.bf16.msra.mxu0 0
        %2205 = vmatprep.subr.bf16.mxu0 0
        %2206 = vmatpush1.bf16.msra.mxu0 0
        %2207 = vmatprep.subr.bf16.mxu0 0
        %2208 = vmatpush1.bf16.msra.mxu0 0
        %2209 = vmatprep.subr.bf16.mxu0 0
        %2210 = vmatpush1.bf16.msra.mxu0 0
        %2211 = vmatprep.subr.bf16.mxu0 0
        %2212 = vmatpush1.bf16.msra.mxu0 0
        %2213 = vmatprep.subr.bf16.mxu0 0
        %2214 = vmatpush1.bf16.msra.mxu0 0
        %2215 = vmatprep.mubr.bf16.mxu0 0
        %2216 = vmatmul.mubr.bf16.gmra.mrb[0].mxu0 %v2102
        %v2217 = vpop.f32.mrb[0].mxu0
        %v2218 = vadd.f32 0.0, %v2217
        %v2219 = vpop.f32.mrb[0].mxu0
        %v2220 = vadd.f32 0.0, %v2219
        %v2221 = vpop.f32.mrb[0].mxu0
        %v2222 = vadd.f32 0.0, %v2221
        %v2223 = vpop.f32.mrb[0].mxu0
        %v2224 = vadd.f32 0.0, %v2223
        %2225 = vdwg.mxu0
        %v2242 = vunpack.c.l.b16 %v2037
        %v2243 = vunpack.c.h.b16 %v2037
        %v2244 = vunpack.c.l.b16 %v2038
        %v2245 = vunpack.c.h.b16 %v2038
        %v2246 = vunpack.c.l.b16 %v2039
        %v2247 = vunpack.c.h.b16 %v2039
        %v2248 = vunpack.c.l.b16 %v2040
        %v2249 = vunpack.c.h.b16 %v2040
        %v2250 = vunpack.c.l.b16 %v2041
        %v2251 = vunpack.c.h.b16 %v2041
        %v2252 = vunpack.c.l.b16 %v2042
        %v2253 = vunpack.c.h.b16 %v2042
        %v2254 = vunpack.c.l.b16 %v2043
        %v2255 = vunpack.c.h.b16 %v2043
        %v2256 = vunpack.c.l.b16 %v2044
        %v2257 = vunpack.c.h.b16 %v2044
        %v2258 = vunpack.c.l.b16 %v2045
        %v2259 = vunpack.c.h.b16 %v2045
        %v2260 = vunpack.c.l.b16 %v2046
        %v2261 = vunpack.c.h.b16 %v2046
        %v2262 = vunpack.c.l.b16 %v2047
        %v2263 = vunpack.c.h.b16 %v2047
        %v2264 = vunpack.c.l.b16 %v2048
        %v2265 = vunpack.c.h.b16 %v2048
        %v2266 = vunpack.c.l.b16 %v2049
        %v2267 = vunpack.c.h.b16 %v2049
        %v2268 = vunpack.c.l.b16 %v2050
        %v2269 = vunpack.c.h.b16 %v2050
        %v2270 = vunpack.c.l.b16 %v2051
        %v2271 = vunpack.c.h.b16 %v2051
        %v2272 = vunpack.c.l.b16 %v2052
        %v2273 = vunpack.c.h.b16 %v2052
        %v2274 = vpack.c.b16 %v2244, %v2242
        %v2275 = vpack.c.b16 %v2245, %v2243
        %v2276 = vpack.c.b16 %v2248, %v2246
        %v2277 = vpack.c.b16 %v2249, %v2247
        %v2278 = vpack.c.b16 %v2252, %v2250
        %v2279 = vpack.c.b16 %v2253, %v2251
        %v2280 = vpack.c.b16 %v2256, %v2254
        %v2281 = vpack.c.b16 %v2257, %v2255
        %v2282 = vpack.c.b16 %v2260, %v2258
        %v2283 = vpack.c.b16 %v2261, %v2259
        %v2284 = vpack.c.b16 %v2264, %v2262
        %v2285 = vpack.c.b16 %v2265, %v2263
        %v2286 = vpack.c.b16 %v2268, %v2266
        %v2287 = vpack.c.b16 %v2269, %v2267
        %v2288 = vpack.c.b16 %v2272, %v2270
        %v2289 = vpack.c.b16 %v2273, %v2271
        %2306 = vmatprep.subr.bf16.mxu0 %v2275
        %2307 = vmatpush1.bf16.msra.mxu0 %v2274
        %2308 = vmatprep.subr.bf16.mxu0 %v2277
        %2309 = vmatpush1.bf16.msra.mxu0 %v2276
        %2310 = vmatprep.subr.bf16.mxu0 %v2279
        %2311 = vmatpush1.bf16.msra.mxu0 %v2278
        %2312 = vmatprep.subr.bf16.mxu0 %v2281
        %2313 = vmatpush1.bf16.msra.mxu0 %v2280
        %2314 = vmatprep.subr.bf16.mxu0 %v2283
        %2315 = vmatpush1.bf16.msra.mxu0 %v2282
        %2316 = vmatprep.subr.bf16.mxu0 %v2285
        %2317 = vmatpush1.bf16.msra.mxu0 %v2284
        %2318 = vmatprep.subr.bf16.mxu0 %v2287
        %2319 = vmatpush1.bf16.msra.mxu0 %v2286
        %2320 = vmatprep.subr.bf16.mxu0 %v2289
        %2321 = vmatpush1.bf16.msra.mxu0 %v2288
        %2322 = vmatprep.subr.bf16.mxu0 0
        %2323 = vmatpush1.bf16.msra.mxu0 0
        %2324 = vmatprep.subr.bf16.mxu0 0
        %2325 = vmatpush1.bf16.msra.mxu0 0
        %2326 = vmatprep.subr.bf16.mxu0 0
        %2327 = vmatpush1.bf16.msra.mxu0 0
        %2328 = vmatprep.subr.bf16.mxu0 0
        %2329 = vmatpush1.bf16.msra.mxu0 0
        %2330 = vmatprep.subr.bf16.mxu0 0
        %2331 = vmatpush1.bf16.msra.mxu0 0
        %2332 = vmatprep.subr.bf16.mxu0 0
        %2333 = vmatpush1.bf16.msra.mxu0 0
        %2334 = vmatprep.subr.bf16.mxu0 0
        %2335 = vmatpush1.bf16.msra.mxu0 0
        %2336 = vmatprep.subr.bf16.mxu0 0
        %2337 = vmatpush1.bf16.msra.mxu0 0
        %2338 = vmatprep.mubr.bf16.mxu0 0
        %2339 = vmatmul.mubr.bf16.gmra.mrb[0].mxu0 %v2101
        %v2340 = vpop.f32.mrb[0].mxu0
        %v2341 = vadd.f32 %v2218, %v2340
        %v2342 = vpop.f32.mrb[0].mxu0
        %v2343 = vadd.f32 %v2220, %v2342
        %v2344 = vpop.f32.mrb[0].mxu0
        %v2345 = vadd.f32 %v2222, %v2344
        %v2346 = vpop.f32.mrb[0].mxu0
        %v2347 = vadd.f32 %v2224, %v2346
        %2348 = vdwg.mxu0
        %v2349 = vpack.c.bf16 %v2034, %v2033
        %v2366 = vunpack.c.l.b16 %v2069
        %v2367 = vunpack.c.h.b16 %v2069
        %v2368 = vunpack.c.l.b16 %v2070
        %v2369 = vunpack.c.h.b16 %v2070
        %v2370 = vunpack.c.l.b16 %v2071
        %v2371 = vunpack.c.h.b16 %v2071
        %v2372 = vunpack.c.l.b16 %v2072
        %v2373 = vunpack.c.h.b16 %v2072
        %v2374 = vunpack.c.l.b16 %v2073
        %v2375 = vunpack.c.h.b16 %v2073
        %v2376 = vunpack.c.l.b16 %v2074
        %v2377 = vunpack.c.h.b16 %v2074
        %v2378 = vunpack.c.l.b16 %v2075
        %v2379 = vunpack.c.h.b16 %v2075
        %v2380 = vunpack.c.l.b16 %v2076
        %v2381 = vunpack.c.h.b16 %v2076
        %v2382 = vunpack.c.l.b16 %v2077
        %v2383 = vunpack.c.h.b16 %v2077
        %v2384 = vunpack.c.l.b16 %v2078
        %v2385 = vunpack.c.h.b16 %v2078
        %v2386 = vunpack.c.l.b16 %v2079
        %v2387 = vunpack.c.h.b16 %v2079
        %v2388 = vunpack.c.l.b16 %v2080
        %v2389 = vunpack.c.h.b16 %v2080
        %v2390 = vunpack.c.l.b16 %v2081
        %v2391 = vunpack.c.h.b16 %v2081
        %v2392 = vunpack.c.l.b16 %v2082
        %v2393 = vunpack.c.h.b16 %v2082
        %v2394 = vunpack.c.l.b16 %v2083
        %v2395 = vunpack.c.h.b16 %v2083
        %v2396 = vunpack.c.l.b16 %v2084
        %v2397 = vunpack.c.h.b16 %v2084
        %v2398 = vpack.c.b16 %v2368, %v2366
        %v2399 = vpack.c.b16 %v2369, %v2367
        %v2400 = vpack.c.b16 %v2372, %v2370
        %v2401 = vpack.c.b16 %v2373, %v2371
        %v2402 = vpack.c.b16 %v2376, %v2374
        %v2403 = vpack.c.b16 %v2377, %v2375
        %v2404 = vpack.c.b16 %v2380, %v2378
        %v2405 = vpack.c.b16 %v2381, %v2379
        %v2406 = vpack.c.b16 %v2384, %v2382
        %v2407 = vpack.c.b16 %v2385, %v2383
        %v2408 = vpack.c.b16 %v2388, %v2386
        %v2409 = vpack.c.b16 %v2389, %v2387
        %v2410 = vpack.c.b16 %v2392, %v2390
        %v2411 = vpack.c.b16 %v2393, %v2391
        %v2412 = vpack.c.b16 %v2396, %v2394
        %v2413 = vpack.c.b16 %v2397, %v2395
        %2430 = vmatprep.subr.bf16.mxu0 %v2399
        %2431 = vmatpush1.bf16.msra.mxu0 %v2398
        %2432 = vmatprep.subr.bf16.mxu0 %v2401
        %2433 = vmatpush1.bf16.msra.mxu0 %v2400
        %2434 = vmatprep.subr.bf16.mxu0 %v2403
        %2435 = vmatpush1.bf16.msra.mxu0 %v2402
        %2436 = vmatprep.subr.bf16.mxu0 %v2405
        %2437 = vmatpush1.bf16.msra.mxu0 %v2404
        %2438 = vmatprep.subr.bf16.mxu0 %v2407
        %2439 = vmatpush1.bf16.msra.mxu0 %v2406
        %2440 = vmatprep.subr.bf16.mxu0 %v2409
        %2441 = vmatpush1.bf16.msra.mxu0 %v2408
        %2442 = vmatprep.subr.bf16.mxu0 %v2411
        %2443 = vmatpush1.bf16.msra.mxu0 %v2410
        %2444 = vmatprep.subr.bf16.mxu0 %v2413
        %2445 = vmatpush1.bf16.msra.mxu0 %v2412
        %2446 = vmatprep.subr.bf16.mxu0 0
        %2447 = vmatpush1.bf16.msra.mxu0 0
        %2448 = vmatprep.subr.bf16.mxu0 0
        %2449 = vmatpush1.bf16.msra.mxu0 0
        %2450 = vmatprep.subr.bf16.mxu0 0
        %2451 = vmatpush1.bf16.msra.mxu0 0
        %2452 = vmatprep.subr.bf16.mxu0 0
        %2453 = vmatpush1.bf16.msra.mxu0 0
        %2454 = vmatprep.subr.bf16.mxu0 0
        %2455 = vmatpush1.bf16.msra.mxu0 0
        %2456 = vmatprep.subr.bf16.mxu0 0
        %2457 = vmatpush1.bf16.msra.mxu0 0
        %2458 = vmatprep.subr.bf16.mxu0 0
        %2459 = vmatpush1.bf16.msra.mxu0 0
        %2460 = vmatprep.subr.bf16.mxu0 0
        %2461 = vmatpush1.bf16.msra.mxu0 0
        %2462 = vmatprep.mubr.bf16.mxu0 0
        %2463 = vmatmul.mubr.bf16.gmra.mrb[0].mxu0 %v2349
        %v2464 = vpop.f32.mrb[0].mxu0
        %v2465 = vadd.f32 0.0, %v2464
        %v2466 = vpop.f32.mrb[0].mxu0
        %v2467 = vadd.f32 0.0, %v2466
        %v2468 = vpop.f32.mrb[0].mxu0
        %v2469 = vadd.f32 0.0, %v2468
        %v2470 = vpop.f32.mrb[0].mxu0
        %v2471 = vadd.f32 0.0, %v2470
        %2472 = vdwg.mxu0
        %v2473 = vadd.f32 %v2341, %v2465
        %v2474 = vadd.f32 %v2343, %v2467
        %v2475 = vadd.f32 %v2345, %v2469
        %v2476 = vadd.f32 %v2347, %v2471
        %v2477 = vpack.c.bf16 %v2036, %v2035
        %v2494 = vunpack.c.l.b16 %v2085
        %v2495 = vunpack.c.h.b16 %v2085
        %v2496 = vunpack.c.l.b16 %v2086
        %v2497 = vunpack.c.h.b16 %v2086
        %v2498 = vunpack.c.l.b16 %v2087
        %v2499 = vunpack.c.h.b16 %v2087
        %v2500 = vunpack.c.l.b16 %v2088
        %v2501 = vunpack.c.h.b16 %v2088
        %v2502 = vunpack.c.l.b16 %v2089
        %v2503 = vunpack.c.h.b16 %v2089
        %v2504 = vunpack.c.l.b16 %v2090
        %v2505 = vunpack.c.h.b16 %v2090
        %v2506 = vunpack.c.l.b16 %v2091
        %v2507 = vunpack.c.h.b16 %v2091
        %v2508 = vunpack.c.l.b16 %v2092
        %v2509 = vunpack.c.h.b16 %v2092
        %v2510 = vunpack.c.l.b16 %v2093
        %v2511 = vunpack.c.h.b16 %v2093
        %v2512 = vunpack.c.l.b16 %v2094
        %v2513 = vunpack.c.h.b16 %v2094
        %v2514 = vunpack.c.l.b16 %v2095
        %v2515 = vunpack.c.h.b16 %v2095
        %v2516 = vunpack.c.l.b16 %v2096
        %v2517 = vunpack.c.h.b16 %v2096
        %v2518 = vunpack.c.l.b16 %v2097
        %v2519 = vunpack.c.h.b16 %v2097
        %v2520 = vunpack.c.l.b16 %v2098
        %v2521 = vunpack.c.h.b16 %v2098
        %v2522 = vunpack.c.l.b16 %v2099
        %v2523 = vunpack.c.h.b16 %v2099
        %v2524 = vunpack.c.l.b16 %v2100
        %v2525 = vunpack.c.h.b16 %v2100
        %v2526 = vpack.c.b16 %v2496, %v2494
        %v2527 = vpack.c.b16 %v2497, %v2495
        %v2528 = vpack.c.b16 %v2500, %v2498
        %v2529 = vpack.c.b16 %v2501, %v2499
        %v2530 = vpack.c.b16 %v2504, %v2502
        %v2531 = vpack.c.b16 %v2505, %v2503
        %v2532 = vpack.c.b16 %v2508, %v2506
        %v2533 = vpack.c.b16 %v2509, %v2507
        %v2534 = vpack.c.b16 %v2512, %v2510
        %v2535 = vpack.c.b16 %v2513, %v2511
        %v2536 = vpack.c.b16 %v2516, %v2514
        %v2537 = vpack.c.b16 %v2517, %v2515
        %v2538 = vpack.c.b16 %v2520, %v2518
        %v2539 = vpack.c.b16 %v2521, %v2519
        %v2540 = vpack.c.b16 %v2524, %v2522
        %v2541 = vpack.c.b16 %v2525, %v2523
        %2558 = vmatprep.subr.bf16.mxu0 %v2527
        %2559 = vmatpush1.bf16.msra.mxu0 %v2526
        %2560 = vmatprep.subr.bf16.mxu0 %v2529
        %2561 = vmatpush1.bf16.msra.mxu0 %v2528
        %2562 = vmatprep.subr.bf16.mxu0 %v2531
        %2563 = vmatpush1.bf16.msra.mxu0 %v2530
        %2564 = vmatprep.subr.bf16.mxu0 %v2533
        %2565 = vmatpush1.bf16.msra.mxu0 %v2532
        %2566 = vmatprep.subr.bf16.mxu0 %v2535
        %2567 = vmatpush1.bf16.msra.mxu0 %v2534
        %2568 = vmatprep.subr.bf16.mxu0 %v2537
        %2569 = vmatpush1.bf16.msra.mxu0 %v2536
        %2570 = vmatprep.subr.bf16.mxu0 %v2539
        %2571 = vmatpush1.bf16.msra.mxu0 %v2538
        %2572 = vmatprep.subr.bf16.mxu0 %v2541
        %2573 = vmatpush1.bf16.msra.mxu0 %v2540
        %2574 = vmatprep.subr.bf16.mxu0 0
        %2575 = vmatpush1.bf16.msra.mxu0 0
        %2576 = vmatprep.subr.bf16.mxu0 0
        %2577 = vmatpush1.bf16.msra.mxu0 0
        %2578 = vmatprep.subr.bf16.mxu0 0
        %2579 = vmatpush1.bf16.msra.mxu0 0
        %2580 = vmatprep.subr.bf16.mxu0 0
        %2581 = vmatpush1.bf16.msra.mxu0 0
        %2582 = vmatprep.subr.bf16.mxu0 0
        %2583 = vmatpush1.bf16.msra.mxu0 0
        %2584 = vmatprep.subr.bf16.mxu0 0
        %2585 = vmatpush1.bf16.msra.mxu0 0
        %2586 = vmatprep.subr.bf16.mxu0 0
        %2587 = vmatpush1.bf16.msra.mxu0 0
        %2588 = vmatprep.subr.bf16.mxu0 0
        %2589 = vmatpush1.bf16.msra.mxu0 0
        %2590 = vmatprep.mubr.bf16.mxu0 0
        %2591 = vmatmul.mubr.bf16.gmra.mrb[0].mxu0 %v2477
        %v2592 = vpop.f32.mrb[0].mxu0
        %v2593 = vadd.f32 0.0, %v2592
        %v2594 = vpop.f32.mrb[0].mxu0
        %v2595 = vadd.f32 0.0, %v2594
        %v2596 = vpop.f32.mrb[0].mxu0
        %v2597 = vadd.f32 0.0, %v2596
        %v2598 = vpop.f32.mrb[0].mxu0
        %v2599 = vadd.f32 0.0, %v2598
        %2600 = vdwg.mxu0
        %v2601 = vadd.f32 %v2473, %v2593
        %v2602 = vadd.f32 %v2474, %v2595
        %v2603 = vadd.f32 %v2475, %v2597
        %v2604 = vadd.f32 %v2476, %v2599
        %v2605 = vld [vmem:[%s617] sm:$0x3]
        %v2607 = vlaneseq
        %v2608 = vshrl.u32 %v2607, 7
        %v2609 = vsub.s32 0, %v2608
        %v2610 = vrot.slane %v2605, %v2609
        %v2611 = vlaneseq
        %v2612 = vshrl.u32 %v2611, 7
        %v2613 = vsub.s32 1, %v2612
        %v2614 = vrot.slane %v2605, %v2613
        %v2617 = vadd.f32 %v2601, %v2610
        %v2618 = vadd.f32 %v2602, %v2614
        %v2619 = vadd.f32 %v2603, %v2610
        %v2620 = vadd.f32 %v2604, %v2614
        %v2621 = vmax.f32 %v2617, 0.0
        %v2622 = vmax.f32 %v2618, 0.0
        %v2623 = vmax.f32 %v2619, 0.0
        %v2624 = vmax.f32 %v2620, 0.0
        %v2625 = vpack.c.bf16 %v2623, %v2621
        %v2626 = vpack.c.bf16 %v2624, %v2622
        %v2627 = vld [vmem:[%s622] sm:$0xf]
        %v2628 = vld [vmem:[%s622 + $0x4] sm:$0xf]
        %v2629 = vld [vmem:[%s622 + $0x8] sm:$0xf]
        %v2630 = vld [vmem:[%s622 + $0xc] sm:$0xf]
        %v2631 = vld [vmem:[%s622 + $0x10] sm:$0xf]
        %v2632 = vld [vmem:[%s622 + $0x14] sm:$0xf]
        %v2633 = vld [vmem:[%s622 + $0x18] sm:$0xf]
        %v2634 = vld [vmem:[%s622 + $0x1c] sm:$0xf]
        %v2635 = vld [vmem:[%s622 + $0x20] sm:$0xf]
        %v2636 = vld [vmem:[%s622 + $0x24] sm:$0xf]
        %v2637 = vld [vmem:[%s622 + $0x28] sm:$0xf]
        %v2638 = vld [vmem:[%s622 + $0x2c] sm:$0xf]
        %v2639 = vld [vmem:[%s622 + $0x30] sm:$0xf]
        %v2640 = vld [vmem:[%s622 + $0x34] sm:$0xf]
        %v2641 = vld [vmem:[%s622 + $0x38] sm:$0xf]
        %v2642 = vld [vmem:[%s622 + $0x3c] sm:$0xf]
        %v2643 = vld [vmem:[%s622 + $0x40] sm:$0xf]
        %v2644 = vld [vmem:[%s622 + $0x44] sm:$0xf]
        %v2645 = vld [vmem:[%s622 + $0x48] sm:$0xf]
        %v2646 = vld [vmem:[%s622 + $0x4c] sm:$0xf]
        %v2647 = vld [vmem:[%s622 + $0x50] sm:$0xf]
        %v2648 = vld [vmem:[%s622 + $0x54] sm:$0xf]
        %v2649 = vld [vmem:[%s622 + $0x58] sm:$0xf]
        %v2650 = vld [vmem:[%s622 + $0x5c] sm:$0xf]
        %v2651 = vld [vmem:[%s622 + $0x60] sm:$0xf]
        %v2652 = vld [vmem:[%s622 + $0x64] sm:$0xf]
        %v2653 = vld [vmem:[%s622 + $0x68] sm:$0xf]
        %v2654 = vld [vmem:[%s622 + $0x6c] sm:$0xf]
        %v2655 = vld [vmem:[%s622 + $0x70] sm:$0xf]
        %v2656 = vld [vmem:[%s622 + $0x74] sm:$0xf]
        %v2657 = vld [vmem:[%s622 + $0x78] sm:$0xf]
        %v2658 = vld [vmem:[%s622 + $0x7c] sm:$0xf]
        %v2659 = vld [vmem:[%s625] sm:$0x1]
        %v2661 = vlaneseq
        %v2662 = vshrl.u32 %v2661, 7
        %v2663 = vsub.s32 0, %v2662
        %v2664 = vrot.slane %v2659, %v2663
        %v2698 = vunpack.c.l.b16 %v2627
        %v2699 = vunpack.c.l.b16 %v2628
        %v2700 = vunpack.c.l.b16 %v2629
        %v2701 = vunpack.c.l.b16 %v2630
        %v2702 = vunpack.c.l.b16 %v2631
        %v2703 = vunpack.c.l.b16 %v2632
        %v2704 = vunpack.c.l.b16 %v2633
        %v2705 = vunpack.c.l.b16 %v2634
        %v2706 = vunpack.c.l.b16 %v2635
        %v2707 = vunpack.c.l.b16 %v2636
        %v2708 = vunpack.c.l.b16 %v2637
        %v2709 = vunpack.c.l.b16 %v2638
        %v2710 = vunpack.c.l.b16 %v2639
        %v2711 = vunpack.c.l.b16 %v2640
        %v2712 = vunpack.c.l.b16 %v2641
        %v2713 = vunpack.c.l.b16 %v2642
        %v2714 = vunpack.c.l.b16 %v2643
        %v2715 = vunpack.c.l.b16 %v2644
        %v2716 = vunpack.c.l.b16 %v2645
        %v2717 = vunpack.c.l.b16 %v2646
        %v2718 = vunpack.c.l.b16 %v2647
        %v2719 = vunpack.c.l.b16 %v2648
        %v2720 = vunpack.c.l.b16 %v2649
        %v2721 = vunpack.c.l.b16 %v2650
        %v2722 = vunpack.c.l.b16 %v2651
        %v2723 = vunpack.c.l.b16 %v2652
        %v2724 = vunpack.c.l.b16 %v2653
        %v2725 = vunpack.c.l.b16 %v2654
        %v2726 = vunpack.c.l.b16 %v2655
        %v2727 = vunpack.c.l.b16 %v2656
        %v2728 = vunpack.c.l.b16 %v2657
        %v2729 = vunpack.c.l.b16 %v2658
        %v2730 = vpack.c.b16 %v2699, %v2698
        %v2731 = vpack.c.b16 %v2701, %v2700
        %v2732 = vpack.c.b16 %v2703, %v2702
        %v2733 = vpack.c.b16 %v2705, %v2704
        %v2734 = vpack.c.b16 %v2707, %v2706
        %v2735 = vpack.c.b16 %v2709, %v2708
        %v2736 = vpack.c.b16 %v2711, %v2710
        %v2737 = vpack.c.b16 %v2713, %v2712
        %v2738 = vpack.c.b16 %v2715, %v2714
        %v2739 = vpack.c.b16 %v2717, %v2716
        %v2740 = vpack.c.b16 %v2719, %v2718
        %v2741 = vpack.c.b16 %v2721, %v2720
        %v2742 = vpack.c.b16 %v2723, %v2722
        %v2743 = vpack.c.b16 %v2725, %v2724
        %v2744 = vpack.c.b16 %v2727, %v2726
        %v2745 = vpack.c.b16 %v2729, %v2728
        %2762 = vmatprep.subr.bf16.mxu0 0
        %2763 = vmatpush1.bf16.msra.mxu0 %v2730
        %2764 = vmatprep.subr.bf16.mxu0 0
        %2765 = vmatpush1.bf16.msra.mxu0 %v2731
        %2766 = vmatprep.subr.bf16.mxu0 0
        %2767 = vmatpush1.bf16.msra.mxu0 %v2732
        %2768 = vmatprep.subr.bf16.mxu0 0
        %2769 = vmatpush1.bf16.msra.mxu0 %v2733
        %2770 = vmatprep.subr.bf16.mxu0 0
        %2771 = vmatpush1.bf16.msra.mxu0 %v2734
        %2772 = vmatprep.subr.bf16.mxu0 0
        %2773 = vmatpush1.bf16.msra.mxu0 %v2735
        %2774 = vmatprep.subr.bf16.mxu0 0
        %2775 = vmatpush1.bf16.msra.mxu0 %v2736
        %2776 = vmatprep.subr.bf16.mxu0 0
        %2777 = vmatpush1.bf16.msra.mxu0 %v2737
        %2778 = vmatprep.subr.bf16.mxu0 0
        %2779 = vmatpush1.bf16.msra.mxu0 %v2738
        %2780 = vmatprep.subr.bf16.mxu0 0
        %2781 = vmatpush1.bf16.msra.mxu0 %v2739
        %2782 = vmatprep.subr.bf16.mxu0 0
        %2783 = vmatpush1.bf16.msra.mxu0 %v2740
        %2784 = vmatprep.subr.bf16.mxu0 0
        %2785 = vmatpush1.bf16.msra.mxu0 %v2741
        %2786 = vmatprep.subr.bf16.mxu0 0
        %2787 = vmatpush1.bf16.msra.mxu0 %v2742
        %2788 = vmatprep.subr.bf16.mxu0 0
        %2789 = vmatpush1.bf16.msra.mxu0 %v2743
        %2790 = vmatprep.subr.bf16.mxu0 0
        %2791 = vmatpush1.bf16.msra.mxu0 %v2744
        %2792 = vmatprep.subr.bf16.mxu0 0
        %2793 = vmatpush1.bf16.msra.mxu0 %v2745
        %2794 = vmatprep.mubr.bf16.mxu0 %v2626
        %2795 = vmatmul.mubr.bf16.gmra.mrb[0].mxu0 %v2625
        %v2796 = vpop.f32.mrb[0].mxu0
        %v2797 = vadd.f32 %v2664, %v2796
        %v2798 = vpop.f32.mrb[0].mxu0
        %v2799 = vpop.f32.mrb[0].mxu0
        %v2800 = vadd.f32 %v2664, %v2799
        %v2801 = vpop.f32.mrb[0].mxu0
        %2802 = vdwg.mxu0
        %v2803 = vmax.f32 %v2797, 0.0
        %v2804 = vmax.f32 %v2800, 0.0
        %v2805 = vpack.c.bf16 %v2804, %v2803
        %v2806 = vld [vmem:[%s630] sm:$0xf]
        %v2807 = vld [vmem:[%s630 + $0x4] sm:$0xf]
        %v2808 = vld [vmem:[%s630 + $0x8] sm:$0xf]
        %v2809 = vld [vmem:[%s630 + $0xc] sm:$0xf]
        %v2810 = vld [vmem:[%s630 + $0x10] sm:$0xf]
        %v2811 = vld [vmem:[%s630 + $0x14] sm:$0xf]
        %v2812 = vld [vmem:[%s630 + $0x18] sm:$0xf]
        %v2813 = vld [vmem:[%s630 + $0x1c] sm:$0xf]
        %v2814 = vld [vmem:[%s630 + $0x20] sm:$0xf]
        %v2815 = vld [vmem:[%s630 + $0x24] sm:$0xf]
        %v2816 = vld [vmem:[%s630 + $0x28] sm:$0xf]
        %v2817 = vld [vmem:[%s630 + $0x2c] sm:$0xf]
        %v2818 = vld [vmem:[%s630 + $0x30] sm:$0xf]
        %v2819 = vld [vmem:[%s630 + $0x34] sm:$0xf]
        %v2820 = vld [vmem:[%s630 + $0x38] sm:$0xf]
        %v2821 = vld [vmem:[%s630 + $0x3c] sm:$0xf]
        %v2822 = vld [vmem:[%s633] sm:$0x1]
        %v2824 = vlaneseq
        %v2825 = vshrl.u32 %v2824, 7
        %v2826 = vsub.s32 0, %v2825
        %v2827 = vrot.slane %v2822, %v2826
        %v2845 = vunpack.c.l.b16 %v2806
        %v2846 = vunpack.c.l.b16 %v2807
        %v2847 = vunpack.c.l.b16 %v2808
        %v2848 = vunpack.c.l.b16 %v2809
        %v2849 = vunpack.c.l.b16 %v2810
        %v2850 = vunpack.c.l.b16 %v2811
        %v2851 = vunpack.c.l.b16 %v2812
        %v2852 = vunpack.c.l.b16 %v2813
        %v2853 = vunpack.c.l.b16 %v2814
        %v2854 = vunpack.c.l.b16 %v2815
        %v2855 = vunpack.c.l.b16 %v2816
        %v2856 = vunpack.c.l.b16 %v2817
        %v2857 = vunpack.c.l.b16 %v2818
        %v2858 = vunpack.c.l.b16 %v2819
        %v2859 = vunpack.c.l.b16 %v2820
        %v2860 = vunpack.c.l.b16 %v2821
        %v2861 = vpack.c.b16 %v2846, %v2845
        %v2862 = vpack.c.b16 %v2848, %v2847
        %v2863 = vpack.c.b16 %v2850, %v2849
        %v2864 = vpack.c.b16 %v2852, %v2851
        %v2865 = vpack.c.b16 %v2854, %v2853
        %v2866 = vpack.c.b16 %v2856, %v2855
        %v2867 = vpack.c.b16 %v2858, %v2857
        %v2868 = vpack.c.b16 %v2860, %v2859
        %2877 = vmatprep.subr.bf16.mxu0 0
        %2878 = vmatpush1.bf16.msra.mxu0 %v2861
        %2879 = vmatprep.subr.bf16.mxu0 0
        %2880 = vmatpush1.bf16.msra.mxu0 %v2862
        %2881 = vmatprep.subr.bf16.mxu0 0
        %2882 = vmatpush1.bf16.msra.mxu0 %v2863
        %2883 = vmatprep.subr.bf16.mxu0 0
        %2884 = vmatpush1.bf16.msra.mxu0 %v2864
        %2885 = vmatprep.subr.bf16.mxu0 0
        %2886 = vmatpush1.bf16.msra.mxu0 %v2865
        %2887 = vmatprep.subr.bf16.mxu0 0
        %2888 = vmatpush1.bf16.msra.mxu0 %v2866
        %2889 = vmatprep.subr.bf16.mxu0 0
        %2890 = vmatpush1.bf16.msra.mxu0 %v2867
        %2891 = vmatprep.subr.bf16.mxu0 0
        %2892 = vmatpush1.bf16.msra.mxu0 %v2868
        %2893 = vmatprep.subr.bf16.mxu0 0
        %2894 = vmatpush1.bf16.msra.mxu0 0
        %2895 = vmatprep.subr.bf16.mxu0 0
        %2896 = vmatpush1.bf16.msra.mxu0 0
        %2897 = vmatprep.subr.bf16.mxu0 0
        %2898 = vmatpush1.bf16.msra.mxu0 0
        %2899 = vmatprep.subr.bf16.mxu0 0
        %2900 = vmatpush1.bf16.msra.mxu0 0
        %2901 = vmatprep.subr.bf16.mxu0 0
        %2902 = vmatpush1.bf16.msra.mxu0 0
        %2903 = vmatprep.subr.bf16.mxu0 0
        %2904 = vmatpush1.bf16.msra.mxu0 0
        %2905 = vmatprep.subr.bf16.mxu0 0
        %2906 = vmatpush1.bf16.msra.mxu0 0
        %2907 = vmatprep.subr.bf16.mxu0 0
        %2908 = vmatpush1.bf16.msra.mxu0 0
        %2909 = vmatprep.mubr.bf16.mxu0 0
        %2910 = vmatmul.mubr.bf16.gmra.mrb[0].mxu0 %v2805
        %v2911 = vpop.f32.mrb[0].mxu0
        %v2912 = vadd.f32 %v2827, %v2911
        %v2913 = vpop.f32.mrb[0].mxu0
        %v2914 = vpop.f32.mrb[0].mxu0
        %v2915 = vadd.f32 %v2827, %v2914
        %v2916 = vpop.f32.mrb[0].mxu0
        %2917 = vdwg.mxu0
        %2918 = vst [vmem:[%s590] sm:$0xff] %v2912
        %2919 = vst [vmem:[%s590 + $0x8] sm:$0xff] %v2915
        %s2920 = sand.u32 %s341, 1
        %s2921 = scalar_lea.sflag [#allocation4], %s2920
        %s2922 = sand.u32 %s341, 1
        %s2923 = smul.addr %s2922, 16
        %s2924 = scalar_lea.vmem [#allocation7], %s2923
        // Predicated region
        $region73: #{tpu_custom_call.1} parent=63 // pred_check
          %p2925 = pneg %p351
        $region74: #{tpu_custom_call.1} parent=63 // pred_check_branch
          %2927 = sbr.rel (%p2925) target = $region76
        $region75: #{tpu_custom_call.1} parent=63 // pred_region
          %s2928 = smul.u32 2, %s36
          %s2930 = ssub.s32 256, 256
          %2931 = vsyncadd %s2921, %s2930
          %s2932 = smul.addr %s35, 2
          %s2933 = sadd.s32 %s2928, %s2932
          %s2934 = smul.addr %s2933, 128
          %s2935 = scalar_lea.hbm %s11, %s2934
          %s2936 = sshll.u32 %s2924, 4
          %s2937 = int_to_ptr.vmem [resolvable:$true] %s2936
          %2942 = dma.vmem_to_hbm [thread:$0]  %s2937, 256, %s2935, %s2921, 128, 128, 8
        $region76: #{tpu_custom_call.1} parent=63 // pred_fallthru
          _
      $region64: #{tpu_custom_call.1} parent=5 // pred_fallthru
        _
      %p2943 = scmp.le.s32.totalorder 2, %s26
      // Predicated region
      $region77: #{tpu_custom_call.1} parent=5 // pred_check
        %p2944 = pneg %p2943
      $region78: #{tpu_custom_call.1} parent=5 // pred_check_branch
        %2946 = sbr.rel (%p2944) target = $region80
      $region79: #{tpu_custom_call.1} parent=5 // pred_region
        %s2947 = ssub.s32 %s26, 2
        // Predicated region
        $region81: #{tpu_custom_call.1} parent=79 // pred_check
          %p2948 = pneg %p357
        $region82: #{tpu_custom_call.1} parent=79 // pred_check_branch
          %2950 = sbr.rel (%p2948) target = $region84
        $region83: #{tpu_custom_call.1} parent=79 // pred_region
          %s2951 = sand.u32 %s342, 1
          %s2952 = scalar_lea.sflag [#allocation4], %s2951
          %s2953 = sand.u32 %s342, 1
          %s2954 = smul.addr %s2953, 16
          %s2955 = scalar_lea.vmem [#allocation7], %s2954
          %2956 = dma.done %s2952, 256
        $region84: #{tpu_custom_call.1} parent=79 // pred_fallthru
          _
      $region80: #{tpu_custom_call.1} parent=5 // pred_fallthru
        _
    $region6: #{tpu_custom_call.1} parent=1 // loop_footer
      %s30 = sadd.s32 1, %s26
    $region7: #{tpu_custom_call.1} parent=1 // loop_footer_branch
      %25 = sbr.rel target = $region3
    $region8: #{tpu_custom_call.1} parent=1 // loop_exit
      _
    %2957 = vsyncpa [#allocation3], 1
    %s2958 = scalar_lea.sflag [#allocation3], 1
    %2959 = vsyncpa %s2958, 1
    %2960 = vsyncpa [#allocation6], 1
    %s2961 = scalar_lea.sflag [#allocation6], 1
    %2962 = vsyncpa %s2961, 1
    %2963 = vsyncpa [#allocation4], 1
    %s2964 = scalar_lea.sflag [#allocation4], 1
    %2965 = vsyncpa %s2964, 1

</llo_original>
